<compile_context>
chip_gen: v7x
topology: tpu7x:2x2x1
jax: 0.10.0
libtpu: 0.0.40
codegen_flags: <defaults>
</compile_context>

<pallas_src>
import math

import jax
import jax.numpy as jnp
from jax.experimental import pallas as pl
from jax.experimental.pallas import tpu as pltpu


def _round_up(x, m):
    return ((x + m - 1) // m) * m


# ----------------------------------------------------------------------------
# Fused ResidualBlock kernel factory (all shape params are static Python ints)
# ----------------------------------------------------------------------------
def _make_fused_kernel(*, NB, K, stride, pad, Ho, Wo, Hq, Wh, Cin_p, Cout_p,
                       has_proj):
    s = stride
    M = NB * Ho * Wo  # batch+spatial flattened -> matmul M dimension

    def kernel(x_ref, w1_ref, b1_ref, w2_ref, b2_ref, *rest):
        if has_proj:
            ws_ref, bs_ref, o_ref, h_ref, acc_ref = rest
        else:
            o_ref, h_ref, acc_ref = rest

        # ---- conv1 (KxK, stride s) with BN1 scale folded into weights ------
        # x_ref holds the padded input pre-decimated into s*s stride-parity
        # planes stacked along the row axis (plane p*s+q occupies rows
        # [(p*s+q)*Hq, (p*s+q+1)*Hq)), so every tap is a contiguous slice.
        taps = [(kh, kw) for kh in range(K) for kw in range(K)]
        for t, (kh, kw) in enumerate(taps):
            pi = (kh % s) * s + (kw % s)
            r0 = pi * Hq + kh // s
            c0 = kw // s
            patch = x_ref[:, r0:r0 + Ho, c0:c0 + Wo, :]        # (NB,Ho,Wo,Cin_p)
            contrib = jnp.dot(patch.reshape(M, Cin_p), w1_ref[kh * K + kw],
                              preferred_element_type=jnp.float32)
            if t == 0:
                acc_ref[...] = contrib          # first tap seeds the accumulator
            else:
                acc_ref[...] += contrib
        h = jnp.maximum(acc_ref[...] + b1_ref[...], 0.0).astype(jnp.bfloat16)

        # ---- keep h (padded for the second 3x3) resident in VMEM ------------
        # Zero only the 1-wide halo strips; the interior is fully overwritten
        # every grid step.
        h_ref[:, 0:1, :, :] = jnp.zeros((NB, 1, Wh, Cout_p), jnp.bfloat16)
        h_ref[:, Ho + 1:Ho + 2, :, :] = jnp.zeros((NB, 1, Wh, Cout_p), jnp.bfloat16)
        h_ref[:, :, 0:1, :] = jnp.zeros((NB, Ho + 2, 1, Cout_p), jnp.bfloat16)
        h_ref[:, :, Wo + 1:Wo + 2, :] = jnp.zeros((NB, Ho + 2, 1, Cout_p), jnp.bfloat16)
        h_ref[:, 1:1 + Ho, 1:1 + Wo, :] = h.reshape(NB, Ho, Wo, Cout_p)

        # ---- shortcut re-seeds the (reused) f32 accumulator ------------------
        pi_s = (pad % s) * s + (pad % s)
        r0s = pi_s * Hq + pad // s
        c0s = pad // s
        sc = x_ref[:, r0s:r0s + Ho, c0s:c0s + Wo, :].reshape(M, Cin_p)
        if has_proj:
            acc_ref[...] = (jnp.dot(sc, ws_ref[...],
                                    preferred_element_type=jnp.float32)
                            + bs_ref[...])
        else:
            # Identity shortcut: adds the bf16-cast input (tiny precision loss
            # vs. the f32 reference; well inside tolerance).
            acc_ref[...] = sc.astype(jnp.float32)

        # ---- conv2 (3x3, stride 1) + BN2 bias + residual add + ReLU ----------
        for kh in range(3):
            for kw in range(3):
                patch = h_ref[:, kh:kh + Ho, kw:kw + Wo, :]    # (NB,Ho,Wo,Cout_p)
                acc_ref[...] += jnp.dot(patch.reshape(M, Cout_p),
                                        w2_ref[kh * 3 + kw],
                                        preferred_element_type=jnp.float32)
        # Dense (M, Cout_p) bf16 store: lane- and sublane-aligned, unmasked.
        o_ref[...] = jnp.maximum(acc_ref[...] + b2_ref[...], 0.0).astype(o_ref.dtype)

    return kernel


# ----------------------------------------------------------------------------
# BN folding / parameter prep
# ----------------------------------------------------------------------------
def _fold_bn(gamma, beta, mean, var, eps=1e-5):
    scale = gamma / jnp.sqrt(var + eps)
    bias = beta - mean * scale
    return scale, bias


def _prep_w(w_kkio, scale, cin_p, cout_p):
    """Fold BN scale into weights, pad channels, reshape to (K*K, Cin_p, Cout_p) bf16."""
    w = w_kkio * scale[None, None, None, :]
    kk = w.shape[0] * w.shape[1]
    w = jnp.pad(w, ((0, 0), (0, 0),
                    (0, cin_p - w.shape[2]), (0, cout_p - w.shape[3])))
    return w.reshape(kk, cin_p, cout_p).astype(jnp.bfloat16)


def _prep_b(b, cout_p):
    return jnp.pad(b, (0, cout_p - b.shape[0])).reshape(1, cout_p).astype(jnp.float32)


# ----------------------------------------------------------------------------
# Public forward (NCHW in / NCHW out)
# ----------------------------------------------------------------------------
def residual_block_forward(x_nchw, params, *, stride):
    N, Cin, H, W = x_nchw.shape
    Cout = params["w1"].shape[-1]
    K, pad, s = 3, 1, stride
    assert H % s == 0 and W % s == 0
    Ho, Wo = H // s, W // s

    Cin_p = _round_up(Cin, 128)    # lane-dense contraction dim
    Cout_p = _round_up(Cout, 128)  # lane-dense output dim
    has_proj = "ws" in params
    assert has_proj or Cin_p == Cout_p

    # Fold BN into weights (scale) + bias rows.
    s1, b1 = _fold_bn(*params["bn1"])
    s2, b2 = _fold_bn(*params["bn2"])
    w1_p = _prep_w(params["w1"], s1, Cin_p, Cout_p)
    b1_p = _prep_b(b1, Cout_p)
    w2_p = _prep_w(params["w2"], s2, Cout_p, Cout_p)
    b2_p = _prep_b(b2, Cout_p)

    # NCHW -> NHWC once, pad spatially (conv1 halo) + channels to 128, bf16.
    # TODO(synk): in a full model keep activations NHWC (and stride-parity
    # decimated) between blocks instead of per-block transpose + pad here.
    x = jnp.transpose(x_nchw, (0, 2, 3, 1)).astype(jnp.bfloat16)
    Hp = _round_up(H + 2 * pad, s)
    Wp = _round_up(W + 2 * pad, s)
    xp = jnp.pad(x, ((0, 0), (pad, Hp - H - pad), (pad, Wp - W - pad),
                     (0, Cin_p - Cin)))

    # Pre-decimate into s*s stride-parity planes (wrapper side, once), stacked
    # along the row axis so every tap read in the kernel is contiguous.
    Hq, Wq = Hp // s, Wp // s
    P = s * s
    if s == 1:
        planes = xp                                             # (N, Hq, Wq, Cin_p)
    else:
        planes = xp.reshape(N, Hq, s, Wq, s, Cin_p)
        planes = planes.transpose(0, 2, 4, 1, 3, 5).reshape(N, P * Hq, Wq, Cin_p)
    # Sublane-friendly plane width.
    Wq_p = _round_up(Wq, 8)
    if Wq_p != Wq:
        planes = jnp.pad(planes, ((0, 0), (0, 0), (0, Wq_p - Wq), (0, 0)))

    # Batch tile: flatten NB images into the matmul M dim (target ~1024 rows),
    # but keep at least 2 grid steps so both v7x TensorCores get work.
    NB = max(1, min(N, 1024 // max(1, Ho * Wo)))
    if N >= 2:
        NB = max(1, min(NB, N // 2))
    while N % NB:
        NB -= 1
    M = NB * Ho * Wo
    assert M % 8 == 0  # sublane-dense 2-D output slab

    Wh = _round_up(Wo + 2, 8)     # padded-h scratch width (sublane multiple)

    args = [planes, w1_p, b1_p, w2_p, b2_p]
    in_specs = [
        pl.BlockSpec((NB, P * Hq, Wq_p, Cin_p), lambda n: (n, 0, 0, 0)),
        pl.BlockSpec((K * K, Cin_p, Cout_p), lambda n: (0, 0, 0)),
        pl.BlockSpec((1, Cout_p), lambda n: (0, 0)),
        pl.BlockSpec((3 * 3, Cout_p, Cout_p), lambda n: (0, 0, 0)),
        pl.BlockSpec((1, Cout_p), lambda n: (0, 0)),
    ]
    if has_proj:
        ss, bs = _fold_bn(*params["bns"])
        ws_p = _prep_w(params["ws"], ss, Cin_p, Cout_p).reshape(Cin_p, Cout_p)
        bs_p = _prep_b(bs, Cout_p)
        args += [ws_p, bs_p]
        in_specs += [
            pl.BlockSpec((Cin_p, Cout_p), lambda n: (0, 0)),
            pl.BlockSpec((1, Cout_p), lambda n: (0, 0)),
        ]

    kernel = _make_fused_kernel(NB=NB, K=K, stride=s, pad=pad, Ho=Ho, Wo=Wo,
                                Hq=Hq, Wh=Wh, Cin_p=Cin_p, Cout_p=Cout_p,
                                has_proj=has_proj)

    # Per-config VMEM budget: double-buffered blocks + scratch, with headroom,
    # clamped to what is safe on every generation (<= 64 MiB physical on v7x).
    def nbytes(shape, dt):
        return math.prod(shape) * jnp.dtype(dt).itemsize
    est = 2 * (nbytes((NB, P * Hq, Wq_p, Cin_p), jnp.bfloat16)
               + nbytes((K * K, Cin_p, Cout_p), jnp.bfloat16)
               + nbytes((3 * 3, Cout_p, Cout_p), jnp.bfloat16)
               + (nbytes((Cin_p, Cout_p), jnp.bfloat16) if has_proj else 0)
               + 4 * nbytes((1, Cout_p), jnp.float32)
               + nbytes((M, Cout_p), jnp.bfloat16))
    est += nbytes((NB, Ho + 2, Wh, Cout_p), jnp.bfloat16)   # h scratch
    est += nbytes((M, Cout_p), jnp.float32)                 # acc scratch
    vmem_limit = int(min(max(32 * 2**20, 2 * est), 64 * 2**20))

    out2d = pl.pallas_call(
        kernel,
        out_shape=jax.ShapeDtypeStruct((N * Ho * Wo, Cout_p), jnp.bfloat16),
        grid=(N // NB,),
        in_specs=in_specs,
        out_specs=pl.BlockSpec((M, Cout_p), lambda n: (n, 0)),
        scratch_shapes=[
            pltpu.VMEM((NB, Ho + 2, Wh, Cout_p), jnp.bfloat16),  # padded h
            pltpu.VMEM((M, Cout_p), jnp.float32),                # f32 accumulator
        ],
        compiler_params=pltpu.CompilerParams(
            dimension_semantics=("parallel",),
            vmem_limit_bytes=vmem_limit),
    )(*args)

    # Drop channel padding, back to NCHW (f32 at the public boundary).
    out = out2d.reshape(N, Ho, Wo, Cout_p)[..., :Cout]
    return jnp.transpose(out, (0, 3, 1, 2)).astype(jnp.float32)


# ----------------------------------------------------------------------------
# Parameter init (eval-mode BN stats) and pure-JAX reference
# ----------------------------------------------------------------------------
def init_residual_block_params(key, inchannel, outchannel, stride):
    ks = jax.random.split(key, 12)

    def bn_params(k0, k1, k2, k3, c):
        gamma = jax.random.uniform(k0, (c,), jnp.float32, 0.5, 1.5)
        beta = 0.1 * jax.random.normal(k1, (c,), jnp.float32)
        mean = 0.1 * jax.random.normal(k2, (c,), jnp.float32)
        var = jax.random.uniform(k3, (c,), jnp.float32, 0.5, 1.5)
        return gamma, beta, mean, var

    p = {
        "w1": 0.1 * jax.random.normal(ks[0], (3, 3, inchannel, outchannel), jnp.float32),
        "bn1": bn_params(ks[1], ks[2], ks[3], ks[4], outchannel),
        "w2": 0.1 * jax.random.normal(ks[5], (3, 3, outchannel, outchannel), jnp.float32),
        "bn2": bn_params(ks[6], ks[7], ks[8], ks[9], outchannel),
    }
    if stride != 1 or inchannel != outchannel:
        p["ws"] = 0.1 * jax.random.normal(ks[10], (1, 1, inchannel, outchannel), jnp.float32)
        p["bns"] = bn_params(*jax.random.split(ks[11], 4), outchannel)
    return p


def _ref_forward(x_nchw, params, *, stride):
    def conv(x, w_kkio, stride, pad):
        w_oihw = jnp.transpose(w_kkio, (3, 2, 0, 1))
        return jax.lax.conv_general_dilated(
            x, w_oihw, (stride, stride), [(pad, pad), (pad, pad)],
            dimension_numbers=("NCHW", "OIHW", "NCHW"))

    def bn(x, bnp):
        s, b = _fold_bn(*bnp)
        return x * s[None, :, None, None] + b[None, :, None, None]

    h = jax.nn.relu(bn(conv(x_nchw, params["w1"], stride, 1), params["bn1"]))
    left = bn(conv(h, params["w2"], 1, 1), params["bn2"])
    if "ws" in params:
        sc = bn(conv(x_nchw, params["ws"], stride, 0), params["bns"])
    else:
        sc = x_nchw
    return jax.nn.relu(left + sc)


# ----------------------------------------------------------------------------
# Self-test
# ----------------------------------------------------------------------------
def _check(key, N, Cin, H, W, Cout, stride):
    k_x, k_p = jax.random.split(key)
    x = jax.random.normal(k_x, (N, Cin, H, W), jnp.float32)
    params = init_residual_block_params(k_p, Cin, Cout, stride)

    out = jax.block_until_ready(residual_block_forward(x, params, stride=stride))
    ref = jax.block_until_ready(_ref_forward(x, params, stride=stride))

    assert out.shape == (N, Cout, H // stride, W // stride), out.shape
    err = float(jnp.max(jnp.abs(out - ref)))
    mag = float(jnp.max(jnp.abs(ref)))
    # bf16 MXU operands + bf16 kernel output -> loose tolerance vs f32 reference.
    assert err <= 0.05 * mag + 1e-2, (err, mag)


if __name__ == "__main__":
    key = jax.random.PRNGKey(0)
    k1, k2, k3 = jax.random.split(key, 3)

    # Downsampling block with 1x1 projection shortcut (stride=2, Cin!=Cout).
    _check(k1, N=2, Cin=4, H=16, W=16, Cout=8, stride=2)
    # Identity-shortcut block (stride=1, Cin==Cout).
    _check(k2, N=2, Cin=8, H=16, W=16, Cout=8, stride=1)
    # Realistic channel widths (full 128-lane contraction, still tiny spatially).
    _check(k3, N=2, Cin=64, H=8, W=8, Cout=128, stride=2)

    print("KERNEL_OK")
</pallas_src>

<mosaic_0001>
module attributes {stable_mosaic.version = 11 : i64} {
  func.func @kernel(%arg0: i32, %arg1: memref<1x36x16x128xbf16, #tpu.memory_space<vmem>>, %arg2: memref<9x128x128xbf16, #tpu.memory_space<vmem>>, %arg3: memref<1x128xf32, #tpu.memory_space<vmem>>, %arg4: memref<9x128x128xbf16, #tpu.memory_space<vmem>>, %arg5: memref<1x128xf32, #tpu.memory_space<vmem>>, %arg6: memref<128x128xbf16, #tpu.memory_space<vmem>>, %arg7: memref<1x128xf32, #tpu.memory_space<vmem>>, %arg8: memref<64x128xbf16, #tpu.memory_space<vmem>>, %arg9: memref<1x10x16x128xbf16, #tpu.memory_space<vmem>>, %arg10: memref<64x128xf32, #tpu.memory_space<vmem>>) attributes {dimension_semantics = [#tpu.dimension_semantics<parallel>], iteration_bounds = array<i64: 2>, scalar_prefetch = 0 : i64, scratch_operands = 2 : i64, tpu.core_type = #tpu.core_type<tc>, window_params = [{transform_indices = @transform_0, window_bounds = array<i64: 1, 36, 16, 128>}, {pipeline_mode = #tpu.pipeline_mode<synchronous>, transform_indices = @transform_1, window_bounds = array<i64: 9, 128, 128>}, {pipeline_mode = #tpu.pipeline_mode<synchronous>, transform_indices = @transform_2, window_bounds = array<i64: 1, 128>}, {pipeline_mode = #tpu.pipeline_mode<synchronous>, transform_indices = @transform_3, window_bounds = array<i64: 9, 128, 128>}, {pipeline_mode = #tpu.pipeline_mode<synchronous>, transform_indices = @transform_4, window_bounds = array<i64: 1, 128>}, {pipeline_mode = #tpu.pipeline_mode<synchronous>, transform_indices = @transform_5, window_bounds = array<i64: 128, 128>}, {pipeline_mode = #tpu.pipeline_mode<synchronous>, transform_indices = @transform_6, window_bounds = array<i64: 1, 128>}, {transform_indices = @transform_7, window_bounds = array<i64: 64, 128>}]} {
    %c0 = arith.constant 0 : index
    %c0_0 = arith.constant 0 : index
    %c0_1 = arith.constant 0 : index
    %c0_2 = arith.constant 0 : index
    %0 = vector.load %arg1[%c0, %c0_0, %c0_1, %c0_2] : memref<1x36x16x128xbf16, #tpu.memory_space<vmem>>, vector<1x8x8x128xbf16>
    %1 = vector.shape_cast %0 : vector<1x8x8x128xbf16> to vector<64x128xbf16>
    %c0_3 = arith.constant 0 : index
    %c0_4 = arith.constant 0 : index
    %c0_5 = arith.constant 0 : index
    %2 = vector.load %arg2[%c0_3, %c0_4, %c0_5] : memref<9x128x128xbf16, #tpu.memory_space<vmem>>, vector<1x128x128xbf16>
    %3 = vector.shape_cast %2 : vector<1x128x128xbf16> to vector<128x128xbf16>
    %cst = arith.constant dense<0.000000e+00> : vector<64x128xf32>
    %4 = tpu.matmul %1, %3, %cst {dimension_numbers = #tpu.dot_dimension_numbers<[1], [0], [0], [1], [0, 0, 1, 1], [], []>} : vector<64x128xbf16>, vector<128x128xbf16>, vector<64x128xf32> -> vector<64x128xf32>
    %c0_6 = arith.constant 0 : index
    %c0_7 = arith.constant 0 : index
    %5 = vector.load %arg10[%c0_6, %c0_7] : memref<64x128xf32, #tpu.memory_space<vmem>>, vector<64x128xf32>
    tpu.vector_store %arg10[%c0_6, %c0_7], %4 {strides = array<i32>} : memref<64x128xf32, #tpu.memory_space<vmem>>, vector<64x128xf32>,
    %c0_8 = arith.constant 0 : index
    %c9 = arith.constant 9 : index
    %c0_9 = arith.constant 0 : index
    %c0_10 = arith.constant 0 : index
    %6 = vector.load %arg1[%c0_8, %c9, %c0_9, %c0_10] : memref<1x36x16x128xbf16, #tpu.memory_space<vmem>>, vector<1x8x8x128xbf16>
    %7 = vector.shape_cast %6 : vector<1x8x8x128xbf16> to vector<64x128xbf16>
    %c1 = arith.constant 1 : index
    %c0_11 = arith.constant 0 : index
    %c0_12 = arith.constant 0 : index
    %8 = vector.load %arg2[%c1, %c0_11, %c0_12] : memref<9x128x128xbf16, #tpu.memory_space<vmem>>, vector<1x128x128xbf16>
    %9 = vector.shape_cast %8 : vector<1x128x128xbf16> to vector<128x128xbf16>
    %cst_13 = arith.constant dense<0.000000e+00> : vector<64x128xf32>
    %10 = tpu.matmul %7, %9, %cst_13 {dimension_numbers = #tpu.dot_dimension_numbers<[1], [0], [0], [1], [0, 0, 1, 1], [], []>} : vector<64x128xbf16>, vector<128x128xbf16>, vector<64x128xf32> -> vector<64x128xf32>
    %c0_14 = arith.constant 0 : index
    %c0_15 = arith.constant 0 : index
    %11 = vector.load %arg10[%c0_14, %c0_15] : memref<64x128xf32, #tpu.memory_space<vmem>>, vector<64x128xf32>
    %12 = arith.addf %11, %10 : vector<64x128xf32>
    %c0_16 = arith.constant 0 : index
    %c0_17 = arith.constant 0 : index
    %13 = vector.load %arg10[%c0_16, %c0_17] : memref<64x128xf32, #tpu.memory_space<vmem>>, vector<64x128xf32>
    tpu.vector_store %arg10[%c0_16, %c0_17], %12 {strides = array<i32>} : memref<64x128xf32, #tpu.memory_space<vmem>>, vector<64x128xf32>,
    %c0_18 = arith.constant 0 : index
    %c0_19 = arith.constant 0 : index
    %c1_20 = arith.constant 1 : index
    %c0_21 = arith.constant 0 : index
    %14 = vector.load %arg1[%c0_18, %c0_19, %c1_20, %c0_21] : memref<1x36x16x128xbf16, #tpu.memory_space<vmem>>, vector<1x8x8x128xbf16>
    %15 = vector.shape_cast %14 : vector<1x8x8x128xbf16> to vector<64x128xbf16>
    %c2 = arith.constant 2 : index
    %c0_22 = arith.constant 0 : index
    %c0_23 = arith.constant 0 : index
    %16 = vector.load %arg2[%c2, %c0_22, %c0_23] : memref<9x128x128xbf16, #tpu.memory_space<vmem>>, vector<1x128x128xbf16>
    %17 = vector.shape_cast %16 : vector<1x128x128xbf16> to vector<128x128xbf16>
    %cst_24 = arith.constant dense<0.000000e+00> : vector<64x128xf32>
    %18 = tpu.matmul %15, %17, %cst_24 {dimension_numbers = #tpu.dot_dimension_numbers<[1], [0], [0], [1], [0, 0, 1, 1], [], []>} : vector<64x128xbf16>, vector<128x128xbf16>, vector<64x128xf32> -> vector<64x128xf32>
    %c0_25 = arith.constant 0 : index
    %c0_26 = arith.constant 0 : index
    %19 = vector.load %arg10[%c0_25, %c0_26] : memref<64x128xf32, #tpu.memory_space<vmem>>, vector<64x128xf32>
    %20 = arith.addf %19, %18 : vector<64x128xf32>
    %c0_27 = arith.constant 0 : index
    %c0_28 = arith.constant 0 : index
    %21 = vector.load %arg10[%c0_27, %c0_28] : memref<64x128xf32, #tpu.memory_space<vmem>>, vector<64x128xf32>
    tpu.vector_store %arg10[%c0_27, %c0_28], %20 {strides = array<i32>} : memref<64x128xf32, #tpu.memory_space<vmem>>, vector<64x128xf32>,
    %c0_29 = arith.constant 0 : index
    %c18 = arith.constant 18 : index
    %c0_30 = arith.constant 0 : index
    %c0_31 = arith.constant 0 : index
    %22 = vector.load %arg1[%c0_29, %c18, %c0_30, %c0_31] : memref<1x36x16x128xbf16, #tpu.memory_space<vmem>>, vector<1x8x8x128xbf16>
    %23 = vector.shape_cast %22 : vector<1x8x8x128xbf16> to vector<64x128xbf16>
    %c3 = arith.constant 3 : index
    %c0_32 = arith.constant 0 : index
    %c0_33 = arith.constant 0 : index
    %24 = vector.load %arg2[%c3, %c0_32, %c0_33] : memref<9x128x128xbf16, #tpu.memory_space<vmem>>, vector<1x128x128xbf16>
    %25 = vector.shape_cast %24 : vector<1x128x128xbf16> to vector<128x128xbf16>
    %cst_34 = arith.constant dense<0.000000e+00> : vector<64x128xf32>
    %26 = tpu.matmul %23, %25, %cst_34 {dimension_numbers = #tpu.dot_dimension_numbers<[1], [0], [0], [1], [0, 0, 1, 1], [], []>} : vector<64x128xbf16>, vector<128x128xbf16>, vector<64x128xf32> -> vector<64x128xf32>
    %c0_35 = arith.constant 0 : index
    %c0_36 = arith.constant 0 : index
    %27 = vector.load %arg10[%c0_35, %c0_36] : memref<64x128xf32, #tpu.memory_space<vmem>>, vector<64x128xf32>
    %28 = arith.addf %27, %26 : vector<64x128xf32>
    %c0_37 = arith.constant 0 : index
    %c0_38 = arith.constant 0 : index
    %29 = vector.load %arg10[%c0_37, %c0_38] : memref<64x128xf32, #tpu.memory_space<vmem>>, vector<64x128xf32>
    tpu.vector_store %arg10[%c0_37, %c0_38], %28 {strides = array<i32>} : memref<64x128xf32, #tpu.memory_space<vmem>>, vector<64x128xf32>,
    %c0_39 = arith.constant 0 : index
    %c27 = arith.constant 27 : index
    %c0_40 = arith.constant 0 : index
    %c0_41 = arith.constant 0 : index
    %30 = vector.load %arg1[%c0_39, %c27, %c0_40, %c0_41] : memref<1x36x16x128xbf16, #tpu.memory_space<vmem>>, vector<1x8x8x128xbf16>
    %31 = vector.shape_cast %30 : vector<1x8x8x128xbf16> to vector<64x128xbf16>
    %c4 = arith.constant 4 : index
    %c0_42 = arith.constant 0 : index
    %c0_43 = arith.constant 0 : index
    %32 = vector.load %arg2[%c4, %c0_42, %c0_43] : memref<9x128x128xbf16, #tpu.memory_space<vmem>>, vector<1x128x128xbf16>
    %33 = vector.shape_cast %32 : vector<1x128x128xbf16> to vector<128x128xbf16>
    %cst_44 = arith.constant dense<0.000000e+00> : vector<64x128xf32>
    %34 = tpu.matmul %31, %33, %cst_44 {dimension_numbers = #tpu.dot_dimension_numbers<[1], [0], [0], [1], [0, 0, 1, 1], [], []>} : vector<64x128xbf16>, vector<128x128xbf16>, vector<64x128xf32> -> vector<64x128xf32>
    %c0_45 = arith.constant 0 : index
    %c0_46 = arith.constant 0 : index
    %35 = vector.load %arg10[%c0_45, %c0_46] : memref<64x128xf32, #tpu.memory_space<vmem>>, vector<64x128xf32>
    %36 = arith.addf %35, %34 : vector<64x128xf32>
    %c0_47 = arith.constant 0 : index
    %c0_48 = arith.constant 0 : index
    %37 = vector.load %arg10[%c0_47, %c0_48] : memref<64x128xf32, #tpu.memory_space<vmem>>, vector<64x128xf32>
    tpu.vector_store %arg10[%c0_47, %c0_48], %36 {strides = array<i32>} : memref<64x128xf32, #tpu.memory_space<vmem>>, vector<64x128xf32>,
    %c0_49 = arith.constant 0 : index
    %c18_50 = arith.constant 18 : index
    %c1_51 = arith.constant 1 : index
    %c0_52 = arith.constant 0 : index
    %38 = vector.load %arg1[%c0_49, %c18_50, %c1_51, %c0_52] : memref<1x36x16x128xbf16, #tpu.memory_space<vmem>>, vector<1x8x8x128xbf16>
    %39 = vector.shape_cast %38 : vector<1x8x8x128xbf16> to vector<64x128xbf16>
    %c5 = arith.constant 5 : index
    %c0_53 = arith.constant 0 : index
    %c0_54 = arith.constant 0 : index
    %40 = vector.load %arg2[%c5, %c0_53, %c0_54] : memref<9x128x128xbf16, #tpu.memory_space<vmem>>, vector<1x128x128xbf16>
    %41 = vector.shape_cast %40 : vector<1x128x128xbf16> to vector<128x128xbf16>
    %cst_55 = arith.constant dense<0.000000e+00> : vector<64x128xf32>
    %42 = tpu.matmul %39, %41, %cst_55 {dimension_numbers = #tpu.dot_dimension_numbers<[1], [0], [0], [1], [0, 0, 1, 1], [], []>} : vector<64x128xbf16>, vector<128x128xbf16>, vector<64x128xf32> -> vector<64x128xf32>
    %c0_56 = arith.constant 0 : index
    %c0_57 = arith.constant 0 : index
    %43 = vector.load %arg10[%c0_56, %c0_57] : memref<64x128xf32, #tpu.memory_space<vmem>>, vector<64x128xf32>
    %44 = arith.addf %43, %42 : vector<64x128xf32>
    %c0_58 = arith.constant 0 : index
    %c0_59 = arith.constant 0 : index
    %45 = vector.load %arg10[%c0_58, %c0_59] : memref<64x128xf32, #tpu.memory_space<vmem>>, vector<64x128xf32>
    tpu.vector_store %arg10[%c0_58, %c0_59], %44 {strides = array<i32>} : memref<64x128xf32, #tpu.memory_space<vmem>>, vector<64x128xf32>,
    %c0_60 = arith.constant 0 : index
    %c1_61 = arith.constant 1 : index
    %c0_62 = arith.constant 0 : index
    %c0_63 = arith.constant 0 : index
    %46 = vector.load %arg1[%c0_60, %c1_61, %c0_62, %c0_63] : memref<1x36x16x128xbf16, #tpu.memory_space<vmem>>, vector<1x8x8x128xbf16>
    %47 = vector.shape_cast %46 : vector<1x8x8x128xbf16> to vector<64x128xbf16>
    %c6 = arith.constant 6 : index
    %c0_64 = arith.constant 0 : index
    %c0_65 = arith.constant 0 : index
    %48 = vector.load %arg2[%c6, %c0_64, %c0_65] : memref<9x128x128xbf16, #tpu.memory_space<vmem>>, vector<1x128x128xbf16>
    %49 = vector.shape_cast %48 : vector<1x128x128xbf16> to vector<128x128xbf16>
    %cst_66 = arith.constant dense<0.000000e+00> : vector<64x128xf32>
    %50 = tpu.matmul %47, %49, %cst_66 {dimension_numbers = #tpu.dot_dimension_numbers<[1], [0], [0], [1], [0, 0, 1, 1], [], []>} : vector<64x128xbf16>, vector<128x128xbf16>, vector<64x128xf32> -> vector<64x128xf32>
    %c0_67 = arith.constant 0 : index
    %c0_68 = arith.constant 0 : index
    %51 = vector.load %arg10[%c0_67, %c0_68] : memref<64x128xf32, #tpu.memory_space<vmem>>, vector<64x128xf32>
    %52 = arith.addf %51, %50 : vector<64x128xf32>
    %c0_69 = arith.constant 0 : index
    %c0_70 = arith.constant 0 : index
    %53 = vector.load %arg10[%c0_69, %c0_70] : memref<64x128xf32, #tpu.memory_space<vmem>>, vector<64x128xf32>
    tpu.vector_store %arg10[%c0_69, %c0_70], %52 {strides = array<i32>} : memref<64x128xf32, #tpu.memory_space<vmem>>, vector<64x128xf32>,
    %c0_71 = arith.constant 0 : index
    %c10 = arith.constant 10 : index
    %c0_72 = arith.constant 0 : index
    %c0_73 = arith.constant 0 : index
    %54 = vector.load %arg1[%c0_71, %c10, %c0_72, %c0_73] : memref<1x36x16x128xbf16, #tpu.memory_space<vmem>>, vector<1x8x8x128xbf16>
    %55 = vector.shape_cast %54 : vector<1x8x8x128xbf16> to vector<64x128xbf16>
    %c7 = arith.constant 7 : index
    %c0_74 = arith.constant 0 : index
    %c0_75 = arith.constant 0 : index
    %56 = vector.load %arg2[%c7, %c0_74, %c0_75] : memref<9x128x128xbf16, #tpu.memory_space<vmem>>, vector<1x128x128xbf16>
    %57 = vector.shape_cast %56 : vector<1x128x128xbf16> to vector<128x128xbf16>
    %cst_76 = arith.constant dense<0.000000e+00> : vector<64x128xf32>
    %58 = tpu.matmul %55, %57, %cst_76 {dimension_numbers = #tpu.dot_dimension_numbers<[1], [0], [0], [1], [0, 0, 1, 1], [], []>} : vector<64x128xbf16>, vector<128x128xbf16>, vector<64x128xf32> -> vector<64x128xf32>
    %c0_77 = arith.constant 0 : index
    %c0_78 = arith.constant 0 : index
    %59 = vector.load %arg10[%c0_77, %c0_78] : memref<64x128xf32, #tpu.memory_space<vmem>>, vector<64x128xf32>
    %60 = arith.addf %59, %58 : vector<64x128xf32>
    %c0_79 = arith.constant 0 : index
    %c0_80 = arith.constant 0 : index
    %61 = vector.load %arg10[%c0_79, %c0_80] : memref<64x128xf32, #tpu.memory_space<vmem>>, vector<64x128xf32>
    tpu.vector_store %arg10[%c0_79, %c0_80], %60 {strides = array<i32>} : memref<64x128xf32, #tpu.memory_space<vmem>>, vector<64x128xf32>,
    %c0_81 = arith.constant 0 : index
    %c1_82 = arith.constant 1 : index
    %c1_83 = arith.constant 1 : index
    %c0_84 = arith.constant 0 : index
    %62 = vector.load %arg1[%c0_81, %c1_82, %c1_83, %c0_84] : memref<1x36x16x128xbf16, #tpu.memory_space<vmem>>, vector<1x8x8x128xbf16>
    %63 = vector.shape_cast %62 : vector<1x8x8x128xbf16> to vector<64x128xbf16>
    %c8 = arith.constant 8 : index
    %c0_85 = arith.constant 0 : index
    %c0_86 = arith.constant 0 : index
    %64 = vector.load %arg2[%c8, %c0_85, %c0_86] : memref<9x128x128xbf16, #tpu.memory_space<vmem>>, vector<1x128x128xbf16>
    %65 = vector.shape_cast %64 : vector<1x128x128xbf16> to vector<128x128xbf16>
    %cst_87 = arith.constant dense<0.000000e+00> : vector<64x128xf32>
    %66 = tpu.matmul %63, %65, %cst_87 {dimension_numbers = #tpu.dot_dimension_numbers<[1], [0], [0], [1], [0, 0, 1, 1], [], []>} : vector<64x128xbf16>, vector<128x128xbf16>, vector<64x128xf32> -> vector<64x128xf32>
    %c0_88 = arith.constant 0 : index
    %c0_89 = arith.constant 0 : index
    %67 = vector.load %arg10[%c0_88, %c0_89] : memref<64x128xf32, #tpu.memory_space<vmem>>, vector<64x128xf32>
    %68 = arith.addf %67, %66 : vector<64x128xf32>
    %c0_90 = arith.constant 0 : index
    %c0_91 = arith.constant 0 : index
    %69 = vector.load %arg10[%c0_90, %c0_91] : memref<64x128xf32, #tpu.memory_space<vmem>>, vector<64x128xf32>
    tpu.vector_store %arg10[%c0_90, %c0_91], %68 {strides = array<i32>} : memref<64x128xf32, #tpu.memory_space<vmem>>, vector<64x128xf32>,
    %c0_92 = arith.constant 0 : index
    %c0_93 = arith.constant 0 : index
    %70 = vector.load %arg10[%c0_92, %c0_93] : memref<64x128xf32, #tpu.memory_space<vmem>>, vector<64x128xf32>
    %c0_94 = arith.constant 0 : index
    %c0_95 = arith.constant 0 : index
    %71 = vector.load %arg3[%c0_94, %c0_95] : memref<1x128xf32, #tpu.memory_space<vmem>>, vector<1x128xf32>
    %72 = vector.broadcast %71 : vector<1x128xf32> to vector<64x128xf32>
    %73 = arith.addf %70, %72 : vector<64x128xf32>
    %cst_96 = arith.constant 0.000000e+00 : f32
    %74 = vector.broadcast %cst_96 : f32 to vector<64x128xf32>
    %75 = arith.maximumf %73, %74 : vector<64x128xf32>
    %76 = arith.truncf %75 : vector<64x128xf32> to vector<64x128xbf16>
    %cst_97 = arith.constant 0.000000e+00 : bf16
    %77 = vector.broadcast %cst_97 : bf16 to vector<1x1x16x128xbf16>
    %c0_98 = arith.constant 0 : index
    %c0_99 = arith.constant 0 : index
    %c0_100 = arith.constant 0 : index
    %c0_101 = arith.constant 0 : index
    %78 = vector.load %arg9[%c0_98, %c0_99, %c0_100, %c0_101] : memref<1x10x16x128xbf16, #tpu.memory_space<vmem>>, vector<1x1x16x128xbf16>
    tpu.vector_store %arg9[%c0_98, %c0_99, %c0_100, %c0_101], %77 {strides = array<i32>} : memref<1x10x16x128xbf16, #tpu.memory_space<vmem>>, vector<1x1x16x128xbf16>,
    %cst_102 = arith.constant 0.000000e+00 : bf16
    %79 = vector.broadcast %cst_102 : bf16 to vector<1x1x16x128xbf16>
    %c0_103 = arith.constant 0 : index
    %c9_104 = arith.constant 9 : index
    %c0_105 = arith.constant 0 : index
    %c0_106 = arith.constant 0 : index
    %80 = vector.load %arg9[%c0_103, %c9_104, %c0_105, %c0_106] : memref<1x10x16x128xbf16, #tpu.memory_space<vmem>>, vector<1x1x16x128xbf16>
    tpu.vector_store %arg9[%c0_103, %c9_104, %c0_105, %c0_106], %79 {strides = array<i32>} : memref<1x10x16x128xbf16, #tpu.memory_space<vmem>>, vector<1x1x16x128xbf16>,
    %cst_107 = arith.constant 0.000000e+00 : bf16
    %81 = vector.broadcast %cst_107 : bf16 to vector<1x10x1x128xbf16>
    %c0_108 = arith.constant 0 : index
    %c0_109 = arith.constant 0 : index
    %c0_110 = arith.constant 0 : index
    %c0_111 = arith.constant 0 : index
    %82 = vector.load %arg9[%c0_108, %c0_109, %c0_110, %c0_111] : memref<1x10x16x128xbf16, #tpu.memory_space<vmem>>, vector<1x10x1x128xbf16>
    tpu.vector_store %arg9[%c0_108, %c0_109, %c0_110, %c0_111], %81 {strides = array<i32>} : memref<1x10x16x128xbf16, #tpu.memory_space<vmem>>, vector<1x10x1x128xbf16>,
    %cst_112 = arith.constant 0.000000e+00 : bf16
    %83 = vector.broadcast %cst_112 : bf16 to vector<1x10x1x128xbf16>
    %c0_113 = arith.constant 0 : index
    %c0_114 = arith.constant 0 : index
    %c9_115 = arith.constant 9 : index
    %c0_116 = arith.constant 0 : index
    %84 = vector.load %arg9[%c0_113, %c0_114, %c9_115, %c0_116] : memref<1x10x16x128xbf16, #tpu.memory_space<vmem>>, vector<1x10x1x128xbf16>
    tpu.vector_store %arg9[%c0_113, %c0_114, %c9_115, %c0_116], %83 {strides = array<i32>} : memref<1x10x16x128xbf16, #tpu.memory_space<vmem>>, vector<1x10x1x128xbf16>,
    %85 = vector.shape_cast %76 : vector<64x128xbf16> to vector<1x8x8x128xbf16>
    %c0_117 = arith.constant 0 : index
    %c1_118 = arith.constant 1 : index
    %c1_119 = arith.constant 1 : index
    %c0_120 = arith.constant 0 : index
    %86 = vector.load %arg9[%c0_117, %c1_118, %c1_119, %c0_120] : memref<1x10x16x128xbf16, #tpu.memory_space<vmem>>, vector<1x8x8x128xbf16>
    tpu.vector_store %arg9[%c0_117, %c1_118, %c1_119, %c0_120], %85 {strides = array<i32>} : memref<1x10x16x128xbf16, #tpu.memory_space<vmem>>, vector<1x8x8x128xbf16>,
    %c0_121 = arith.constant 0 : index
    %c27_122 = arith.constant 27 : index
    %c0_123 = arith.constant 0 : index
    %c0_124 = arith.constant 0 : index
    %87 = vector.load %arg1[%c0_121, %c27_122, %c0_123, %c0_124] : memref<1x36x16x128xbf16, #tpu.memory_space<vmem>>, vector<1x8x8x128xbf16>
    %88 = vector.shape_cast %87 : vector<1x8x8x128xbf16> to vector<64x128xbf16>
    %c0_125 = arith.constant 0 : index
    %c0_126 = arith.constant 0 : index
    %89 = vector.load %arg6[%c0_125, %c0_126] : memref<128x128xbf16, #tpu.memory_space<vmem>>, vector<128x128xbf16>
    %cst_127 = arith.constant dense<0.000000e+00> : vector<64x128xf32>
    %90 = tpu.matmul %88, %89, %cst_127 {dimension_numbers = #tpu.dot_dimension_numbers<[1], [0], [0], [1], [0, 0, 1, 1], [], []>} : vector<64x128xbf16>, vector<128x128xbf16>, vector<64x128xf32> -> vector<64x128xf32>
    %c0_128 = arith.constant 0 : index
    %c0_129 = arith.constant 0 : index
    %91 = vector.load %arg7[%c0_128, %c0_129] : memref<1x128xf32, #tpu.memory_space<vmem>>, vector<1x128xf32>
    %92 = vector.broadcast %91 : vector<1x128xf32> to vector<64x128xf32>
    %93 = arith.addf %90, %92 : vector<64x128xf32>
    %c0_130 = arith.constant 0 : index
    %c0_131 = arith.constant 0 : index
    %94 = vector.load %arg10[%c0_130, %c0_131] : memref<64x128xf32, #tpu.memory_space<vmem>>, vector<64x128xf32>
    tpu.vector_store %arg10[%c0_130, %c0_131], %93 {strides = array<i32>} : memref<64x128xf32, #tpu.memory_space<vmem>>, vector<64x128xf32>,
    %c0_132 = arith.constant 0 : index
    %c0_133 = arith.constant 0 : index
    %c0_134 = arith.constant 0 : index
    %c0_135 = arith.constant 0 : index
    %95 = vector.load %arg9[%c0_132, %c0_133, %c0_134, %c0_135] : memref<1x10x16x128xbf16, #tpu.memory_space<vmem>>, vector<1x8x8x128xbf16>
    %c0_136 = arith.constant 0 : index
    %c0_137 = arith.constant 0 : index
    %96 = vector.load %arg10[%c0_136, %c0_137] : memref<64x128xf32, #tpu.memory_space<vmem>>, vector<64x128xf32>
    %97 = vector.shape_cast %95 : vector<1x8x8x128xbf16> to vector<64x128xbf16>
    %c0_138 = arith.constant 0 : index
    %c0_139 = arith.constant 0 : index
    %c0_140 = arith.constant 0 : index
    %98 = vector.load %arg4[%c0_138, %c0_139, %c0_140] : memref<9x128x128xbf16, #tpu.memory_space<vmem>>, vector<1x128x128xbf16>
    %99 = vector.shape_cast %98 : vector<1x128x128xbf16> to vector<128x128xbf16>
    %cst_141 = arith.constant dense<0.000000e+00> : vector<64x128xf32>
    %100 = tpu.matmul %97, %99, %cst_141 {dimension_numbers = #tpu.dot_dimension_numbers<[1], [0], [0], [1], [0, 0, 1, 1], [], []>} : vector<64x128xbf16>, vector<128x128xbf16>, vector<64x128xf32> -> vector<64x128xf32>
    %101 = arith.addf %96, %100 : vector<64x128xf32>
    %c0_142 = arith.constant 0 : index
    %c0_143 = arith.constant 0 : index
    %102 = vector.load %arg10[%c0_142, %c0_143] : memref<64x128xf32, #tpu.memory_space<vmem>>, vector<64x128xf32>
    tpu.vector_store %arg10[%c0_142, %c0_143], %101 {strides = array<i32>} : memref<64x128xf32, #tpu.memory_space<vmem>>, vector<64x128xf32>,
    %c0_144 = arith.constant 0 : index
    %c0_145 = arith.constant 0 : index
    %c1_146 = arith.constant 1 : index
    %c0_147 = arith.constant 0 : index
    %103 = vector.load %arg9[%c0_144, %c0_145, %c1_146, %c0_147] : memref<1x10x16x128xbf16, #tpu.memory_space<vmem>>, vector<1x8x8x128xbf16>
    %c0_148 = arith.constant 0 : index
    %c0_149 = arith.constant 0 : index
    %104 = vector.load %arg10[%c0_148, %c0_149] : memref<64x128xf32, #tpu.memory_space<vmem>>, vector<64x128xf32>
    %105 = vector.shape_cast %103 : vector<1x8x8x128xbf16> to vector<64x128xbf16>
    %c1_150 = arith.constant 1 : index
    %c0_151 = arith.constant 0 : index
    %c0_152 = arith.constant 0 : index
    %106 = vector.load %arg4[%c1_150, %c0_151, %c0_152] : memref<9x128x128xbf16, #tpu.memory_space<vmem>>, vector<1x128x128xbf16>
    %107 = vector.shape_cast %106 : vector<1x128x128xbf16> to vector<128x128xbf16>
    %cst_153 = arith.constant dense<0.000000e+00> : vector<64x128xf32>
    %108 = tpu.matmul %105, %107, %cst_153 {dimension_numbers = #tpu.dot_dimension_numbers<[1], [0], [0], [1], [0, 0, 1, 1], [], []>} : vector<64x128xbf16>, vector<128x128xbf16>, vector<64x128xf32> -> vector<64x128xf32>
    %109 = arith.addf %104, %108 : vector<64x128xf32>
    %c0_154 = arith.constant 0 : index
    %c0_155 = arith.constant 0 : index
    %110 = vector.load %arg10[%c0_154, %c0_155] : memref<64x128xf32, #tpu.memory_space<vmem>>, vector<64x128xf32>
    tpu.vector_store %arg10[%c0_154, %c0_155], %109 {strides = array<i32>} : memref<64x128xf32, #tpu.memory_space<vmem>>, vector<64x128xf32>,
    %c0_156 = arith.constant 0 : index
    %c0_157 = arith.constant 0 : index
    %c2_158 = arith.constant 2 : index
    %c0_159 = arith.constant 0 : index
    %111 = vector.load %arg9[%c0_156, %c0_157, %c2_158, %c0_159] : memref<1x10x16x128xbf16, #tpu.memory_space<vmem>>, vector<1x8x8x128xbf16>
    %c0_160 = arith.constant 0 : index
    %c0_161 = arith.constant 0 : index
    %112 = vector.load %arg10[%c0_160, %c0_161] : memref<64x128xf32, #tpu.memory_space<vmem>>, vector<64x128xf32>
    %113 = vector.shape_cast %111 : vector<1x8x8x128xbf16> to vector<64x128xbf16>
    %c2_162 = arith.constant 2 : index
    %c0_163 = arith.constant 0 : index
    %c0_164 = arith.constant 0 : index
    %114 = vector.load %arg4[%c2_162, %c0_163, %c0_164] : memref<9x128x128xbf16, #tpu.memory_space<vmem>>, vector<1x128x128xbf16>
    %115 = vector.shape_cast %114 : vector<1x128x128xbf16> to vector<128x128xbf16>
    %cst_165 = arith.constant dense<0.000000e+00> : vector<64x128xf32>
    %116 = tpu.matmul %113, %115, %cst_165 {dimension_numbers = #tpu.dot_dimension_numbers<[1], [0], [0], [1], [0, 0, 1, 1], [], []>} : vector<64x128xbf16>, vector<128x128xbf16>, vector<64x128xf32> -> vector<64x128xf32>
    %117 = arith.addf %112, %116 : vector<64x128xf32>
    %c0_166 = arith.constant 0 : index
    %c0_167 = arith.constant 0 : index
    %118 = vector.load %arg10[%c0_166, %c0_167] : memref<64x128xf32, #tpu.memory_space<vmem>>, vector<64x128xf32>
    tpu.vector_store %arg10[%c0_166, %c0_167], %117 {strides = array<i32>} : memref<64x128xf32, #tpu.memory_space<vmem>>, vector<64x128xf32>,
    %c0_168 = arith.constant 0 : index
    %c1_169 = arith.constant 1 : index
    %c0_170 = arith.constant 0 : index
    %c0_171 = arith.constant 0 : index
    %119 = vector.load %arg9[%c0_168, %c1_169, %c0_170, %c0_171] : memref<1x10x16x128xbf16, #tpu.memory_space<vmem>>, vector<1x8x8x128xbf16>
    %c0_172 = arith.constant 0 : index
    %c0_173 = arith.constant 0 : index
    %120 = vector.load %arg10[%c0_172, %c0_173] : memref<64x128xf32, #tpu.memory_space<vmem>>, vector<64x128xf32>
    %121 = vector.shape_cast %119 : vector<1x8x8x128xbf16> to vector<64x128xbf16>
    %c3_174 = arith.constant 3 : index
    %c0_175 = arith.constant 0 : index
    %c0_176 = arith.constant 0 : index
    %122 = vector.load %arg4[%c3_174, %c0_175, %c0_176] : memref<9x128x128xbf16, #tpu.memory_space<vmem>>, vector<1x128x128xbf16>
    %123 = vector.shape_cast %122 : vector<1x128x128xbf16> to vector<128x128xbf16>
    %cst_177 = arith.constant dense<0.000000e+00> : vector<64x128xf32>
    %124 = tpu.matmul %121, %123, %cst_177 {dimension_numbers = #tpu.dot_dimension_numbers<[1], [0], [0], [1], [0, 0, 1, 1], [], []>} : vector<64x128xbf16>, vector<128x128xbf16>, vector<64x128xf32> -> vector<64x128xf32>
    %125 = arith.addf %120, %124 : vector<64x128xf32>
    %c0_178 = arith.constant 0 : index
    %c0_179 = arith.constant 0 : index
    %126 = vector.load %arg10[%c0_178, %c0_179] : memref<64x128xf32, #tpu.memory_space<vmem>>, vector<64x128xf32>
    tpu.vector_store %arg10[%c0_178, %c0_179], %125 {strides = array<i32>} : memref<64x128xf32, #tpu.memory_space<vmem>>, vector<64x128xf32>,
    %c0_180 = arith.constant 0 : index
    %c1_181 = arith.constant 1 : index
    %c1_182 = arith.constant 1 : index
    %c0_183 = arith.constant 0 : index
    %127 = vector.load %arg9[%c0_180, %c1_181, %c1_182, %c0_183] : memref<1x10x16x128xbf16, #tpu.memory_space<vmem>>, vector<1x8x8x128xbf16>
    %c0_184 = arith.constant 0 : index
    %c0_185 = arith.constant 0 : index
    %128 = vector.load %arg10[%c0_184, %c0_185] : memref<64x128xf32, #tpu.memory_space<vmem>>, vector<64x128xf32>
    %129 = vector.shape_cast %127 : vector<1x8x8x128xbf16> to vector<64x128xbf16>
    %c4_186 = arith.constant 4 : index
    %c0_187 = arith.constant 0 : index
    %c0_188 = arith.constant 0 : index
    %130 = vector.load %arg4[%c4_186, %c0_187, %c0_188] : memref<9x128x128xbf16, #tpu.memory_space<vmem>>, vector<1x128x128xbf16>
    %131 = vector.shape_cast %130 : vector<1x128x128xbf16> to vector<128x128xbf16>
    %cst_189 = arith.constant dense<0.000000e+00> : vector<64x128xf32>
    %132 = tpu.matmul %129, %131, %cst_189 {dimension_numbers = #tpu.dot_dimension_numbers<[1], [0], [0], [1], [0, 0, 1, 1], [], []>} : vector<64x128xbf16>, vector<128x128xbf16>, vector<64x128xf32> -> vector<64x128xf32>
    %133 = arith.addf %128, %132 : vector<64x128xf32>
    %c0_190 = arith.constant 0 : index
    %c0_191 = arith.constant 0 : index
    %134 = vector.load %arg10[%c0_190, %c0_191] : memref<64x128xf32, #tpu.memory_space<vmem>>, vector<64x128xf32>
    tpu.vector_store %arg10[%c0_190, %c0_191], %133 {strides = array<i32>} : memref<64x128xf32, #tpu.memory_space<vmem>>, vector<64x128xf32>,
    %c0_192 = arith.constant 0 : index
    %c1_193 = arith.constant 1 : index
    %c2_194 = arith.constant 2 : index
    %c0_195 = arith.constant 0 : index
    %135 = vector.load %arg9[%c0_192, %c1_193, %c2_194, %c0_195] : memref<1x10x16x128xbf16, #tpu.memory_space<vmem>>, vector<1x8x8x128xbf16>
    %c0_196 = arith.constant 0 : index
    %c0_197 = arith.constant 0 : index
    %136 = vector.load %arg10[%c0_196, %c0_197] : memref<64x128xf32, #tpu.memory_space<vmem>>, vector<64x128xf32>
    %137 = vector.shape_cast %135 : vector<1x8x8x128xbf16> to vector<64x128xbf16>
    %c5_198 = arith.constant 5 : index
    %c0_199 = arith.constant 0 : index
    %c0_200 = arith.constant 0 : index
    %138 = vector.load %arg4[%c5_198, %c0_199, %c0_200] : memref<9x128x128xbf16, #tpu.memory_space<vmem>>, vector<1x128x128xbf16>
    %139 = vector.shape_cast %138 : vector<1x128x128xbf16> to vector<128x128xbf16>
    %cst_201 = arith.constant dense<0.000000e+00> : vector<64x128xf32>
    %140 = tpu.matmul %137, %139, %cst_201 {dimension_numbers = #tpu.dot_dimension_numbers<[1], [0], [0], [1], [0, 0, 1, 1], [], []>} : vector<64x128xbf16>, vector<128x128xbf16>, vector<64x128xf32> -> vector<64x128xf32>
    %141 = arith.addf %136, %140 : vector<64x128xf32>
    %c0_202 = arith.constant 0 : index
    %c0_203 = arith.constant 0 : index
    %142 = vector.load %arg10[%c0_202, %c0_203] : memref<64x128xf32, #tpu.memory_space<vmem>>, vector<64x128xf32>
    tpu.vector_store %arg10[%c0_202, %c0_203], %141 {strides = array<i32>} : memref<64x128xf32, #tpu.memory_space<vmem>>, vector<64x128xf32>,
    %c0_204 = arith.constant 0 : index
    %c2_205 = arith.constant 2 : index
    %c0_206 = arith.constant 0 : index
    %c0_207 = arith.constant 0 : index
    %143 = vector.load %arg9[%c0_204, %c2_205, %c0_206, %c0_207] : memref<1x10x16x128xbf16, #tpu.memory_space<vmem>>, vector<1x8x8x128xbf16>
    %c0_208 = arith.constant 0 : index
    %c0_209 = arith.constant 0 : index
    %144 = vector.load %arg10[%c0_208, %c0_209] : memref<64x128xf32, #tpu.memory_space<vmem>>, vector<64x128xf32>
    %145 = vector.shape_cast %143 : vector<1x8x8x128xbf16> to vector<64x128xbf16>
    %c6_210 = arith.constant 6 : index
    %c0_211 = arith.constant 0 : index
    %c0_212 = arith.constant 0 : index
    %146 = vector.load %arg4[%c6_210, %c0_211, %c0_212] : memref<9x128x128xbf16, #tpu.memory_space<vmem>>, vector<1x128x128xbf16>
    %147 = vector.shape_cast %146 : vector<1x128x128xbf16> to vector<128x128xbf16>
    %cst_213 = arith.constant dense<0.000000e+00> : vector<64x128xf32>
    %148 = tpu.matmul %145, %147, %cst_213 {dimension_numbers = #tpu.dot_dimension_numbers<[1], [0], [0], [1], [0, 0, 1, 1], [], []>} : vector<64x128xbf16>, vector<128x128xbf16>, vector<64x128xf32> -> vector<64x128xf32>
    %149 = arith.addf %144, %148 : vector<64x128xf32>
    %c0_214 = arith.constant 0 : index
    %c0_215 = arith.constant 0 : index
    %150 = vector.load %arg10[%c0_214, %c0_215] : memref<64x128xf32, #tpu.memory_space<vmem>>, vector<64x128xf32>
    tpu.vector_store %arg10[%c0_214, %c0_215], %149 {strides = array<i32>} : memref<64x128xf32, #tpu.memory_space<vmem>>, vector<64x128xf32>,
    %c0_216 = arith.constant 0 : index
    %c2_217 = arith.constant 2 : index
    %c1_218 = arith.constant 1 : index
    %c0_219 = arith.constant 0 : index
    %151 = vector.load %arg9[%c0_216, %c2_217, %c1_218, %c0_219] : memref<1x10x16x128xbf16, #tpu.memory_space<vmem>>, vector<1x8x8x128xbf16>
    %c0_220 = arith.constant 0 : index
    %c0_221 = arith.constant 0 : index
    %152 = vector.load %arg10[%c0_220, %c0_221] : memref<64x128xf32, #tpu.memory_space<vmem>>, vector<64x128xf32>
    %153 = vector.shape_cast %151 : vector<1x8x8x128xbf16> to vector<64x128xbf16>
    %c7_222 = arith.constant 7 : index
    %c0_223 = arith.constant 0 : index
    %c0_224 = arith.constant 0 : index
    %154 = vector.load %arg4[%c7_222, %c0_223, %c0_224] : memref<9x128x128xbf16, #tpu.memory_space<vmem>>, vector<1x128x128xbf16>
    %155 = vector.shape_cast %154 : vector<1x128x128xbf16> to vector<128x128xbf16>
    %cst_225 = arith.constant dense<0.000000e+00> : vector<64x128xf32>
    %156 = tpu.matmul %153, %155, %cst_225 {dimension_numbers = #tpu.dot_dimension_numbers<[1], [0], [0], [1], [0, 0, 1, 1], [], []>} : vector<64x128xbf16>, vector<128x128xbf16>, vector<64x128xf32> -> vector<64x128xf32>
    %157 = arith.addf %152, %156 : vector<64x128xf32>
    %c0_226 = arith.constant 0 : index
    %c0_227 = arith.constant 0 : index
    %158 = vector.load %arg10[%c0_226, %c0_227] : memref<64x128xf32, #tpu.memory_space<vmem>>, vector<64x128xf32>
    tpu.vector_store %arg10[%c0_226, %c0_227], %157 {strides = array<i32>} : memref<64x128xf32, #tpu.memory_space<vmem>>, vector<64x128xf32>,
    %c0_228 = arith.constant 0 : index
    %c2_229 = arith.constant 2 : index
    %c2_230 = arith.constant 2 : index
    %c0_231 = arith.constant 0 : index
    %159 = vector.load %arg9[%c0_228, %c2_229, %c2_230, %c0_231] : memref<1x10x16x128xbf16, #tpu.memory_space<vmem>>, vector<1x8x8x128xbf16>
    %c0_232 = arith.constant 0 : index
    %c0_233 = arith.constant 0 : index
    %160 = vector.load %arg10[%c0_232, %c0_233] : memref<64x128xf32, #tpu.memory_space<vmem>>, vector<64x128xf32>
    %161 = vector.shape_cast %159 : vector<1x8x8x128xbf16> to vector<64x128xbf16>
    %c8_234 = arith.constant 8 : index
    %c0_235 = arith.constant 0 : index
    %c0_236 = arith.constant 0 : index
    %162 = vector.load %arg4[%c8_234, %c0_235, %c0_236] : memref<9x128x128xbf16, #tpu.memory_space<vmem>>, vector<1x128x128xbf16>
    %163 = vector.shape_cast %162 : vector<1x128x128xbf16> to vector<128x128xbf16>
    %cst_237 = arith.constant dense<0.000000e+00> : vector<64x128xf32>
    %164 = tpu.matmul %161, %163, %cst_237 {dimension_numbers = #tpu.dot_dimension_numbers<[1], [0], [0], [1], [0, 0, 1, 1], [], []>} : vector<64x128xbf16>, vector<128x128xbf16>, vector<64x128xf32> -> vector<64x128xf32>
    %165 = arith.addf %160, %164 : vector<64x128xf32>
    %c0_238 = arith.constant 0 : index
    %c0_239 = arith.constant 0 : index
    %166 = vector.load %arg10[%c0_238, %c0_239] : memref<64x128xf32, #tpu.memory_space<vmem>>, vector<64x128xf32>
    tpu.vector_store %arg10[%c0_238, %c0_239], %165 {strides = array<i32>} : memref<64x128xf32, #tpu.memory_space<vmem>>, vector<64x128xf32>,
    %c0_240 = arith.constant 0 : index
    %c0_241 = arith.constant 0 : index
    %167 = vector.load %arg10[%c0_240, %c0_241] : memref<64x128xf32, #tpu.memory_space<vmem>>, vector<64x128xf32>
    %c0_242 = arith.constant 0 : index
    %c0_243 = arith.constant 0 : index
    %168 = vector.load %arg5[%c0_242, %c0_243] : memref<1x128xf32, #tpu.memory_space<vmem>>, vector<1x128xf32>
    %169 = vector.broadcast %168 : vector<1x128xf32> to vector<64x128xf32>
    %170 = arith.addf %167, %169 : vector<64x128xf32>
    %cst_244 = arith.constant 0.000000e+00 : f32
    %171 = vector.broadcast %cst_244 : f32 to vector<64x128xf32>
    %172 = arith.maximumf %170, %171 : vector<64x128xf32>
    %173 = arith.truncf %172 : vector<64x128xf32> to vector<64x128xbf16>
    %c0_245 = arith.constant 0 : index
    %c0_246 = arith.constant 0 : index
    %174 = vector.load %arg8[%c0_245, %c0_246] : memref<64x128xbf16, #tpu.memory_space<vmem>>, vector<64x128xbf16>
    tpu.vector_store %arg8[%c0_245, %c0_246], %173 {strides = array<i32>} : memref<64x128xbf16, #tpu.memory_space<vmem>>, vector<64x128xbf16>,
    return
  }
  func.func @transform_0(%arg0: i32) -> (i32, i32, i32, i32) {
    %c0_i32 = arith.constant 0 : i32
    %c0_i32_0 = arith.constant 0 : i32
    %c0_i32_1 = arith.constant 0 : i32
    %c0_i32_2 = arith.constant 0 : i32
    return %arg0, %c0_i32, %c0_i32_0, %c0_i32_1 : i32, i32, i32, i32
  }
  func.func @transform_1(%arg0: i32) -> (i32, i32, i32) {
    %c0_i32 = arith.constant 0 : i32
    %c0_i32_0 = arith.constant 0 : i32
    %c0_i32_1 = arith.constant 0 : i32
    %c0_i32_2 = arith.constant 0 : i32
    return %c0_i32, %c0_i32_0, %c0_i32_1 : i32, i32, i32
  }
  func.func @transform_2(%arg0: i32) -> (i32, i32) {
    %c0_i32 = arith.constant 0 : i32
    %c0_i32_0 = arith.constant 0 : i32
    %c0_i32_1 = arith.constant 0 : i32
    return %c0_i32, %c0_i32_0 : i32, i32
  }
  func.func @transform_3(%arg0: i32) -> (i32, i32, i32) {
    %c0_i32 = arith.constant 0 : i32
    %c0_i32_0 = arith.constant 0 : i32
    %c0_i32_1 = arith.constant 0 : i32
    %c0_i32_2 = arith.constant 0 : i32
    return %c0_i32, %c0_i32_0, %c0_i32_1 : i32, i32, i32
  }
  func.func @transform_4(%arg0: i32) -> (i32, i32) {
    %c0_i32 = arith.constant 0 : i32
    %c0_i32_0 = arith.constant 0 : i32
    %c0_i32_1 = arith.constant 0 : i32
    return %c0_i32, %c0_i32_0 : i32, i32
  }
  func.func @transform_5(%arg0: i32) -> (i32, i32) {
    %c0_i32 = arith.constant 0 : i32
    %c0_i32_0 = arith.constant 0 : i32
    %c0_i32_1 = arith.constant 0 : i32
    return %c0_i32, %c0_i32_0 : i32, i32
  }
  func.func @transform_6(%arg0: i32) -> (i32, i32) {
    %c0_i32 = arith.constant 0 : i32
    %c0_i32_0 = arith.constant 0 : i32
    %c0_i32_1 = arith.constant 0 : i32
    return %c0_i32, %c0_i32_0 : i32, i32
  }
  func.func @transform_7(%arg0: i32) -> (i32, i32) {
    %c0_i32 = arith.constant 0 : i32
    %c0_i32_0 = arith.constant 0 : i32
    return %arg0, %c0_i32 : i32, i32
  }
}

</mosaic_0001>

<llo_original>
// kernel: tpu_custom_call.1
$region0: #{tpu_custom_call.1}
  #allocation0 [shape = 'u32[]', space=smem, size = 0x4, offset = 0x4, fixed_abs, tag = 'smem constant byte address 0x4 - core index']
  #allocation1 [shape = 'u32[144,128]{1,0:T(1,128)}', space=vmem, size = 0x12000, scoped, tag = 'internal scratch']
  #allocation2 [shape = 'bf16[1,10,16,128]{3,2,1,0:T(16,128)(2,1)}', space=vmem, size = 0xa000, scoped, tag = 'scratch operand']
  #allocation3 [shape = 'f32[64,128]{1,0:T(8,128)}', space=vmem, size = 0x8000, scoped, tag = 'scratch operand']
  %s0 = inlined_call_operand.hbm [shape: bf16[2,36,16,128], index: 0, kind: input, shape index: {}]
  %s1 = inlined_call_operand.hbm [shape: bf16[9,128,128], index: 1, kind: input, shape index: {}]
  %s2 = inlined_call_operand.vmem [shape: f32[1,128], index: 2, kind: input, shape index: {}]
  %s3 = inlined_call_operand.hbm [shape: bf16[9,128,128], index: 3, kind: input, shape index: {}]
  %s4 = inlined_call_operand.vmem [shape: f32[1,128], index: 4, kind: input, shape index: {}]
  %s5 = inlined_call_operand.hbm [shape: bf16[128,128], index: 5, kind: input, shape index: {}]
  %s6 = inlined_call_operand.vmem [shape: f32[1,128], index: 6, kind: input, shape index: {}]
  %s7 = inlined_call_operand.hbm [shape: bf16[128,128], index: 7, kind: output, shape index: {}]
  %s8 = sld [smem:[#allocation0]]
  $region77: #{tpu_custom_call.1} parent=0
    _
  %s10 = ssub.s32 1, %s8
  %s11 = scalar_select 0, %s10, %s8
  $region1: #{tpu_custom_call.1} parent=0
    #allocation4 [shape = 'u8[294912]{0}', space=vmem, size = 0x48000, scoped, tag = 'input window, operand 0']
    #allocation5 [shape = 's32[2]{0}', space=sflag, size = 0x8, scoped, tag = 'scoped memory for tpu_custom_call.1']
    #allocation6 [shape = 's32[2]{0}', space=sflag, size = 0x8, scoped, tag = 'scoped memory for tpu_custom_call.1']
    #allocation7 [shape = 'u8[294912]{0}', space=vmem, size = 0x48000, scoped, tag = 'input window, operand 1, single buffered']
    #allocation8 [shape = 's32[1]{0}', space=sflag, size = 0x4, scoped, tag = 'scoped memory for tpu_custom_call.1']
    #allocation9 [shape = 'u8[294912]{0}', space=vmem, size = 0x48000, scoped, tag = 'input window, operand 3, single buffered']
    #allocation10 [shape = 'u8[32768]{0}', space=vmem, size = 0x8000, scoped, tag = 'input window, operand 5, single buffered']
    #allocation11 [shape = 's32[1]{0}', space=sflag, size = 0x4, scoped, tag = 'scoped memory for tpu_custom_call.1']
    #allocation12 [shape = 'u8[32768]{0}', space=vmem, size = 0x8000, scoped, tag = 'output window, operand 0']
    %12 = vsyncpa [#allocation5], 0
    %s13 = scalar_lea.sflag [#allocation5], 1
    %14 = vsyncpa %s13, 0
    %15 = vsyncpa [#allocation8], 0
    %16 = vsyncpa [#allocation11], 0
    %17 = vsyncpa [#allocation6], 0
    %s18 = scalar_lea.sflag [#allocation6], 1
    %19 = vsyncpa %s18, 0
    loop: start=0, step=1, limit=4
    $region2: #{tpu_custom_call.1} parent=1 // loop_pre_header
      _
    $region3: #{tpu_custom_call.1} parent=1 // loop_header
      %s21 = sphi 0, %s25
      %p22 = scmp.ge.s32.totalorder %s21, 4
      %s31 = sphi 0, %s33
      %s34 = sphi 0, %s31
      %s35 = sphi 0, %s34
      %s51 = sphi 0, %s35
      %s55 = sphi 0, %s55
      %s57 = sphi 0, %s55
      %s58 = sphi 0, %s57
      %s72 = sphi 0, %s58
      %s76 = sphi 0, %s76
      %s78 = sphi 0, %s76
      %s79 = sphi 0, %s78
      %s93 = sphi 0, %s79
      %s97 = sphi 0, %s97
      %s99 = sphi 0, %s97
      %s100 = sphi 0, %s99
      %s114 = sphi 0, %s100
      %s118 = sphi 0, %s118
      %s120 = sphi 0, %s118
      %s121 = sphi 0, %s120
      %s135 = sphi 0, %s121
      %s139 = sphi 0, %s139
      %s141 = sphi 0, %s139
      %s142 = sphi 0, %s141
      %s156 = sphi 0, %s142
      %s160 = sphi 0, %s160
      %s162 = sphi 0, %s160
      %s163 = sphi 0, %s162
      %s177 = sphi 0, %s163
      %s183 = sphi 0, %s185
      %s186 = sphi 0, %s183
      %s187 = sphi 0, %s186
      %s203 = sphi 0, %s187
    $region4: #{tpu_custom_call.1} parent=1 // loop_header_branch
      %24 = sbr.rel (%p22) target = $region8
    $region5: #{tpu_custom_call.1} parent=1 // loop_body
      %s26 = ssub.s32 %s21, 1
      %s27 = ssub.s32 %s21, 2
      %s28 = sadd.s32 %s21, 1
      %s29 = ssub.s32 %s21, %s28
      %p30 = scmp.eq.s32.totalorder %s29, 0
      %s32 = sadd.s32 %s31, 1
      %s33 = scalar_select %p30, %s31, %s32
      %p36 = pneg %p30
      %p37 = scmp.eq.s32.totalorder %s21, 1
      %p38 = por %p36, %p37
      %p39 = scmp.ne.s32.totalorder %s31, %s34
      %p40 = scmp.eq.s32.totalorder %s21, 0
      %p41 = por %p39, %p40
      %p42 = scmp.ne.s32.totalorder %s31, %s34
      %p43 = scmp.eq.s32.totalorder %s26, 1
      %p44 = por %p42, %p43
      %p45 = scmp.ne.s32.totalorder %s34, %s35
      %p46 = scmp.eq.s32.totalorder %s26, 0
      %p47 = por %p45, %p46
      %p48 = scmp.ne.s32.totalorder %s34, %s35
      %p49 = scmp.eq.s32.totalorder %s27, 1
      %p50 = por %p48, %p49
      %p52 = scmp.ne.s32.totalorder %s35, %s51
      %p53 = scmp.eq.s32.totalorder %s27, 0
      %p54 = por %p52, %p53
      %s56 = sadd.s32 %s55, 1
      %p59 = scmp.eq.s32.totalorder %s21, 1
      %p60 = scmp.ne.s32.totalorder %s55, %s57
      %p61 = scmp.eq.s32.totalorder %s21, 0
      %p62 = por %p60, %p61
      %p63 = scmp.ne.s32.totalorder %s55, %s57
      %p64 = scmp.eq.s32.totalorder %s26, 1
      %p65 = por %p63, %p64
      %p66 = scmp.ne.s32.totalorder %s57, %s58
      %p67 = scmp.eq.s32.totalorder %s26, 0
      %p68 = por %p66, %p67
      %p69 = scmp.ne.s32.totalorder %s57, %s58
      %p70 = scmp.eq.s32.totalorder %s27, 1
      %p71 = por %p69, %p70
      %p73 = scmp.ne.s32.totalorder %s58, %s72
      %p74 = scmp.eq.s32.totalorder %s27, 0
      %p75 = por %p73, %p74
      %s77 = sadd.s32 %s76, 1
      %p80 = scmp.eq.s32.totalorder %s21, 1
      %p81 = scmp.ne.s32.totalorder %s76, %s78
      %p82 = scmp.eq.s32.totalorder %s21, 0
      %p83 = por %p81, %p82
      %p84 = scmp.ne.s32.totalorder %s76, %s78
      %p85 = scmp.eq.s32.totalorder %s26, 1
      %p86 = por %p84, %p85
      %p87 = scmp.ne.s32.totalorder %s78, %s79
      %p88 = scmp.eq.s32.totalorder %s26, 0
      %p89 = por %p87, %p88
      %p90 = scmp.ne.s32.totalorder %s78, %s79
      %p91 = scmp.eq.s32.totalorder %s27, 1
      %p92 = por %p90, %p91
      %p94 = scmp.ne.s32.totalorder %s79, %s93
      %p95 = scmp.eq.s32.totalorder %s27, 0
      %p96 = por %p94, %p95
      %s98 = sadd.s32 %s97, 1
      %p101 = scmp.eq.s32.totalorder %s21, 1
      %p102 = scmp.ne.s32.totalorder %s97, %s99
      %p103 = scmp.eq.s32.totalorder %s21, 0
      %p104 = por %p102, %p103
      %p105 = scmp.ne.s32.totalorder %s97, %s99
      %p106 = scmp.eq.s32.totalorder %s26, 1
      %p107 = por %p105, %p106
      %p108 = scmp.ne.s32.totalorder %s99, %s100
      %p109 = scmp.eq.s32.totalorder %s26, 0
      %p110 = por %p108, %p109
      %p111 = scmp.ne.s32.totalorder %s99, %s100
      %p112 = scmp.eq.s32.totalorder %s27, 1
      %p113 = por %p111, %p112
      %p115 = scmp.ne.s32.totalorder %s100, %s114
      %p116 = scmp.eq.s32.totalorder %s27, 0
      %p117 = por %p115, %p116
      %s119 = sadd.s32 %s118, 1
      %p122 = scmp.eq.s32.totalorder %s21, 1
      %p123 = scmp.ne.s32.totalorder %s118, %s120
      %p124 = scmp.eq.s32.totalorder %s21, 0
      %p125 = por %p123, %p124
      %p126 = scmp.ne.s32.totalorder %s118, %s120
      %p127 = scmp.eq.s32.totalorder %s26, 1
      %p128 = por %p126, %p127
      %p129 = scmp.ne.s32.totalorder %s120, %s121
      %p130 = scmp.eq.s32.totalorder %s26, 0
      %p131 = por %p129, %p130
      %p132 = scmp.ne.s32.totalorder %s120, %s121
      %p133 = scmp.eq.s32.totalorder %s27, 1
      %p134 = por %p132, %p133
      %p136 = scmp.ne.s32.totalorder %s121, %s135
      %p137 = scmp.eq.s32.totalorder %s27, 0
      %p138 = por %p136, %p137
      %s140 = sadd.s32 %s139, 1
      %p143 = scmp.eq.s32.totalorder %s21, 1
      %p144 = scmp.ne.s32.totalorder %s139, %s141
      %p145 = scmp.eq.s32.totalorder %s21, 0
      %p146 = por %p144, %p145
      %p147 = scmp.ne.s32.totalorder %s139, %s141
      %p148 = scmp.eq.s32.totalorder %s26, 1
      %p149 = por %p147, %p148
      %p150 = scmp.ne.s32.totalorder %s141, %s142
      %p151 = scmp.eq.s32.totalorder %s26, 0
      %p152 = por %p150, %p151
      %p153 = scmp.ne.s32.totalorder %s141, %s142
      %p154 = scmp.eq.s32.totalorder %s27, 1
      %p155 = por %p153, %p154
      %p157 = scmp.ne.s32.totalorder %s142, %s156
      %p158 = scmp.eq.s32.totalorder %s27, 0
      %p159 = por %p157, %p158
      %s161 = sadd.s32 %s160, 1
      %p164 = scmp.eq.s32.totalorder %s21, 1
      %p165 = scmp.ne.s32.totalorder %s160, %s162
      %p166 = scmp.eq.s32.totalorder %s21, 0
      %p167 = por %p165, %p166
      %p168 = scmp.ne.s32.totalorder %s160, %s162
      %p169 = scmp.eq.s32.totalorder %s26, 1
      %p170 = por %p168, %p169
      %p171 = scmp.ne.s32.totalorder %s162, %s163
      %p172 = scmp.eq.s32.totalorder %s26, 0
      %p173 = por %p171, %p172
      %p174 = scmp.ne.s32.totalorder %s162, %s163
      %p175 = scmp.eq.s32.totalorder %s27, 1
      %p176 = por %p174, %p175
      %p178 = scmp.ne.s32.totalorder %s163, %s177
      %p179 = scmp.eq.s32.totalorder %s27, 0
      %p180 = por %p178, %p179
      %s181 = ssub.s32 %s21, %s28
      %p182 = scmp.eq.s32.totalorder %s181, 0
      %s184 = sadd.s32 %s183, 1
      %s185 = scalar_select %p182, %s183, %s184
      %p188 = pneg %p182
      %p189 = scmp.eq.s32.totalorder %s21, 1
      %p190 = por %p188, %p189
      %p191 = scmp.ne.s32.totalorder %s183, %s186
      %p192 = scmp.eq.s32.totalorder %s21, 0
      %p193 = por %p191, %p192
      %p194 = scmp.ne.s32.totalorder %s183, %s186
      %p195 = scmp.eq.s32.totalorder %s26, 1
      %p196 = por %p194, %p195
      %p197 = scmp.ne.s32.totalorder %s186, %s187
      %p198 = scmp.eq.s32.totalorder %s26, 0
      %p199 = por %p197, %p198
      %p200 = scmp.ne.s32.totalorder %s186, %s187
      %p201 = scmp.eq.s32.totalorder %s27, 1
      %p202 = por %p200, %p201
      %p204 = scmp.ne.s32.totalorder %s187, %s203
      %p205 = scmp.eq.s32.totalorder %s27, 0
      %p206 = por %p204, %p205
      %p207 = scmp.le.s32.totalorder 1, %s21
      %p208 = scmp.lt.s32.totalorder %s21, 3
      %p209 = pnand %p207, %p208
      %p210 = pneg %p209
      // Predicated region
      $region9: #{tpu_custom_call.1} parent=5 // pred_check
        _
      $region10: #{tpu_custom_call.1} parent=5 // pred_check_branch
        %212 = sbr.rel (%p209) target = $region12
      $region11: #{tpu_custom_call.1} parent=5 // pred_region
        %s213 = ssub.s32 %s21, 1
        // Predicated region
        $region13: #{tpu_custom_call.1} parent=11 // pred_check
          %p214 = pneg %p68
        $region14: #{tpu_custom_call.1} parent=11 // pred_check_branch
          %216 = sbr.rel (%p214) target = $region16
        $region15: #{tpu_custom_call.1} parent=11 // pred_region
          %s218 = ssub.s32 9216, 9216
          %219 = vsyncadd [#allocation8], %s218
          %s220 = sshll.u32 [#allocation7], 4
          %s221 = int_to_ptr.vmem [resolvable:$true] %s220
          %226 = dma.hbm_to_vmem [thread:$0]  %s1, 9216, %s221, [#allocation8], 64, 64, 4
        $region16: #{tpu_custom_call.1} parent=11 // pred_fallthru
          _
        // Predicated region
        $region17: #{tpu_custom_call.1} parent=11 // pred_check
          %p227 = pneg %p89
        $region18: #{tpu_custom_call.1} parent=11 // pred_check_branch
          %229 = sbr.rel (%p227) target = $region20
        $region19: #{tpu_custom_call.1} parent=11 // pred_region
          _
        $region20: #{tpu_custom_call.1} parent=11 // pred_fallthru
          _
        // Predicated region
        $region21: #{tpu_custom_call.1} parent=11 // pred_check
          %p230 = pneg %p110
        $region22: #{tpu_custom_call.1} parent=11 // pred_check_branch
          %232 = sbr.rel (%p230) target = $region24
        $region23: #{tpu_custom_call.1} parent=11 // pred_region
          %s234 = ssub.s32 9216, 9216
          %235 = vsyncadd [#allocation8], %s234
          %s236 = sshll.u32 [#allocation9], 4
          %s237 = int_to_ptr.vmem [resolvable:$true] %s236
          %242 = dma.hbm_to_vmem [thread:$0]  %s3, 9216, %s237, [#allocation8], 64, 64, 4
        $region24: #{tpu_custom_call.1} parent=11 // pred_fallthru
          _
        // Predicated region
        $region25: #{tpu_custom_call.1} parent=11 // pred_check
          %p243 = pneg %p131
        $region26: #{tpu_custom_call.1} parent=11 // pred_check_branch
          %245 = sbr.rel (%p243) target = $region28
        $region27: #{tpu_custom_call.1} parent=11 // pred_region
          _
        $region28: #{tpu_custom_call.1} parent=11 // pred_fallthru
          _
        // Predicated region
        $region29: #{tpu_custom_call.1} parent=11 // pred_check
          %p246 = pneg %p152
        $region30: #{tpu_custom_call.1} parent=11 // pred_check_branch
          %248 = sbr.rel (%p246) target = $region32
        $region31: #{tpu_custom_call.1} parent=11 // pred_region
          %s250 = ssub.s32 1024, 1024
          %251 = vsyncadd [#allocation11], %s250
          %s252 = sshll.u32 [#allocation10], 4
          %s253 = int_to_ptr.vmem [resolvable:$true] %s252
          %258 = dma.hbm_to_vmem [thread:$0]  %s5, 1024, %s253, [#allocation11], 64, 64, 4
        $region32: #{tpu_custom_call.1} parent=11 // pred_fallthru
          _
        // Predicated region
        $region33: #{tpu_custom_call.1} parent=11 // pred_check
          %p259 = pneg %p173
        $region34: #{tpu_custom_call.1} parent=11 // pred_check_branch
          %261 = sbr.rel (%p259) target = $region36
        $region35: #{tpu_custom_call.1} parent=11 // pred_region
          _
        $region36: #{tpu_custom_call.1} parent=11 // pred_fallthru
          _
      $region12: #{tpu_custom_call.1} parent=5 // pred_fallthru
        _
      %p262 = scmp.lt.s32.totalorder %s21, 2
      // Predicated region
      $region37: #{tpu_custom_call.1} parent=5 // pred_check
        %p263 = pneg %p262
      $region38: #{tpu_custom_call.1} parent=5 // pred_check_branch
        %265 = sbr.rel (%p263) target = $region40
      $region39: #{tpu_custom_call.1} parent=5 // pred_region
        // Predicated region
        $region41: #{tpu_custom_call.1} parent=39 // pred_check
          %p266 = pneg %p41
        $region42: #{tpu_custom_call.1} parent=39 // pred_check_branch
          %268 = sbr.rel (%p266) target = $region44
        $region43: #{tpu_custom_call.1} parent=39 // pred_region
          %s269 = sand.u32 %s31, 1
          %s270 = scalar_lea.sflag [#allocation5], %s269
          %s271 = sand.u32 %s31, 1
          %s272 = smul.addr %s271, 288
          %s273 = scalar_lea.vmem [#allocation4], %s272
          %s275 = ssub.s32 4608, 4608
          %276 = vsyncadd %s270, %s275
          %s277 = smul.addr %s21, 72
          %s278 = smul.addr %s277, 64
          %s279 = scalar_lea.hbm %s0, %s278
          %s280 = sshll.u32 %s273, 4
          %s281 = int_to_ptr.vmem [resolvable:$true] %s280
          %286 = dma.hbm_to_vmem [thread:$0]  %s279, 4608, %s281, %s270, 64, 64, 4
        $region44: #{tpu_custom_call.1} parent=39 // pred_fallthru
          _
      $region40: #{tpu_custom_call.1} parent=5 // pred_fallthru
        _
      %p287 = scmp.le.s32.totalorder 1, %s21
      %p288 = scmp.lt.s32.totalorder %s21, 3
      %p289 = pnand %p287, %p288
      %p290 = pneg %p289
      // Predicated region
      $region45: #{tpu_custom_call.1} parent=5 // pred_check
        _
      $region46: #{tpu_custom_call.1} parent=5 // pred_check_branch
        %292 = sbr.rel (%p289) target = $region48
      $region47: #{tpu_custom_call.1} parent=5 // pred_region
        %s293 = ssub.s32 %s21, 1
        %s294 = sand.u32 %s34, 1
        %s295 = scalar_lea.sflag [#allocation5], %s294
        %s296 = sand.u32 %s34, 1
        %s297 = smul.addr %s296, 288
        %s298 = scalar_lea.vmem [#allocation4], %s297
        // Predicated region
        $region49: #{tpu_custom_call.1} parent=47 // pred_check
          %p299 = pneg %p47
        $region50: #{tpu_custom_call.1} parent=47 // pred_check_branch
          %301 = sbr.rel (%p299) target = $region52
        $region51: #{tpu_custom_call.1} parent=47 // pred_region
          %302 = dma.done %s295, 4608
        $region52: #{tpu_custom_call.1} parent=47 // pred_fallthru
          _
        // Predicated region
        $region53: #{tpu_custom_call.1} parent=47 // pred_check
          %p303 = pneg %p68
        $region54: #{tpu_custom_call.1} parent=47 // pred_check_branch
          %305 = sbr.rel (%p303) target = $region56
        $region55: #{tpu_custom_call.1} parent=47 // pred_region
          %306 = dma.done [#allocation8], 9216
        $region56: #{tpu_custom_call.1} parent=47 // pred_fallthru
          _
        // Predicated region
        $region57: #{tpu_custom_call.1} parent=47 // pred_check
          %p307 = pneg %p110
        $region58: #{tpu_custom_call.1} parent=47 // pred_check_branch
          %309 = sbr.rel (%p307) target = $region60
        $region59: #{tpu_custom_call.1} parent=47 // pred_region
          %310 = dma.done [#allocation8], 9216
        $region60: #{tpu_custom_call.1} parent=47 // pred_fallthru
          _
        // Predicated region
        $region61: #{tpu_custom_call.1} parent=47 // pred_check
          %p311 = pneg %p152
        $region62: #{tpu_custom_call.1} parent=47 // pred_check_branch
          %313 = sbr.rel (%p311) target = $region64
        $region63: #{tpu_custom_call.1} parent=47 // pred_region
          %314 = dma.done [#allocation11], 1024
        $region64: #{tpu_custom_call.1} parent=47 // pred_fallthru
          _
        %s315 = sand.u32 %s34, 1
        %s316 = scalar_lea.sflag [#allocation5], %s315
        %s317 = sand.u32 %s34, 1
        %s318 = smul.addr %s317, 288
        %s319 = scalar_lea.vmem [#allocation4], %s318
        %p320 = pneg %p47
        %p321 = pneg %p44
        %p322 = pneg %p68
        %p323 = pneg %p65
        %p324 = pneg %p89
        %p325 = pneg %p86
        %p326 = pneg %p110
        %p327 = pneg %p107
        %p328 = pneg %p131
        %p329 = pneg %p128
        %p330 = pneg %p152
        %p331 = pneg %p149
        %p332 = pneg %p173
        %p333 = pneg %p170
        %p334 = pneg %p199
        %p335 = pneg %p196
        %s336 = sand.u32 %s186, 1
        %s337 = scalar_lea.sflag [#allocation6], %s336
        %s338 = sand.u32 %s186, 1
        %s339 = smul.addr %s338, 32
        %s340 = scalar_lea.vmem [#allocation12], %s339
        %s341 = smul.u32 8, %s26
        %v343 = vld [vmem:[%s298] sm:$0xf]
        %v344 = vld [vmem:[%s298 + $0x8] sm:$0xf]
        %v345 = vld [vmem:[%s298 + $0x10] sm:$0xf]
        %v346 = vld [vmem:[%s298 + $0x18] sm:$0xf]
        %v347 = vld [vmem:[%s298 + $0x20] sm:$0xf]
        %v348 = vld [vmem:[%s298 + $0x28] sm:$0xf]
        %v349 = vld [vmem:[%s298 + $0x30] sm:$0xf]
        %v350 = vld [vmem:[%s298 + $0x38] sm:$0xf]
        %v351 = vld [vmem:[#allocation7] sm:$0xf]
        %v352 = vld [vmem:[#allocation7 + $0x4] sm:$0xf]
        %v353 = vld [vmem:[#allocation7 + $0x8] sm:$0xf]
        %v354 = vld [vmem:[#allocation7 + $0xc] sm:$0xf]
        %v355 = vld [vmem:[#allocation7 + $0x10] sm:$0xf]
        %v356 = vld [vmem:[#allocation7 + $0x14] sm:$0xf]
        %v357 = vld [vmem:[#allocation7 + $0x18] sm:$0xf]
        %v358 = vld [vmem:[#allocation7 + $0x1c] sm:$0xf]
        %v359 = vld [vmem:[#allocation7 + $0x20] sm:$0xf]
        %v360 = vld [vmem:[#allocation7 + $0x24] sm:$0xf]
        %v361 = vld [vmem:[#allocation7 + $0x28] sm:$0xf]
        %v362 = vld [vmem:[#allocation7 + $0x2c] sm:$0xf]
        %v363 = vld [vmem:[#allocation7 + $0x30] sm:$0xf]
        %v364 = vld [vmem:[#allocation7 + $0x34] sm:$0xf]
        %v365 = vld [vmem:[#allocation7 + $0x38] sm:$0xf]
        %v366 = vld [vmem:[#allocation7 + $0x3c] sm:$0xf]
        %v375 = vunpack.c.l.b16 %v343
        %v376 = vunpack.c.l.b16 %v344
        %v377 = vunpack.c.l.b16 %v345
        %v378 = vunpack.c.l.b16 %v346
        %v379 = vunpack.c.l.b16 %v347
        %v380 = vunpack.c.l.b16 %v348
        %v381 = vunpack.c.l.b16 %v349
        %v382 = vunpack.c.l.b16 %v350
        %v383 = vpack.c.b16 %v376, %v375
        %v384 = vpack.c.b16 %v378, %v377
        %v385 = vpack.c.b16 %v380, %v379
        %v386 = vpack.c.b16 %v382, %v381
        %v407 = vunpack.c.l.b16 %v351
        %v408 = vunpack.c.l.b16 %v352
        %v409 = vunpack.c.l.b16 %v353
        %v410 = vunpack.c.l.b16 %v354
        %v411 = vunpack.c.l.b16 %v355
        %v412 = vunpack.c.l.b16 %v356
        %v413 = vunpack.c.l.b16 %v357
        %v414 = vunpack.c.l.b16 %v358
        %v415 = vunpack.c.l.b16 %v359
        %v416 = vunpack.c.l.b16 %v360
        %v417 = vunpack.c.l.b16 %v361
        %v418 = vunpack.c.l.b16 %v362
        %v419 = vunpack.c.l.b16 %v363
        %v420 = vunpack.c.l.b16 %v364
        %v421 = vunpack.c.l.b16 %v365
        %v422 = vunpack.c.l.b16 %v366
        %v423 = vpack.c.b16 %v408, %v407
        %v424 = vpack.c.b16 %v410, %v409
        %v425 = vpack.c.b16 %v412, %v411
        %v426 = vpack.c.b16 %v414, %v413
        %v427 = vpack.c.b16 %v416, %v415
        %v428 = vpack.c.b16 %v418, %v417
        %v429 = vpack.c.b16 %v420, %v419
        %v430 = vpack.c.b16 %v422, %v421
        %439 = vmatprep.subr.bf16.mxu0 0
        %440 = vmatpush1.bf16.msra.mxu0 %v423
        %441 = vmatprep.subr.bf16.mxu0 0
        %442 = vmatpush1.bf16.msra.mxu0 %v424
        %443 = vmatprep.subr.bf16.mxu0 0
        %444 = vmatpush1.bf16.msra.mxu0 %v425
        %445 = vmatprep.subr.bf16.mxu0 0
        %446 = vmatpush1.bf16.msra.mxu0 %v426
        %447 = vmatprep.subr.bf16.mxu0 0
        %448 = vmatpush1.bf16.msra.mxu0 %v427
        %449 = vmatprep.subr.bf16.mxu0 0
        %450 = vmatpush1.bf16.msra.mxu0 %v428
        %451 = vmatprep.subr.bf16.mxu0 0
        %452 = vmatpush1.bf16.msra.mxu0 %v429
        %453 = vmatprep.subr.bf16.mxu0 0
        %454 = vmatpush1.bf16.msra.mxu0 %v430
        %455 = vmatprep.subr.bf16.mxu0 0
        %456 = vmatpush1.bf16.msra.mxu0 0
        %457 = vmatprep.subr.bf16.mxu0 0
        %458 = vmatpush1.bf16.msra.mxu0 0
        %459 = vmatprep.subr.bf16.mxu0 0
        %460 = vmatpush1.bf16.msra.mxu0 0
        %461 = vmatprep.subr.bf16.mxu0 0
        %462 = vmatpush1.bf16.msra.mxu0 0
        %463 = vmatprep.subr.bf16.mxu0 0
        %464 = vmatpush1.bf16.msra.mxu0 0
        %465 = vmatprep.subr.bf16.mxu0 0
        %466 = vmatpush1.bf16.msra.mxu0 0
        %467 = vmatprep.subr.bf16.mxu0 0
        %468 = vmatpush1.bf16.msra.mxu0 0
        %469 = vmatprep.subr.bf16.mxu0 0
        %470 = vmatpush1.bf16.msra.mxu0 0
        %471 = vmatprep.mubr.bf16.mxu0 0
        %472 = vmatmul.mubr.bf16.gmra.mrb[0].mxu0 %v383
        %v473 = vpop.f32.mrb[0].mxu0
        %v474 = vadd.f32 0.0, %v473
        %v475 = vpop.f32.mrb[0].mxu0
        %v476 = vpop.f32.mrb[0].mxu0
        %v477 = vadd.f32 0.0, %v476
        %v478 = vpop.f32.mrb[0].mxu0
        %479 = vmatprep.mubr.bf16.mxu0 0
        %480 = vmatmul.mubr.bf16.gmra.mrb[0].mxu0 %v384
        %v481 = vpop.f32.mrb[0].mxu0
        %v482 = vadd.f32 0.0, %v481
        %v483 = vpop.f32.mrb[0].mxu0
        %v484 = vpop.f32.mrb[0].mxu0
        %v485 = vadd.f32 0.0, %v484
        %v486 = vpop.f32.mrb[0].mxu0
        %487 = vmatprep.mubr.bf16.mxu0 0
        %488 = vmatmul.mubr.bf16.gmra.mrb[0].mxu0 %v385
        %v489 = vpop.f32.mrb[0].mxu0
        %v490 = vadd.f32 0.0, %v489
        %v491 = vpop.f32.mrb[0].mxu0
        %v492 = vpop.f32.mrb[0].mxu0
        %v493 = vadd.f32 0.0, %v492
        %v494 = vpop.f32.mrb[0].mxu0
        %495 = vmatprep.mubr.bf16.mxu0 0
        %496 = vmatmul.mubr.bf16.gmra.mrb[0].mxu0 %v386
        %v497 = vpop.f32.mrb[0].mxu0
        %v498 = vadd.f32 0.0, %v497
        %v499 = vpop.f32.mrb[0].mxu0
        %v500 = vpop.f32.mrb[0].mxu0
        %v501 = vadd.f32 0.0, %v500
        %v502 = vpop.f32.mrb[0].mxu0
        %503 = vdwg.mxu0
        %504 = vst [vmem:[#allocation3] sm:$0xff] %v474
        %505 = vst [vmem:[#allocation3 + $0x8] sm:$0xff] %v477
        %506 = vst [vmem:[#allocation3 + $0x10] sm:$0xff] %v482
        %507 = vst [vmem:[#allocation3 + $0x18] sm:$0xff] %v485
        %508 = vst [vmem:[#allocation3 + $0x20] sm:$0xff] %v490
        %509 = vst [vmem:[#allocation3 + $0x28] sm:$0xff] %v493
        %510 = vst [vmem:[#allocation3 + $0x30] sm:$0xff] %v498
        %511 = vst [vmem:[#allocation3 + $0x38] sm:$0xff] %v501
        %s512 = scalar_lea.vmem %s298, 72 [#allocation4]
        %v513 = vld [vmem:[%s512] sm:$0xf]
        %v514 = vld [vmem:[%s512 + $0x8] sm:$0xf]
        %v515 = vld [vmem:[%s512 + $0x10] sm:$0xf]
        %v516 = vld [vmem:[%s512 + $0x18] sm:$0xf]
        %v517 = vld [vmem:[%s512 + $0x20] sm:$0xf]
        %v518 = vld [vmem:[%s512 + $0x28] sm:$0xf]
        %v519 = vld [vmem:[%s512 + $0x30] sm:$0xf]
        %v520 = vld [vmem:[%s512 + $0x38] sm:$0xf]
        %s521 = scalar_lea.vmem [#allocation7], 64
        %v522 = vld [vmem:[%s521] sm:$0xf]
        %v523 = vld [vmem:[%s521 + $0x4] sm:$0xf]
        %v524 = vld [vmem:[%s521 + $0x8] sm:$0xf]
        %v525 = vld [vmem:[%s521 + $0xc] sm:$0xf]
        %v526 = vld [vmem:[%s521 + $0x10] sm:$0xf]
        %v527 = vld [vmem:[%s521 + $0x14] sm:$0xf]
        %v528 = vld [vmem:[%s521 + $0x18] sm:$0xf]
        %v529 = vld [vmem:[%s521 + $0x1c] sm:$0xf]
        %v530 = vld [vmem:[%s521 + $0x20] sm:$0xf]
        %v531 = vld [vmem:[%s521 + $0x24] sm:$0xf]
        %v532 = vld [vmem:[%s521 + $0x28] sm:$0xf]
        %v533 = vld [vmem:[%s521 + $0x2c] sm:$0xf]
        %v534 = vld [vmem:[%s521 + $0x30] sm:$0xf]
        %v535 = vld [vmem:[%s521 + $0x34] sm:$0xf]
        %v536 = vld [vmem:[%s521 + $0x38] sm:$0xf]
        %v537 = vld [vmem:[%s521 + $0x3c] sm:$0xf]
        %v546 = vunpack.c.l.b16 %v513
        %v547 = vunpack.c.l.b16 %v514
        %v548 = vunpack.c.l.b16 %v515
        %v549 = vunpack.c.l.b16 %v516
        %v550 = vunpack.c.l.b16 %v517
        %v551 = vunpack.c.l.b16 %v518
        %v552 = vunpack.c.l.b16 %v519
        %v553 = vunpack.c.l.b16 %v520
        %v554 = vpack.c.b16 %v547, %v546
        %v555 = vpack.c.b16 %v549, %v548
        %v556 = vpack.c.b16 %v551, %v550
        %v557 = vpack.c.b16 %v553, %v552
        %v578 = vunpack.c.l.b16 %v522
        %v579 = vunpack.c.l.b16 %v523
        %v580 = vunpack.c.l.b16 %v524
        %v581 = vunpack.c.l.b16 %v525
        %v582 = vunpack.c.l.b16 %v526
        %v583 = vunpack.c.l.b16 %v527
        %v584 = vunpack.c.l.b16 %v528
        %v585 = vunpack.c.l.b16 %v529
        %v586 = vunpack.c.l.b16 %v530
        %v587 = vunpack.c.l.b16 %v531
        %v588 = vunpack.c.l.b16 %v532
        %v589 = vunpack.c.l.b16 %v533
        %v590 = vunpack.c.l.b16 %v534
        %v591 = vunpack.c.l.b16 %v535
        %v592 = vunpack.c.l.b16 %v536
        %v593 = vunpack.c.l.b16 %v537
        %v594 = vpack.c.b16 %v579, %v578
        %v595 = vpack.c.b16 %v581, %v580
        %v596 = vpack.c.b16 %v583, %v582
        %v597 = vpack.c.b16 %v585, %v584
        %v598 = vpack.c.b16 %v587, %v586
        %v599 = vpack.c.b16 %v589, %v588
        %v600 = vpack.c.b16 %v591, %v590
        %v601 = vpack.c.b16 %v593, %v592
        %610 = vmatprep.subr.bf16.mxu0 0
        %611 = vmatpush1.bf16.msra.mxu0 %v594
        %612 = vmatprep.subr.bf16.mxu0 0
        %613 = vmatpush1.bf16.msra.mxu0 %v595
        %614 = vmatprep.subr.bf16.mxu0 0
        %615 = vmatpush1.bf16.msra.mxu0 %v596
        %616 = vmatprep.subr.bf16.mxu0 0
        %617 = vmatpush1.bf16.msra.mxu0 %v597
        %618 = vmatprep.subr.bf16.mxu0 0
        %619 = vmatpush1.bf16.msra.mxu0 %v598
        %620 = vmatprep.subr.bf16.mxu0 0
        %621 = vmatpush1.bf16.msra.mxu0 %v599
        %622 = vmatprep.subr.bf16.mxu0 0
        %623 = vmatpush1.bf16.msra.mxu0 %v600
        %624 = vmatprep.subr.bf16.mxu0 0
        %625 = vmatpush1.bf16.msra.mxu0 %v601
        %626 = vmatprep.subr.bf16.mxu0 0
        %627 = vmatpush1.bf16.msra.mxu0 0
        %628 = vmatprep.subr.bf16.mxu0 0
        %629 = vmatpush1.bf16.msra.mxu0 0
        %630 = vmatprep.subr.bf16.mxu0 0
        %631 = vmatpush1.bf16.msra.mxu0 0
        %632 = vmatprep.subr.bf16.mxu0 0
        %633 = vmatpush1.bf16.msra.mxu0 0
        %634 = vmatprep.subr.bf16.mxu0 0
        %635 = vmatpush1.bf16.msra.mxu0 0
        %636 = vmatprep.subr.bf16.mxu0 0
        %637 = vmatpush1.bf16.msra.mxu0 0
        %638 = vmatprep.subr.bf16.mxu0 0
        %639 = vmatpush1.bf16.msra.mxu0 0
        %640 = vmatprep.subr.bf16.mxu0 0
        %641 = vmatpush1.bf16.msra.mxu0 0
        %642 = vmatprep.mubr.bf16.mxu0 0
        %643 = vmatmul.mubr.bf16.gmra.mrb[0].mxu0 %v554
        %v644 = vpop.f32.mrb[0].mxu0
        %v645 = vadd.f32 0.0, %v644
        %v646 = vpop.f32.mrb[0].mxu0
        %v647 = vpop.f32.mrb[0].mxu0
        %v648 = vadd.f32 0.0, %v647
        %v649 = vpop.f32.mrb[0].mxu0
        %650 = vmatprep.mubr.bf16.mxu0 0
        %651 = vmatmul.mubr.bf16.gmra.mrb[0].mxu0 %v555
        %v652 = vpop.f32.mrb[0].mxu0
        %v653 = vadd.f32 0.0, %v652
        %v654 = vpop.f32.mrb[0].mxu0
        %v655 = vpop.f32.mrb[0].mxu0
        %v656 = vadd.f32 0.0, %v655
        %v657 = vpop.f32.mrb[0].mxu0
        %658 = vmatprep.mubr.bf16.mxu0 0
        %659 = vmatmul.mubr.bf16.gmra.mrb[0].mxu0 %v556
        %v660 = vpop.f32.mrb[0].mxu0
        %v661 = vadd.f32 0.0, %v660
        %v662 = vpop.f32.mrb[0].mxu0
        %v663 = vpop.f32.mrb[0].mxu0
        %v664 = vadd.f32 0.0, %v663
        %v665 = vpop.f32.mrb[0].mxu0
        %666 = vmatprep.mubr.bf16.mxu0 0
        %667 = vmatmul.mubr.bf16.gmra.mrb[0].mxu0 %v557
        %v668 = vpop.f32.mrb[0].mxu0
        %v669 = vadd.f32 0.0, %v668
        %v670 = vpop.f32.mrb[0].mxu0
        %v671 = vpop.f32.mrb[0].mxu0
        %v672 = vadd.f32 0.0, %v671
        %v673 = vpop.f32.mrb[0].mxu0
        %674 = vdwg.mxu0
        %v675 = vld [vmem:[#allocation3] sm:$0xff]
        %v676 = vld [vmem:[#allocation3 + $0x8] sm:$0xff]
        %v677 = vld [vmem:[#allocation3 + $0x10] sm:$0xff]
        %v678 = vld [vmem:[#allocation3 + $0x18] sm:$0xff]
        %v679 = vld [vmem:[#allocation3 + $0x20] sm:$0xff]
        %v680 = vld [vmem:[#allocation3 + $0x28] sm:$0xff]
        %v681 = vld [vmem:[#allocation3 + $0x30] sm:$0xff]
        %v682 = vld [vmem:[#allocation3 + $0x38] sm:$0xff]
        %v683 = vadd.f32 %v675, %v645
        %v684 = vadd.f32 %v676, %v648
        %v685 = vadd.f32 %v677, %v653
        %v686 = vadd.f32 %v678, %v656
        %v687 = vadd.f32 %v679, %v661
        %v688 = vadd.f32 %v680, %v664
        %v689 = vadd.f32 %v681, %v669
        %v690 = vadd.f32 %v682, %v672
        %691 = vst [vmem:[#allocation3] sm:$0xff] %v683
        %692 = vst [vmem:[#allocation3 + $0x8] sm:$0xff] %v684
        %693 = vst [vmem:[#allocation3 + $0x10] sm:$0xff] %v685
        %694 = vst [vmem:[#allocation3 + $0x18] sm:$0xff] %v686
        %695 = vst [vmem:[#allocation3 + $0x20] sm:$0xff] %v687
        %696 = vst [vmem:[#allocation3 + $0x28] sm:$0xff] %v688
        %697 = vst [vmem:[#allocation3 + $0x30] sm:$0xff] %v689
        %698 = vst [vmem:[#allocation3 + $0x38] sm:$0xff] %v690
        %v699 = vld [vmem:[%s298] sm:$0xf]
        %v700 = vld [vmem:[%s298 + $0x4] sm:$0x1]
        %v701 = vld [vmem:[%s298 + $0x8] sm:$0xf]
        %v702 = vld [vmem:[%s298 + $0xc] sm:$0x1]
        %v703 = vld [vmem:[%s298 + $0x10] sm:$0xf]
        %v704 = vld [vmem:[%s298 + $0x14] sm:$0x1]
        %v705 = vld [vmem:[%s298 + $0x18] sm:$0xf]
        %v706 = vld [vmem:[%s298 + $0x1c] sm:$0x1]
        %v707 = vld [vmem:[%s298 + $0x20] sm:$0xf]
        %v708 = vld [vmem:[%s298 + $0x24] sm:$0x1]
        %v709 = vld [vmem:[%s298 + $0x28] sm:$0xf]
        %v710 = vld [vmem:[%s298 + $0x2c] sm:$0x1]
        %v711 = vld [vmem:[%s298 + $0x30] sm:$0xf]
        %v712 = vld [vmem:[%s298 + $0x34] sm:$0x1]
        %v713 = vld [vmem:[%s298 + $0x38] sm:$0xf]
        %v714 = vld [vmem:[%s298 + $0x3c] sm:$0x1]
        %vm715 = vsmask.f32 3328
        %vm716 = vsmask.f32 7440
        %vm717 = vmor %vm715, %vm716
        %v719 = vshrl.u32 %v699, 16
        %v721 = vrot.slane %v719, 4
        %v722 = vshll.u32 %v699, 16
        %v724 = vrot.slane %v722, 5
        %v725 = vor.u32 %v721, %v724
        %v726 = vrot.slane %v725, 4
        %v728 = vshll.u32 %v700, 16
        %v730 = vrot.slane %v728, 5
        %v731 = vsel %vm717, %v726, %v730
        %v733 = vshrl.u32 %v701, 16
        %v735 = vrot.slane %v733, 4
        %v736 = vshll.u32 %v701, 16
        %v738 = vrot.slane %v736, 5
        %v739 = vor.u32 %v735, %v738
        %v740 = vrot.slane %v739, 4
        %v742 = vshll.u32 %v702, 16
        %v744 = vrot.slane %v742, 5
        %v745 = vsel %vm717, %v740, %v744
        %v747 = vshrl.u32 %v703, 16
        %v749 = vrot.slane %v747, 4
        %v750 = vshll.u32 %v703, 16
        %v752 = vrot.slane %v750, 5
        %v753 = vor.u32 %v749, %v752
        %v754 = vrot.slane %v753, 4
        %v756 = vshll.u32 %v704, 16
        %v758 = vrot.slane %v756, 5
        %v759 = vsel %vm717, %v754, %v758
        %v761 = vshrl.u32 %v705, 16
        %v763 = vrot.slane %v761, 4
        %v764 = vshll.u32 %v705, 16
        %v766 = vrot.slane %v764, 5
        %v767 = vor.u32 %v763, %v766
        %v768 = vrot.slane %v767, 4
        %v770 = vshll.u32 %v706, 16
        %v772 = vrot.slane %v770, 5
        %v773 = vsel %vm717, %v768, %v772
        %v775 = vshrl.u32 %v707, 16
        %v777 = vrot.slane %v775, 4
        %v778 = vshll.u32 %v707, 16
        %v780 = vrot.slane %v778, 5
        %v781 = vor.u32 %v777, %v780
        %v782 = vrot.slane %v781, 4
        %v784 = vshll.u32 %v708, 16
        %v786 = vrot.slane %v784, 5
        %v787 = vsel %vm717, %v782, %v786
        %v789 = vshrl.u32 %v709, 16
        %v791 = vrot.slane %v789, 4
        %v792 = vshll.u32 %v709, 16
        %v794 = vrot.slane %v792, 5
        %v795 = vor.u32 %v791, %v794
        %v796 = vrot.slane %v795, 4
        %v798 = vshll.u32 %v710, 16
        %v800 = vrot.slane %v798, 5
        %v801 = vsel %vm717, %v796, %v800
        %v803 = vshrl.u32 %v711, 16
        %v805 = vrot.slane %v803, 4
        %v806 = vshll.u32 %v711, 16
        %v808 = vrot.slane %v806, 5
        %v809 = vor.u32 %v805, %v808
        %v810 = vrot.slane %v809, 4
        %v812 = vshll.u32 %v712, 16
        %v814 = vrot.slane %v812, 5
        %v815 = vsel %vm717, %v810, %v814
        %v817 = vshrl.u32 %v713, 16
        %v819 = vrot.slane %v817, 4
        %v820 = vshll.u32 %v713, 16
        %v822 = vrot.slane %v820, 5
        %v823 = vor.u32 %v819, %v822
        %v824 = vrot.slane %v823, 4
        %v826 = vshll.u32 %v714, 16
        %v828 = vrot.slane %v826, 5
        %v829 = vsel %vm717, %v824, %v828
        %s830 = scalar_lea.vmem [#allocation7], 128
        %v831 = vld [vmem:[%s830] sm:$0xf]
        %v832 = vld [vmem:[%s830 + $0x4] sm:$0xf]
        %v833 = vld [vmem:[%s830 + $0x8] sm:$0xf]
        %v834 = vld [vmem:[%s830 + $0xc] sm:$0xf]
        %v835 = vld [vmem:[%s830 + $0x10] sm:$0xf]
        %v836 = vld [vmem:[%s830 + $0x14] sm:$0xf]
        %v837 = vld [vmem:[%s830 + $0x18] sm:$0xf]
        %v838 = vld [vmem:[%s830 + $0x1c] sm:$0xf]
        %v839 = vld [vmem:[%s830 + $0x20] sm:$0xf]
        %v840 = vld [vmem:[%s830 + $0x24] sm:$0xf]
        %v841 = vld [vmem:[%s830 + $0x28] sm:$0xf]
        %v842 = vld [vmem:[%s830 + $0x2c] sm:$0xf]
        %v843 = vld [vmem:[%s830 + $0x30] sm:$0xf]
        %v844 = vld [vmem:[%s830 + $0x34] sm:$0xf]
        %v845 = vld [vmem:[%s830 + $0x38] sm:$0xf]
        %v846 = vld [vmem:[%s830 + $0x3c] sm:$0xf]
        %v847 = vunpack.c.l.b16 %v731
        %v848 = vunpack.c.l.b16 %v745
        %v849 = vunpack.c.l.b16 %v759
        %v850 = vunpack.c.l.b16 %v773
        %v851 = vunpack.c.l.b16 %v787
        %v852 = vunpack.c.l.b16 %v801
        %v853 = vunpack.c.l.b16 %v815
        %v854 = vunpack.c.l.b16 %v829
        %v855 = vpack.c.b16 %v848, %v847
        %v856 = vpack.c.b16 %v850, %v849
        %v857 = vpack.c.b16 %v852, %v851
        %v858 = vpack.c.b16 %v854, %v853
        %v879 = vunpack.c.l.b16 %v831
        %v880 = vunpack.c.l.b16 %v832
        %v881 = vunpack.c.l.b16 %v833
        %v882 = vunpack.c.l.b16 %v834
        %v883 = vunpack.c.l.b16 %v835
        %v884 = vunpack.c.l.b16 %v836
        %v885 = vunpack.c.l.b16 %v837
        %v886 = vunpack.c.l.b16 %v838
        %v887 = vunpack.c.l.b16 %v839
        %v888 = vunpack.c.l.b16 %v840
        %v889 = vunpack.c.l.b16 %v841
        %v890 = vunpack.c.l.b16 %v842
        %v891 = vunpack.c.l.b16 %v843
        %v892 = vunpack.c.l.b16 %v844
        %v893 = vunpack.c.l.b16 %v845
        %v894 = vunpack.c.l.b16 %v846
        %v895 = vpack.c.b16 %v880, %v879
        %v896 = vpack.c.b16 %v882, %v881
        %v897 = vpack.c.b16 %v884, %v883
        %v898 = vpack.c.b16 %v886, %v885
        %v899 = vpack.c.b16 %v888, %v887
        %v900 = vpack.c.b16 %v890, %v889
        %v901 = vpack.c.b16 %v892, %v891
        %v902 = vpack.c.b16 %v894, %v893
        %911 = vmatprep.subr.bf16.mxu0 0
        %912 = vmatpush1.bf16.msra.mxu0 %v895
        %913 = vmatprep.subr.bf16.mxu0 0
        %914 = vmatpush1.bf16.msra.mxu0 %v896
        %915 = vmatprep.subr.bf16.mxu0 0
        %916 = vmatpush1.bf16.msra.mxu0 %v897
        %917 = vmatprep.subr.bf16.mxu0 0
        %918 = vmatpush1.bf16.msra.mxu0 %v898
        %919 = vmatprep.subr.bf16.mxu0 0
        %920 = vmatpush1.bf16.msra.mxu0 %v899
        %921 = vmatprep.subr.bf16.mxu0 0
        %922 = vmatpush1.bf16.msra.mxu0 %v900
        %923 = vmatprep.subr.bf16.mxu0 0
        %924 = vmatpush1.bf16.msra.mxu0 %v901
        %925 = vmatprep.subr.bf16.mxu0 0
        %926 = vmatpush1.bf16.msra.mxu0 %v902
        %927 = vmatprep.subr.bf16.mxu0 0
        %928 = vmatpush1.bf16.msra.mxu0 0
        %929 = vmatprep.subr.bf16.mxu0 0
        %930 = vmatpush1.bf16.msra.mxu0 0
        %931 = vmatprep.subr.bf16.mxu0 0
        %932 = vmatpush1.bf16.msra.mxu0 0
        %933 = vmatprep.subr.bf16.mxu0 0
        %934 = vmatpush1.bf16.msra.mxu0 0
        %935 = vmatprep.subr.bf16.mxu0 0
        %936 = vmatpush1.bf16.msra.mxu0 0
        %937 = vmatprep.subr.bf16.mxu0 0
        %938 = vmatpush1.bf16.msra.mxu0 0
        %939 = vmatprep.subr.bf16.mxu0 0
        %940 = vmatpush1.bf16.msra.mxu0 0
        %941 = vmatprep.subr.bf16.mxu0 0
        %942 = vmatpush1.bf16.msra.mxu0 0
        %943 = vmatprep.mubr.bf16.mxu0 0
        %944 = vmatmul.mubr.bf16.gmra.mrb[0].mxu0 %v855
        %v945 = vpop.f32.mrb[0].mxu0
        %v946 = vadd.f32 0.0, %v945
        %v947 = vpop.f32.mrb[0].mxu0
        %v948 = vpop.f32.mrb[0].mxu0
        %v949 = vadd.f32 0.0, %v948
        %v950 = vpop.f32.mrb[0].mxu0
        %951 = vmatprep.mubr.bf16.mxu0 0
        %952 = vmatmul.mubr.bf16.gmra.mrb[0].mxu0 %v856
        %v953 = vpop.f32.mrb[0].mxu0
        %v954 = vadd.f32 0.0, %v953
        %v955 = vpop.f32.mrb[0].mxu0
        %v956 = vpop.f32.mrb[0].mxu0
        %v957 = vadd.f32 0.0, %v956
        %v958 = vpop.f32.mrb[0].mxu0
        %959 = vmatprep.mubr.bf16.mxu0 0
        %960 = vmatmul.mubr.bf16.gmra.mrb[0].mxu0 %v857
        %v961 = vpop.f32.mrb[0].mxu0
        %v962 = vadd.f32 0.0, %v961
        %v963 = vpop.f32.mrb[0].mxu0
        %v964 = vpop.f32.mrb[0].mxu0
        %v965 = vadd.f32 0.0, %v964
        %v966 = vpop.f32.mrb[0].mxu0
        %967 = vmatprep.mubr.bf16.mxu0 0
        %968 = vmatmul.mubr.bf16.gmra.mrb[0].mxu0 %v858
        %v969 = vpop.f32.mrb[0].mxu0
        %v970 = vadd.f32 0.0, %v969
        %v971 = vpop.f32.mrb[0].mxu0
        %v972 = vpop.f32.mrb[0].mxu0
        %v973 = vadd.f32 0.0, %v972
        %v974 = vpop.f32.mrb[0].mxu0
        %975 = vdwg.mxu0
        %v976 = vld [vmem:[#allocation3] sm:$0xff]
        %v977 = vld [vmem:[#allocation3 + $0x8] sm:$0xff]
        %v978 = vld [vmem:[#allocation3 + $0x10] sm:$0xff]
        %v979 = vld [vmem:[#allocation3 + $0x18] sm:$0xff]
        %v980 = vld [vmem:[#allocation3 + $0x20] sm:$0xff]
        %v981 = vld [vmem:[#allocation3 + $0x28] sm:$0xff]
        %v982 = vld [vmem:[#allocation3 + $0x30] sm:$0xff]
        %v983 = vld [vmem:[#allocation3 + $0x38] sm:$0xff]
        %v984 = vadd.f32 %v976, %v946
        %v985 = vadd.f32 %v977, %v949
        %v986 = vadd.f32 %v978, %v954
        %v987 = vadd.f32 %v979, %v957
        %v988 = vadd.f32 %v980, %v962
        %v989 = vadd.f32 %v981, %v965
        %v990 = vadd.f32 %v982, %v970
        %v991 = vadd.f32 %v983, %v973
        %992 = vst [vmem:[#allocation3] sm:$0xff] %v984
        %993 = vst [vmem:[#allocation3 + $0x8] sm:$0xff] %v985
        %994 = vst [vmem:[#allocation3 + $0x10] sm:$0xff] %v986
        %995 = vst [vmem:[#allocation3 + $0x18] sm:$0xff] %v987
        %996 = vst [vmem:[#allocation3 + $0x20] sm:$0xff] %v988
        %997 = vst [vmem:[#allocation3 + $0x28] sm:$0xff] %v989
        %998 = vst [vmem:[#allocation3 + $0x30] sm:$0xff] %v990
        %999 = vst [vmem:[#allocation3 + $0x38] sm:$0xff] %v991
        %s1000 = scalar_lea.vmem %s298, 144 [#allocation4]
        %v1001 = vld [vmem:[%s1000] sm:$0xf]
        %v1002 = vld [vmem:[%s1000 + $0x8] sm:$0xf]
        %v1003 = vld [vmem:[%s1000 + $0x10] sm:$0xf]
        %v1004 = vld [vmem:[%s1000 + $0x18] sm:$0xf]
        %v1005 = vld [vmem:[%s1000 + $0x20] sm:$0xf]
        %v1006 = vld [vmem:[%s1000 + $0x28] sm:$0xf]
        %v1007 = vld [vmem:[%s1000 + $0x30] sm:$0xf]
        %v1008 = vld [vmem:[%s1000 + $0x38] sm:$0xf]
        %s1009 = scalar_lea.vmem [#allocation7], 192
        %v1010 = vld [vmem:[%s1009] sm:$0xf]
        %v1011 = vld [vmem:[%s1009 + $0x4] sm:$0xf]
        %v1012 = vld [vmem:[%s1009 + $0x8] sm:$0xf]
        %v1013 = vld [vmem:[%s1009 + $0xc] sm:$0xf]
        %v1014 = vld [vmem:[%s1009 + $0x10] sm:$0xf]
        %v1015 = vld [vmem:[%s1009 + $0x14] sm:$0xf]
        %v1016 = vld [vmem:[%s1009 + $0x18] sm:$0xf]
        %v1017 = vld [vmem:[%s1009 + $0x1c] sm:$0xf]
        %v1018 = vld [vmem:[%s1009 + $0x20] sm:$0xf]
        %v1019 = vld [vmem:[%s1009 + $0x24] sm:$0xf]
        %v1020 = vld [vmem:[%s1009 + $0x28] sm:$0xf]
        %v1021 = vld [vmem:[%s1009 + $0x2c] sm:$0xf]
        %v1022 = vld [vmem:[%s1009 + $0x30] sm:$0xf]
        %v1023 = vld [vmem:[%s1009 + $0x34] sm:$0xf]
        %v1024 = vld [vmem:[%s1009 + $0x38] sm:$0xf]
        %v1025 = vld [vmem:[%s1009 + $0x3c] sm:$0xf]
        %v1034 = vunpack.c.l.b16 %v1001
        %v1035 = vunpack.c.l.b16 %v1002
        %v1036 = vunpack.c.l.b16 %v1003
        %v1037 = vunpack.c.l.b16 %v1004
        %v1038 = vunpack.c.l.b16 %v1005
        %v1039 = vunpack.c.l.b16 %v1006
        %v1040 = vunpack.c.l.b16 %v1007
        %v1041 = vunpack.c.l.b16 %v1008
        %v1042 = vpack.c.b16 %v1035, %v1034
        %v1043 = vpack.c.b16 %v1037, %v1036
        %v1044 = vpack.c.b16 %v1039, %v1038
        %v1045 = vpack.c.b16 %v1041, %v1040
        %v1066 = vunpack.c.l.b16 %v1010
        %v1067 = vunpack.c.l.b16 %v1011
        %v1068 = vunpack.c.l.b16 %v1012
        %v1069 = vunpack.c.l.b16 %v1013
        %v1070 = vunpack.c.l.b16 %v1014
        %v1071 = vunpack.c.l.b16 %v1015
        %v1072 = vunpack.c.l.b16 %v1016
        %v1073 = vunpack.c.l.b16 %v1017
        %v1074 = vunpack.c.l.b16 %v1018
        %v1075 = vunpack.c.l.b16 %v1019
        %v1076 = vunpack.c.l.b16 %v1020
        %v1077 = vunpack.c.l.b16 %v1021
        %v1078 = vunpack.c.l.b16 %v1022
        %v1079 = vunpack.c.l.b16 %v1023
        %v1080 = vunpack.c.l.b16 %v1024
        %v1081 = vunpack.c.l.b16 %v1025
        %v1082 = vpack.c.b16 %v1067, %v1066
        %v1083 = vpack.c.b16 %v1069, %v1068
        %v1084 = vpack.c.b16 %v1071, %v1070
        %v1085 = vpack.c.b16 %v1073, %v1072
        %v1086 = vpack.c.b16 %v1075, %v1074
        %v1087 = vpack.c.b16 %v1077, %v1076
        %v1088 = vpack.c.b16 %v1079, %v1078
        %v1089 = vpack.c.b16 %v1081, %v1080
        %1098 = vmatprep.subr.bf16.mxu0 0
        %1099 = vmatpush1.bf16.msra.mxu0 %v1082
        %1100 = vmatprep.subr.bf16.mxu0 0
        %1101 = vmatpush1.bf16.msra.mxu0 %v1083
        %1102 = vmatprep.subr.bf16.mxu0 0
        %1103 = vmatpush1.bf16.msra.mxu0 %v1084
        %1104 = vmatprep.subr.bf16.mxu0 0
        %1105 = vmatpush1.bf16.msra.mxu0 %v1085
        %1106 = vmatprep.subr.bf16.mxu0 0
        %1107 = vmatpush1.bf16.msra.mxu0 %v1086
        %1108 = vmatprep.subr.bf16.mxu0 0
        %1109 = vmatpush1.bf16.msra.mxu0 %v1087
        %1110 = vmatprep.subr.bf16.mxu0 0
        %1111 = vmatpush1.bf16.msra.mxu0 %v1088
        %1112 = vmatprep.subr.bf16.mxu0 0
        %1113 = vmatpush1.bf16.msra.mxu0 %v1089
        %1114 = vmatprep.subr.bf16.mxu0 0
        %1115 = vmatpush1.bf16.msra.mxu0 0
        %1116 = vmatprep.subr.bf16.mxu0 0
        %1117 = vmatpush1.bf16.msra.mxu0 0
        %1118 = vmatprep.subr.bf16.mxu0 0
        %1119 = vmatpush1.bf16.msra.mxu0 0
        %1120 = vmatprep.subr.bf16.mxu0 0
        %1121 = vmatpush1.bf16.msra.mxu0 0
        %1122 = vmatprep.subr.bf16.mxu0 0
        %1123 = vmatpush1.bf16.msra.mxu0 0
        %1124 = vmatprep.subr.bf16.mxu0 0
        %1125 = vmatpush1.bf16.msra.mxu0 0
        %1126 = vmatprep.subr.bf16.mxu0 0
        %1127 = vmatpush1.bf16.msra.mxu0 0
        %1128 = vmatprep.subr.bf16.mxu0 0
        %1129 = vmatpush1.bf16.msra.mxu0 0
        %1130 = vmatprep.mubr.bf16.mxu0 0
        %1131 = vmatmul.mubr.bf16.gmra.mrb[0].mxu0 %v1042
        %v1132 = vpop.f32.mrb[0].mxu0
        %v1133 = vadd.f32 0.0, %v1132
        %v1134 = vpop.f32.mrb[0].mxu0
        %v1135 = vpop.f32.mrb[0].mxu0
        %v1136 = vadd.f32 0.0, %v1135
        %v1137 = vpop.f32.mrb[0].mxu0
        %1138 = vmatprep.mubr.bf16.mxu0 0
        %1139 = vmatmul.mubr.bf16.gmra.mrb[0].mxu0 %v1043
        %v1140 = vpop.f32.mrb[0].mxu0
        %v1141 = vadd.f32 0.0, %v1140
        %v1142 = vpop.f32.mrb[0].mxu0
        %v1143 = vpop.f32.mrb[0].mxu0
        %v1144 = vadd.f32 0.0, %v1143
        %v1145 = vpop.f32.mrb[0].mxu0
        %1146 = vmatprep.mubr.bf16.mxu0 0
        %1147 = vmatmul.mubr.bf16.gmra.mrb[0].mxu0 %v1044
        %v1148 = vpop.f32.mrb[0].mxu0
        %v1149 = vadd.f32 0.0, %v1148
        %v1150 = vpop.f32.mrb[0].mxu0
        %v1151 = vpop.f32.mrb[0].mxu0
        %v1152 = vadd.f32 0.0, %v1151
        %v1153 = vpop.f32.mrb[0].mxu0
        %1154 = vmatprep.mubr.bf16.mxu0 0
        %1155 = vmatmul.mubr.bf16.gmra.mrb[0].mxu0 %v1045
        %v1156 = vpop.f32.mrb[0].mxu0
        %v1157 = vadd.f32 0.0, %v1156
        %v1158 = vpop.f32.mrb[0].mxu0
        %v1159 = vpop.f32.mrb[0].mxu0
        %v1160 = vadd.f32 0.0, %v1159
        %v1161 = vpop.f32.mrb[0].mxu0
        %1162 = vdwg.mxu0
        %v1163 = vld [vmem:[#allocation3] sm:$0xff]
        %v1164 = vld [vmem:[#allocation3 + $0x8] sm:$0xff]
        %v1165 = vld [vmem:[#allocation3 + $0x10] sm:$0xff]
        %v1166 = vld [vmem:[#allocation3 + $0x18] sm:$0xff]
        %v1167 = vld [vmem:[#allocation3 + $0x20] sm:$0xff]
        %v1168 = vld [vmem:[#allocation3 + $0x28] sm:$0xff]
        %v1169 = vld [vmem:[#allocation3 + $0x30] sm:$0xff]
        %v1170 = vld [vmem:[#allocation3 + $0x38] sm:$0xff]
        %v1171 = vadd.f32 %v1163, %v1133
        %v1172 = vadd.f32 %v1164, %v1136
        %v1173 = vadd.f32 %v1165, %v1141
        %v1174 = vadd.f32 %v1166, %v1144
        %v1175 = vadd.f32 %v1167, %v1149
        %v1176 = vadd.f32 %v1168, %v1152
        %v1177 = vadd.f32 %v1169, %v1157
        %v1178 = vadd.f32 %v1170, %v1160
        %1179 = vst [vmem:[#allocation3] sm:$0xff] %v1171
        %1180 = vst [vmem:[#allocation3 + $0x8] sm:$0xff] %v1172
        %1181 = vst [vmem:[#allocation3 + $0x10] sm:$0xff] %v1173
        %1182 = vst [vmem:[#allocation3 + $0x18] sm:$0xff] %v1174
        %1183 = vst [vmem:[#allocation3 + $0x20] sm:$0xff] %v1175
        %1184 = vst [vmem:[#allocation3 + $0x28] sm:$0xff] %v1176
        %1185 = vst [vmem:[#allocation3 + $0x30] sm:$0xff] %v1177
        %1186 = vst [vmem:[#allocation3 + $0x38] sm:$0xff] %v1178
        %s1187 = scalar_lea.vmem %s298, 216 [#allocation4]
        %v1188 = vld [vmem:[%s1187] sm:$0xf]
        %v1189 = vld [vmem:[%s1187 + $0x8] sm:$0xf]
        %v1190 = vld [vmem:[%s1187 + $0x10] sm:$0xf]
        %v1191 = vld [vmem:[%s1187 + $0x18] sm:$0xf]
        %v1192 = vld [vmem:[%s1187 + $0x20] sm:$0xf]
        %v1193 = vld [vmem:[%s1187 + $0x28] sm:$0xf]
        %v1194 = vld [vmem:[%s1187 + $0x30] sm:$0xf]
        %v1195 = vld [vmem:[%s1187 + $0x38] sm:$0xf]
        %s1196 = scalar_lea.vmem [#allocation7], 256
        %v1197 = vld [vmem:[%s1196] sm:$0xf]
        %v1198 = vld [vmem:[%s1196 + $0x4] sm:$0xf]
        %v1199 = vld [vmem:[%s1196 + $0x8] sm:$0xf]
        %v1200 = vld [vmem:[%s1196 + $0xc] sm:$0xf]
        %v1201 = vld [vmem:[%s1196 + $0x10] sm:$0xf]
        %v1202 = vld [vmem:[%s1196 + $0x14] sm:$0xf]
        %v1203 = vld [vmem:[%s1196 + $0x18] sm:$0xf]
        %v1204 = vld [vmem:[%s1196 + $0x1c] sm:$0xf]
        %v1205 = vld [vmem:[%s1196 + $0x20] sm:$0xf]
        %v1206 = vld [vmem:[%s1196 + $0x24] sm:$0xf]
        %v1207 = vld [vmem:[%s1196 + $0x28] sm:$0xf]
        %v1208 = vld [vmem:[%s1196 + $0x2c] sm:$0xf]
        %v1209 = vld [vmem:[%s1196 + $0x30] sm:$0xf]
        %v1210 = vld [vmem:[%s1196 + $0x34] sm:$0xf]
        %v1211 = vld [vmem:[%s1196 + $0x38] sm:$0xf]
        %v1212 = vld [vmem:[%s1196 + $0x3c] sm:$0xf]
        %v1221 = vunpack.c.l.b16 %v1188
        %v1222 = vunpack.c.l.b16 %v1189
        %v1223 = vunpack.c.l.b16 %v1190
        %v1224 = vunpack.c.l.b16 %v1191
        %v1225 = vunpack.c.l.b16 %v1192
        %v1226 = vunpack.c.l.b16 %v1193
        %v1227 = vunpack.c.l.b16 %v1194
        %v1228 = vunpack.c.l.b16 %v1195
        %v1229 = vpack.c.b16 %v1222, %v1221
        %v1230 = vpack.c.b16 %v1224, %v1223
        %v1231 = vpack.c.b16 %v1226, %v1225
        %v1232 = vpack.c.b16 %v1228, %v1227
        %v1253 = vunpack.c.l.b16 %v1197
        %v1254 = vunpack.c.l.b16 %v1198
        %v1255 = vunpack.c.l.b16 %v1199
        %v1256 = vunpack.c.l.b16 %v1200
        %v1257 = vunpack.c.l.b16 %v1201
        %v1258 = vunpack.c.l.b16 %v1202
        %v1259 = vunpack.c.l.b16 %v1203
        %v1260 = vunpack.c.l.b16 %v1204
        %v1261 = vunpack.c.l.b16 %v1205
        %v1262 = vunpack.c.l.b16 %v1206
        %v1263 = vunpack.c.l.b16 %v1207
        %v1264 = vunpack.c.l.b16 %v1208
        %v1265 = vunpack.c.l.b16 %v1209
        %v1266 = vunpack.c.l.b16 %v1210
        %v1267 = vunpack.c.l.b16 %v1211
        %v1268 = vunpack.c.l.b16 %v1212
        %v1269 = vpack.c.b16 %v1254, %v1253
        %v1270 = vpack.c.b16 %v1256, %v1255
        %v1271 = vpack.c.b16 %v1258, %v1257
        %v1272 = vpack.c.b16 %v1260, %v1259
        %v1273 = vpack.c.b16 %v1262, %v1261
        %v1274 = vpack.c.b16 %v1264, %v1263
        %v1275 = vpack.c.b16 %v1266, %v1265
        %v1276 = vpack.c.b16 %v1268, %v1267
        %1285 = vmatprep.subr.bf16.mxu0 0
        %1286 = vmatpush1.bf16.msra.mxu0 %v1269
        %1287 = vmatprep.subr.bf16.mxu0 0
        %1288 = vmatpush1.bf16.msra.mxu0 %v1270
        %1289 = vmatprep.subr.bf16.mxu0 0
        %1290 = vmatpush1.bf16.msra.mxu0 %v1271
        %1291 = vmatprep.subr.bf16.mxu0 0
        %1292 = vmatpush1.bf16.msra.mxu0 %v1272
        %1293 = vmatprep.subr.bf16.mxu0 0
        %1294 = vmatpush1.bf16.msra.mxu0 %v1273
        %1295 = vmatprep.subr.bf16.mxu0 0
        %1296 = vmatpush1.bf16.msra.mxu0 %v1274
        %1297 = vmatprep.subr.bf16.mxu0 0
        %1298 = vmatpush1.bf16.msra.mxu0 %v1275
        %1299 = vmatprep.subr.bf16.mxu0 0
        %1300 = vmatpush1.bf16.msra.mxu0 %v1276
        %1301 = vmatprep.subr.bf16.mxu0 0
        %1302 = vmatpush1.bf16.msra.mxu0 0
        %1303 = vmatprep.subr.bf16.mxu0 0
        %1304 = vmatpush1.bf16.msra.mxu0 0
        %1305 = vmatprep.subr.bf16.mxu0 0
        %1306 = vmatpush1.bf16.msra.mxu0 0
        %1307 = vmatprep.subr.bf16.mxu0 0
        %1308 = vmatpush1.bf16.msra.mxu0 0
        %1309 = vmatprep.subr.bf16.mxu0 0
        %1310 = vmatpush1.bf16.msra.mxu0 0
        %1311 = vmatprep.subr.bf16.mxu0 0
        %1312 = vmatpush1.bf16.msra.mxu0 0
        %1313 = vmatprep.subr.bf16.mxu0 0
        %1314 = vmatpush1.bf16.msra.mxu0 0
        %1315 = vmatprep.subr.bf16.mxu0 0
        %1316 = vmatpush1.bf16.msra.mxu0 0
        %1317 = vmatprep.mubr.bf16.mxu0 0
        %1318 = vmatmul.mubr.bf16.gmra.mrb[0].mxu0 %v1229
        %v1319 = vpop.f32.mrb[0].mxu0
        %v1320 = vadd.f32 0.0, %v1319
        %v1321 = vpop.f32.mrb[0].mxu0
        %v1322 = vpop.f32.mrb[0].mxu0
        %v1323 = vadd.f32 0.0, %v1322
        %v1324 = vpop.f32.mrb[0].mxu0
        %1325 = vmatprep.mubr.bf16.mxu0 0
        %1326 = vmatmul.mubr.bf16.gmra.mrb[0].mxu0 %v1230
        %v1327 = vpop.f32.mrb[0].mxu0
        %v1328 = vadd.f32 0.0, %v1327
        %v1329 = vpop.f32.mrb[0].mxu0
        %v1330 = vpop.f32.mrb[0].mxu0
        %v1331 = vadd.f32 0.0, %v1330
        %v1332 = vpop.f32.mrb[0].mxu0
        %1333 = vmatprep.mubr.bf16.mxu0 0
        %1334 = vmatmul.mubr.bf16.gmra.mrb[0].mxu0 %v1231
        %v1335 = vpop.f32.mrb[0].mxu0
        %v1336 = vadd.f32 0.0, %v1335
        %v1337 = vpop.f32.mrb[0].mxu0
        %v1338 = vpop.f32.mrb[0].mxu0
        %v1339 = vadd.f32 0.0, %v1338
        %v1340 = vpop.f32.mrb[0].mxu0
        %1341 = vmatprep.mubr.bf16.mxu0 0
        %1342 = vmatmul.mubr.bf16.gmra.mrb[0].mxu0 %v1232
        %v1343 = vpop.f32.mrb[0].mxu0
        %v1344 = vadd.f32 0.0, %v1343
        %v1345 = vpop.f32.mrb[0].mxu0
        %v1346 = vpop.f32.mrb[0].mxu0
        %v1347 = vadd.f32 0.0, %v1346
        %v1348 = vpop.f32.mrb[0].mxu0
        %1349 = vdwg.mxu0
        %v1350 = vld [vmem:[#allocation3] sm:$0xff]
        %v1351 = vld [vmem:[#allocation3 + $0x8] sm:$0xff]
        %v1352 = vld [vmem:[#allocation3 + $0x10] sm:$0xff]
        %v1353 = vld [vmem:[#allocation3 + $0x18] sm:$0xff]
        %v1354 = vld [vmem:[#allocation3 + $0x20] sm:$0xff]
        %v1355 = vld [vmem:[#allocation3 + $0x28] sm:$0xff]
        %v1356 = vld [vmem:[#allocation3 + $0x30] sm:$0xff]
        %v1357 = vld [vmem:[#allocation3 + $0x38] sm:$0xff]
        %v1358 = vadd.f32 %v1350, %v1320
        %v1359 = vadd.f32 %v1351, %v1323
        %v1360 = vadd.f32 %v1352, %v1328
        %v1361 = vadd.f32 %v1353, %v1331
        %v1362 = vadd.f32 %v1354, %v1336
        %v1363 = vadd.f32 %v1355, %v1339
        %v1364 = vadd.f32 %v1356, %v1344
        %v1365 = vadd.f32 %v1357, %v1347
        %1366 = vst [vmem:[#allocation3] sm:$0xff] %v1358
        %1367 = vst [vmem:[#allocation3 + $0x8] sm:$0xff] %v1359
        %1368 = vst [vmem:[#allocation3 + $0x10] sm:$0xff] %v1360
        %1369 = vst [vmem:[#allocation3 + $0x18] sm:$0xff] %v1361
        %1370 = vst [vmem:[#allocation3 + $0x20] sm:$0xff] %v1362
        %1371 = vst [vmem:[#allocation3 + $0x28] sm:$0xff] %v1363
        %1372 = vst [vmem:[#allocation3 + $0x30] sm:$0xff] %v1364
        %1373 = vst [vmem:[#allocation3 + $0x38] sm:$0xff] %v1365
        %v1374 = vld [vmem:[%s1000] sm:$0xf]
        %v1375 = vld [vmem:[%s1000 + $0x4] sm:$0x1]
        %v1376 = vld [vmem:[%s1000 + $0x8] sm:$0xf]
        %v1377 = vld [vmem:[%s1000 + $0xc] sm:$0x1]
        %v1378 = vld [vmem:[%s1000 + $0x10] sm:$0xf]
        %v1379 = vld [vmem:[%s1000 + $0x14] sm:$0x1]
        %v1380 = vld [vmem:[%s1000 + $0x18] sm:$0xf]
        %v1381 = vld [vmem:[%s1000 + $0x1c] sm:$0x1]
        %v1382 = vld [vmem:[%s1000 + $0x20] sm:$0xf]
        %v1383 = vld [vmem:[%s1000 + $0x24] sm:$0x1]
        %v1384 = vld [vmem:[%s1000 + $0x28] sm:$0xf]
        %v1385 = vld [vmem:[%s1000 + $0x2c] sm:$0x1]
        %v1386 = vld [vmem:[%s1000 + $0x30] sm:$0xf]
        %v1387 = vld [vmem:[%s1000 + $0x34] sm:$0x1]
        %v1388 = vld [vmem:[%s1000 + $0x38] sm:$0xf]
        %v1389 = vld [vmem:[%s1000 + $0x3c] sm:$0x1]
        %v1391 = vshrl.u32 %v1374, 16
        %v1393 = vrot.slane %v1391, 4
        %v1394 = vshll.u32 %v1374, 16
        %v1396 = vrot.slane %v1394, 5
        %v1397 = vor.u32 %v1393, %v1396
        %v1398 = vrot.slane %v1397, 4
        %v1400 = vshll.u32 %v1375, 16
        %v1402 = vrot.slane %v1400, 5
        %v1403 = vsel %vm717, %v1398, %v1402
        %v1405 = vshrl.u32 %v1376, 16
        %v1407 = vrot.slane %v1405, 4
        %v1408 = vshll.u32 %v1376, 16
        %v1410 = vrot.slane %v1408, 5
        %v1411 = vor.u32 %v1407, %v1410
        %v1412 = vrot.slane %v1411, 4
        %v1414 = vshll.u32 %v1377, 16
        %v1416 = vrot.slane %v1414, 5
        %v1417 = vsel %vm717, %v1412, %v1416
        %v1419 = vshrl.u32 %v1378, 16
        %v1421 = vrot.slane %v1419, 4
        %v1422 = vshll.u32 %v1378, 16
        %v1424 = vrot.slane %v1422, 5
        %v1425 = vor.u32 %v1421, %v1424
        %v1426 = vrot.slane %v1425, 4
        %v1428 = vshll.u32 %v1379, 16
        %v1430 = vrot.slane %v1428, 5
        %v1431 = vsel %vm717, %v1426, %v1430
        %v1433 = vshrl.u32 %v1380, 16
        %v1435 = vrot.slane %v1433, 4
        %v1436 = vshll.u32 %v1380, 16
        %v1438 = vrot.slane %v1436, 5
        %v1439 = vor.u32 %v1435, %v1438
        %v1440 = vrot.slane %v1439, 4
        %v1442 = vshll.u32 %v1381, 16
        %v1444 = vrot.slane %v1442, 5
        %v1445 = vsel %vm717, %v1440, %v1444
        %v1447 = vshrl.u32 %v1382, 16
        %v1449 = vrot.slane %v1447, 4
        %v1450 = vshll.u32 %v1382, 16
        %v1452 = vrot.slane %v1450, 5
        %v1453 = vor.u32 %v1449, %v1452
        %v1454 = vrot.slane %v1453, 4
        %v1456 = vshll.u32 %v1383, 16
        %v1458 = vrot.slane %v1456, 5
        %v1459 = vsel %vm717, %v1454, %v1458
        %v1461 = vshrl.u32 %v1384, 16
        %v1463 = vrot.slane %v1461, 4
        %v1464 = vshll.u32 %v1384, 16
        %v1466 = vrot.slane %v1464, 5
        %v1467 = vor.u32 %v1463, %v1466
        %v1468 = vrot.slane %v1467, 4
        %v1470 = vshll.u32 %v1385, 16
        %v1472 = vrot.slane %v1470, 5
        %v1473 = vsel %vm717, %v1468, %v1472
        %v1475 = vshrl.u32 %v1386, 16
        %v1477 = vrot.slane %v1475, 4
        %v1478 = vshll.u32 %v1386, 16
        %v1480 = vrot.slane %v1478, 5
        %v1481 = vor.u32 %v1477, %v1480
        %v1482 = vrot.slane %v1481, 4
        %v1484 = vshll.u32 %v1387, 16
        %v1486 = vrot.slane %v1484, 5
        %v1487 = vsel %vm717, %v1482, %v1486
        %v1489 = vshrl.u32 %v1388, 16
        %v1491 = vrot.slane %v1489, 4
        %v1492 = vshll.u32 %v1388, 16
        %v1494 = vrot.slane %v1492, 5
        %v1495 = vor.u32 %v1491, %v1494
        %v1496 = vrot.slane %v1495, 4
        %v1498 = vshll.u32 %v1389, 16
        %v1500 = vrot.slane %v1498, 5
        %v1501 = vsel %vm717, %v1496, %v1500
        %s1502 = scalar_lea.vmem [#allocation7], 320
        %v1503 = vld [vmem:[%s1502] sm:$0xf]
        %v1504 = vld [vmem:[%s1502 + $0x4] sm:$0xf]
        %v1505 = vld [vmem:[%s1502 + $0x8] sm:$0xf]
        %v1506 = vld [vmem:[%s1502 + $0xc] sm:$0xf]
        %v1507 = vld [vmem:[%s1502 + $0x10] sm:$0xf]
        %v1508 = vld [vmem:[%s1502 + $0x14] sm:$0xf]
        %v1509 = vld [vmem:[%s1502 + $0x18] sm:$0xf]
        %v1510 = vld [vmem:[%s1502 + $0x1c] sm:$0xf]
        %v1511 = vld [vmem:[%s1502 + $0x20] sm:$0xf]
        %v1512 = vld [vmem:[%s1502 + $0x24] sm:$0xf]
        %v1513 = vld [vmem:[%s1502 + $0x28] sm:$0xf]
        %v1514 = vld [vmem:[%s1502 + $0x2c] sm:$0xf]
        %v1515 = vld [vmem:[%s1502 + $0x30] sm:$0xf]
        %v1516 = vld [vmem:[%s1502 + $0x34] sm:$0xf]
        %v1517 = vld [vmem:[%s1502 + $0x38] sm:$0xf]
        %v1518 = vld [vmem:[%s1502 + $0x3c] sm:$0xf]
        %v1519 = vunpack.c.l.b16 %v1403
        %v1520 = vunpack.c.l.b16 %v1417
        %v1521 = vunpack.c.l.b16 %v1431
        %v1522 = vunpack.c.l.b16 %v1445
        %v1523 = vunpack.c.l.b16 %v1459
        %v1524 = vunpack.c.l.b16 %v1473
        %v1525 = vunpack.c.l.b16 %v1487
        %v1526 = vunpack.c.l.b16 %v1501
        %v1527 = vpack.c.b16 %v1520, %v1519
        %v1528 = vpack.c.b16 %v1522, %v1521
        %v1529 = vpack.c.b16 %v1524, %v1523
        %v1530 = vpack.c.b16 %v1526, %v1525
        %v1551 = vunpack.c.l.b16 %v1503
        %v1552 = vunpack.c.l.b16 %v1504
        %v1553 = vunpack.c.l.b16 %v1505
        %v1554 = vunpack.c.l.b16 %v1506
        %v1555 = vunpack.c.l.b16 %v1507
        %v1556 = vunpack.c.l.b16 %v1508
        %v1557 = vunpack.c.l.b16 %v1509
        %v1558 = vunpack.c.l.b16 %v1510
        %v1559 = vunpack.c.l.b16 %v1511
        %v1560 = vunpack.c.l.b16 %v1512
        %v1561 = vunpack.c.l.b16 %v1513
        %v1562 = vunpack.c.l.b16 %v1514
        %v1563 = vunpack.c.l.b16 %v1515
        %v1564 = vunpack.c.l.b16 %v1516
        %v1565 = vunpack.c.l.b16 %v1517
        %v1566 = vunpack.c.l.b16 %v1518
        %v1567 = vpack.c.b16 %v1552, %v1551
        %v1568 = vpack.c.b16 %v1554, %v1553
        %v1569 = vpack.c.b16 %v1556, %v1555
        %v1570 = vpack.c.b16 %v1558, %v1557
        %v1571 = vpack.c.b16 %v1560, %v1559
        %v1572 = vpack.c.b16 %v1562, %v1561
        %v1573 = vpack.c.b16 %v1564, %v1563
        %v1574 = vpack.c.b16 %v1566, %v1565
        %1583 = vmatprep.subr.bf16.mxu0 0
        %1584 = vmatpush1.bf16.msra.mxu0 %v1567
        %1585 = vmatprep.subr.bf16.mxu0 0
        %1586 = vmatpush1.bf16.msra.mxu0 %v1568
        %1587 = vmatprep.subr.bf16.mxu0 0
        %1588 = vmatpush1.bf16.msra.mxu0 %v1569
        %1589 = vmatprep.subr.bf16.mxu0 0
        %1590 = vmatpush1.bf16.msra.mxu0 %v1570
        %1591 = vmatprep.subr.bf16.mxu0 0
        %1592 = vmatpush1.bf16.msra.mxu0 %v1571
        %1593 = vmatprep.subr.bf16.mxu0 0
        %1594 = vmatpush1.bf16.msra.mxu0 %v1572
        %1595 = vmatprep.subr.bf16.mxu0 0
        %1596 = vmatpush1.bf16.msra.mxu0 %v1573
        %1597 = vmatprep.subr.bf16.mxu0 0
        %1598 = vmatpush1.bf16.msra.mxu0 %v1574
        %1599 = vmatprep.subr.bf16.mxu0 0
        %1600 = vmatpush1.bf16.msra.mxu0 0
        %1601 = vmatprep.subr.bf16.mxu0 0
        %1602 = vmatpush1.bf16.msra.mxu0 0
        %1603 = vmatprep.subr.bf16.mxu0 0
        %1604 = vmatpush1.bf16.msra.mxu0 0
        %1605 = vmatprep.subr.bf16.mxu0 0
        %1606 = vmatpush1.bf16.msra.mxu0 0
        %1607 = vmatprep.subr.bf16.mxu0 0
        %1608 = vmatpush1.bf16.msra.mxu0 0
        %1609 = vmatprep.subr.bf16.mxu0 0
        %1610 = vmatpush1.bf16.msra.mxu0 0
        %1611 = vmatprep.subr.bf16.mxu0 0
        %1612 = vmatpush1.bf16.msra.mxu0 0
        %1613 = vmatprep.subr.bf16.mxu0 0
        %1614 = vmatpush1.bf16.msra.mxu0 0
        %1615 = vmatprep.mubr.bf16.mxu0 0
        %1616 = vmatmul.mubr.bf16.gmra.mrb[0].mxu0 %v1527
        %v1617 = vpop.f32.mrb[0].mxu0
        %v1618 = vadd.f32 0.0, %v1617
        %v1619 = vpop.f32.mrb[0].mxu0
        %v1620 = vpop.f32.mrb[0].mxu0
        %v1621 = vadd.f32 0.0, %v1620
        %v1622 = vpop.f32.mrb[0].mxu0
        %1623 = vmatprep.mubr.bf16.mxu0 0
        %1624 = vmatmul.mubr.bf16.gmra.mrb[0].mxu0 %v1528
        %v1625 = vpop.f32.mrb[0].mxu0
        %v1626 = vadd.f32 0.0, %v1625
        %v1627 = vpop.f32.mrb[0].mxu0
        %v1628 = vpop.f32.mrb[0].mxu0
        %v1629 = vadd.f32 0.0, %v1628
        %v1630 = vpop.f32.mrb[0].mxu0
        %1631 = vmatprep.mubr.bf16.mxu0 0
        %1632 = vmatmul.mubr.bf16.gmra.mrb[0].mxu0 %v1529
        %v1633 = vpop.f32.mrb[0].mxu0
        %v1634 = vadd.f32 0.0, %v1633
        %v1635 = vpop.f32.mrb[0].mxu0
        %v1636 = vpop.f32.mrb[0].mxu0
        %v1637 = vadd.f32 0.0, %v1636
        %v1638 = vpop.f32.mrb[0].mxu0
        %1639 = vmatprep.mubr.bf16.mxu0 0
        %1640 = vmatmul.mubr.bf16.gmra.mrb[0].mxu0 %v1530
        %v1641 = vpop.f32.mrb[0].mxu0
        %v1642 = vadd.f32 0.0, %v1641
        %v1643 = vpop.f32.mrb[0].mxu0
        %v1644 = vpop.f32.mrb[0].mxu0
        %v1645 = vadd.f32 0.0, %v1644
        %v1646 = vpop.f32.mrb[0].mxu0
        %1647 = vdwg.mxu0
        %v1648 = vld [vmem:[#allocation3] sm:$0xff]
        %v1649 = vld [vmem:[#allocation3 + $0x8] sm:$0xff]
        %v1650 = vld [vmem:[#allocation3 + $0x10] sm:$0xff]
        %v1651 = vld [vmem:[#allocation3 + $0x18] sm:$0xff]
        %v1652 = vld [vmem:[#allocation3 + $0x20] sm:$0xff]
        %v1653 = vld [vmem:[#allocation3 + $0x28] sm:$0xff]
        %v1654 = vld [vmem:[#allocation3 + $0x30] sm:$0xff]
        %v1655 = vld [vmem:[#allocation3 + $0x38] sm:$0xff]
        %v1656 = vadd.f32 %v1648, %v1618
        %v1657 = vadd.f32 %v1649, %v1621
        %v1658 = vadd.f32 %v1650, %v1626
        %v1659 = vadd.f32 %v1651, %v1629
        %v1660 = vadd.f32 %v1652, %v1634
        %v1661 = vadd.f32 %v1653, %v1637
        %v1662 = vadd.f32 %v1654, %v1642
        %v1663 = vadd.f32 %v1655, %v1645
        %1664 = vst [vmem:[#allocation3] sm:$0xff] %v1656
        %1665 = vst [vmem:[#allocation3 + $0x8] sm:$0xff] %v1657
        %1666 = vst [vmem:[#allocation3 + $0x10] sm:$0xff] %v1658
        %1667 = vst [vmem:[#allocation3 + $0x18] sm:$0xff] %v1659
        %1668 = vst [vmem:[#allocation3 + $0x20] sm:$0xff] %v1660
        %1669 = vst [vmem:[#allocation3 + $0x28] sm:$0xff] %v1661
        %1670 = vst [vmem:[#allocation3 + $0x30] sm:$0xff] %v1662
        %1671 = vst [vmem:[#allocation3 + $0x38] sm:$0xff] %v1663
        %s1672 = scalar_lea.vmem %s298, 8 [#allocation4]
        %v1673 = vld [vmem:[%s1672] sm:$0xf]
        %v1674 = vld [vmem:[%s1672 + $0x8] sm:$0xf]
        %v1675 = vld [vmem:[%s1672 + $0x10] sm:$0xf]
        %v1676 = vld [vmem:[%s1672 + $0x18] sm:$0xf]
        %v1677 = vld [vmem:[%s1672 + $0x20] sm:$0xf]
        %v1678 = vld [vmem:[%s1672 + $0x28] sm:$0xf]
        %v1679 = vld [vmem:[%s1672 + $0x30] sm:$0xf]
        %v1680 = vld [vmem:[%s1672 + $0x38] sm:$0xf]
        %s1681 = scalar_lea.vmem [#allocation7], 384
        %v1682 = vld [vmem:[%s1681] sm:$0xf]
        %v1683 = vld [vmem:[%s1681 + $0x4] sm:$0xf]
        %v1684 = vld [vmem:[%s1681 + $0x8] sm:$0xf]
        %v1685 = vld [vmem:[%s1681 + $0xc] sm:$0xf]
        %v1686 = vld [vmem:[%s1681 + $0x10] sm:$0xf]
        %v1687 = vld [vmem:[%s1681 + $0x14] sm:$0xf]
        %v1688 = vld [vmem:[%s1681 + $0x18] sm:$0xf]
        %v1689 = vld [vmem:[%s1681 + $0x1c] sm:$0xf]
        %v1690 = vld [vmem:[%s1681 + $0x20] sm:$0xf]
        %v1691 = vld [vmem:[%s1681 + $0x24] sm:$0xf]
        %v1692 = vld [vmem:[%s1681 + $0x28] sm:$0xf]
        %v1693 = vld [vmem:[%s1681 + $0x2c] sm:$0xf]
        %v1694 = vld [vmem:[%s1681 + $0x30] sm:$0xf]
        %v1695 = vld [vmem:[%s1681 + $0x34] sm:$0xf]
        %v1696 = vld [vmem:[%s1681 + $0x38] sm:$0xf]
        %v1697 = vld [vmem:[%s1681 + $0x3c] sm:$0xf]
        %v1706 = vunpack.c.l.b16 %v1673
        %v1707 = vunpack.c.l.b16 %v1674
        %v1708 = vunpack.c.l.b16 %v1675
        %v1709 = vunpack.c.l.b16 %v1676
        %v1710 = vunpack.c.l.b16 %v1677
        %v1711 = vunpack.c.l.b16 %v1678
        %v1712 = vunpack.c.l.b16 %v1679
        %v1713 = vunpack.c.l.b16 %v1680
        %v1714 = vpack.c.b16 %v1707, %v1706
        %v1715 = vpack.c.b16 %v1709, %v1708
        %v1716 = vpack.c.b16 %v1711, %v1710
        %v1717 = vpack.c.b16 %v1713, %v1712
        %v1738 = vunpack.c.l.b16 %v1682
        %v1739 = vunpack.c.l.b16 %v1683
        %v1740 = vunpack.c.l.b16 %v1684
        %v1741 = vunpack.c.l.b16 %v1685
        %v1742 = vunpack.c.l.b16 %v1686
        %v1743 = vunpack.c.l.b16 %v1687
        %v1744 = vunpack.c.l.b16 %v1688
        %v1745 = vunpack.c.l.b16 %v1689
        %v1746 = vunpack.c.l.b16 %v1690
        %v1747 = vunpack.c.l.b16 %v1691
        %v1748 = vunpack.c.l.b16 %v1692
        %v1749 = vunpack.c.l.b16 %v1693
        %v1750 = vunpack.c.l.b16 %v1694
        %v1751 = vunpack.c.l.b16 %v1695
        %v1752 = vunpack.c.l.b16 %v1696
        %v1753 = vunpack.c.l.b16 %v1697
        %v1754 = vpack.c.b16 %v1739, %v1738
        %v1755 = vpack.c.b16 %v1741, %v1740
        %v1756 = vpack.c.b16 %v1743, %v1742
        %v1757 = vpack.c.b16 %v1745, %v1744
        %v1758 = vpack.c.b16 %v1747, %v1746
        %v1759 = vpack.c.b16 %v1749, %v1748
        %v1760 = vpack.c.b16 %v1751, %v1750
        %v1761 = vpack.c.b16 %v1753, %v1752
        %1770 = vmatprep.subr.bf16.mxu0 0
        %1771 = vmatpush1.bf16.msra.mxu0 %v1754
        %1772 = vmatprep.subr.bf16.mxu0 0
        %1773 = vmatpush1.bf16.msra.mxu0 %v1755
        %1774 = vmatprep.subr.bf16.mxu0 0
        %1775 = vmatpush1.bf16.msra.mxu0 %v1756
        %1776 = vmatprep.subr.bf16.mxu0 0
        %1777 = vmatpush1.bf16.msra.mxu0 %v1757
        %1778 = vmatprep.subr.bf16.mxu0 0
        %1779 = vmatpush1.bf16.msra.mxu0 %v1758
        %1780 = vmatprep.subr.bf16.mxu0 0
        %1781 = vmatpush1.bf16.msra.mxu0 %v1759
        %1782 = vmatprep.subr.bf16.mxu0 0
        %1783 = vmatpush1.bf16.msra.mxu0 %v1760
        %1784 = vmatprep.subr.bf16.mxu0 0
        %1785 = vmatpush1.bf16.msra.mxu0 %v1761
        %1786 = vmatprep.subr.bf16.mxu0 0
        %1787 = vmatpush1.bf16.msra.mxu0 0
        %1788 = vmatprep.subr.bf16.mxu0 0
        %1789 = vmatpush1.bf16.msra.mxu0 0
        %1790 = vmatprep.subr.bf16.mxu0 0
        %1791 = vmatpush1.bf16.msra.mxu0 0
        %1792 = vmatprep.subr.bf16.mxu0 0
        %1793 = vmatpush1.bf16.msra.mxu0 0
        %1794 = vmatprep.subr.bf16.mxu0 0
        %1795 = vmatpush1.bf16.msra.mxu0 0
        %1796 = vmatprep.subr.bf16.mxu0 0
        %1797 = vmatpush1.bf16.msra.mxu0 0
        %1798 = vmatprep.subr.bf16.mxu0 0
        %1799 = vmatpush1.bf16.msra.mxu0 0
        %1800 = vmatprep.subr.bf16.mxu0 0
        %1801 = vmatpush1.bf16.msra.mxu0 0
        %1802 = vmatprep.mubr.bf16.mxu0 0
        %1803 = vmatmul.mubr.bf16.gmra.mrb[0].mxu0 %v1714
        %v1804 = vpop.f32.mrb[0].mxu0
        %v1805 = vadd.f32 0.0, %v1804
        %v1806 = vpop.f32.mrb[0].mxu0
        %v1807 = vpop.f32.mrb[0].mxu0
        %v1808 = vadd.f32 0.0, %v1807
        %v1809 = vpop.f32.mrb[0].mxu0
        %1810 = vmatprep.mubr.bf16.mxu0 0
        %1811 = vmatmul.mubr.bf16.gmra.mrb[0].mxu0 %v1715
        %v1812 = vpop.f32.mrb[0].mxu0
        %v1813 = vadd.f32 0.0, %v1812
        %v1814 = vpop.f32.mrb[0].mxu0
        %v1815 = vpop.f32.mrb[0].mxu0
        %v1816 = vadd.f32 0.0, %v1815
        %v1817 = vpop.f32.mrb[0].mxu0
        %1818 = vmatprep.mubr.bf16.mxu0 0
        %1819 = vmatmul.mubr.bf16.gmra.mrb[0].mxu0 %v1716
        %v1820 = vpop.f32.mrb[0].mxu0
        %v1821 = vadd.f32 0.0, %v1820
        %v1822 = vpop.f32.mrb[0].mxu0
        %v1823 = vpop.f32.mrb[0].mxu0
        %v1824 = vadd.f32 0.0, %v1823
        %v1825 = vpop.f32.mrb[0].mxu0
        %1826 = vmatprep.mubr.bf16.mxu0 0
        %1827 = vmatmul.mubr.bf16.gmra.mrb[0].mxu0 %v1717
        %v1828 = vpop.f32.mrb[0].mxu0
        %v1829 = vadd.f32 0.0, %v1828
        %v1830 = vpop.f32.mrb[0].mxu0
        %v1831 = vpop.f32.mrb[0].mxu0
        %v1832 = vadd.f32 0.0, %v1831
        %v1833 = vpop.f32.mrb[0].mxu0
        %1834 = vdwg.mxu0
        %v1835 = vld [vmem:[#allocation3] sm:$0xff]
        %v1836 = vld [vmem:[#allocation3 + $0x8] sm:$0xff]
        %v1837 = vld [vmem:[#allocation3 + $0x10] sm:$0xff]
        %v1838 = vld [vmem:[#allocation3 + $0x18] sm:$0xff]
        %v1839 = vld [vmem:[#allocation3 + $0x20] sm:$0xff]
        %v1840 = vld [vmem:[#allocation3 + $0x28] sm:$0xff]
        %v1841 = vld [vmem:[#allocation3 + $0x30] sm:$0xff]
        %v1842 = vld [vmem:[#allocation3 + $0x38] sm:$0xff]
        %v1843 = vadd.f32 %v1835, %v1805
        %v1844 = vadd.f32 %v1836, %v1808
        %v1845 = vadd.f32 %v1837, %v1813
        %v1846 = vadd.f32 %v1838, %v1816
        %v1847 = vadd.f32 %v1839, %v1821
        %v1848 = vadd.f32 %v1840, %v1824
        %v1849 = vadd.f32 %v1841, %v1829
        %v1850 = vadd.f32 %v1842, %v1832
        %1851 = vst [vmem:[#allocation3] sm:$0xff] %v1843
        %1852 = vst [vmem:[#allocation3 + $0x8] sm:$0xff] %v1844
        %1853 = vst [vmem:[#allocation3 + $0x10] sm:$0xff] %v1845
        %1854 = vst [vmem:[#allocation3 + $0x18] sm:$0xff] %v1846
        %1855 = vst [vmem:[#allocation3 + $0x20] sm:$0xff] %v1847
        %1856 = vst [vmem:[#allocation3 + $0x28] sm:$0xff] %v1848
        %1857 = vst [vmem:[#allocation3 + $0x30] sm:$0xff] %v1849
        %1858 = vst [vmem:[#allocation3 + $0x38] sm:$0xff] %v1850
        %s1859 = scalar_lea.vmem %s298, 80 [#allocation4]
        %v1860 = vld [vmem:[%s1859] sm:$0xf]
        %v1861 = vld [vmem:[%s1859 + $0x8] sm:$0xf]
        %v1862 = vld [vmem:[%s1859 + $0x10] sm:$0xf]
        %v1863 = vld [vmem:[%s1859 + $0x18] sm:$0xf]
        %v1864 = vld [vmem:[%s1859 + $0x20] sm:$0xf]
        %v1865 = vld [vmem:[%s1859 + $0x28] sm:$0xf]
        %v1866 = vld [vmem:[%s1859 + $0x30] sm:$0xf]
        %v1867 = vld [vmem:[%s1859 + $0x38] sm:$0xf]
        %s1868 = scalar_lea.vmem [#allocation7], 448
        %v1869 = vld [vmem:[%s1868] sm:$0xf]
        %v1870 = vld [vmem:[%s1868 + $0x4] sm:$0xf]
        %v1871 = vld [vmem:[%s1868 + $0x8] sm:$0xf]
        %v1872 = vld [vmem:[%s1868 + $0xc] sm:$0xf]
        %v1873 = vld [vmem:[%s1868 + $0x10] sm:$0xf]
        %v1874 = vld [vmem:[%s1868 + $0x14] sm:$0xf]
        %v1875 = vld [vmem:[%s1868 + $0x18] sm:$0xf]
        %v1876 = vld [vmem:[%s1868 + $0x1c] sm:$0xf]
        %v1877 = vld [vmem:[%s1868 + $0x20] sm:$0xf]
        %v1878 = vld [vmem:[%s1868 + $0x24] sm:$0xf]
        %v1879 = vld [vmem:[%s1868 + $0x28] sm:$0xf]
        %v1880 = vld [vmem:[%s1868 + $0x2c] sm:$0xf]
        %v1881 = vld [vmem:[%s1868 + $0x30] sm:$0xf]
        %v1882 = vld [vmem:[%s1868 + $0x34] sm:$0xf]
        %v1883 = vld [vmem:[%s1868 + $0x38] sm:$0xf]
        %v1884 = vld [vmem:[%s1868 + $0x3c] sm:$0xf]
        %v1893 = vunpack.c.l.b16 %v1860
        %v1894 = vunpack.c.l.b16 %v1861
        %v1895 = vunpack.c.l.b16 %v1862
        %v1896 = vunpack.c.l.b16 %v1863
        %v1897 = vunpack.c.l.b16 %v1864
        %v1898 = vunpack.c.l.b16 %v1865
        %v1899 = vunpack.c.l.b16 %v1866
        %v1900 = vunpack.c.l.b16 %v1867
        %v1901 = vpack.c.b16 %v1894, %v1893
        %v1902 = vpack.c.b16 %v1896, %v1895
        %v1903 = vpack.c.b16 %v1898, %v1897
        %v1904 = vpack.c.b16 %v1900, %v1899
        %v1925 = vunpack.c.l.b16 %v1869
        %v1926 = vunpack.c.l.b16 %v1870
        %v1927 = vunpack.c.l.b16 %v1871
        %v1928 = vunpack.c.l.b16 %v1872
        %v1929 = vunpack.c.l.b16 %v1873
        %v1930 = vunpack.c.l.b16 %v1874
        %v1931 = vunpack.c.l.b16 %v1875
        %v1932 = vunpack.c.l.b16 %v1876
        %v1933 = vunpack.c.l.b16 %v1877
        %v1934 = vunpack.c.l.b16 %v1878
        %v1935 = vunpack.c.l.b16 %v1879
        %v1936 = vunpack.c.l.b16 %v1880
        %v1937 = vunpack.c.l.b16 %v1881
        %v1938 = vunpack.c.l.b16 %v1882
        %v1939 = vunpack.c.l.b16 %v1883
        %v1940 = vunpack.c.l.b16 %v1884
        %v1941 = vpack.c.b16 %v1926, %v1925
        %v1942 = vpack.c.b16 %v1928, %v1927
        %v1943 = vpack.c.b16 %v1930, %v1929
        %v1944 = vpack.c.b16 %v1932, %v1931
        %v1945 = vpack.c.b16 %v1934, %v1933
        %v1946 = vpack.c.b16 %v1936, %v1935
        %v1947 = vpack.c.b16 %v1938, %v1937
        %v1948 = vpack.c.b16 %v1940, %v1939
        %1957 = vmatprep.subr.bf16.mxu0 0
        %1958 = vmatpush1.bf16.msra.mxu0 %v1941
        %1959 = vmatprep.subr.bf16.mxu0 0
        %1960 = vmatpush1.bf16.msra.mxu0 %v1942
        %1961 = vmatprep.subr.bf16.mxu0 0
        %1962 = vmatpush1.bf16.msra.mxu0 %v1943
        %1963 = vmatprep.subr.bf16.mxu0 0
        %1964 = vmatpush1.bf16.msra.mxu0 %v1944
        %1965 = vmatprep.subr.bf16.mxu0 0
        %1966 = vmatpush1.bf16.msra.mxu0 %v1945
        %1967 = vmatprep.subr.bf16.mxu0 0
        %1968 = vmatpush1.bf16.msra.mxu0 %v1946
        %1969 = vmatprep.subr.bf16.mxu0 0
        %1970 = vmatpush1.bf16.msra.mxu0 %v1947
        %1971 = vmatprep.subr.bf16.mxu0 0
        %1972 = vmatpush1.bf16.msra.mxu0 %v1948
        %1973 = vmatprep.subr.bf16.mxu0 0
        %1974 = vmatpush1.bf16.msra.mxu0 0
        %1975 = vmatprep.subr.bf16.mxu0 0
        %1976 = vmatpush1.bf16.msra.mxu0 0
        %1977 = vmatprep.subr.bf16.mxu0 0
        %1978 = vmatpush1.bf16.msra.mxu0 0
        %1979 = vmatprep.subr.bf16.mxu0 0
        %1980 = vmatpush1.bf16.msra.mxu0 0
        %1981 = vmatprep.subr.bf16.mxu0 0
        %1982 = vmatpush1.bf16.msra.mxu0 0
        %1983 = vmatprep.subr.bf16.mxu0 0
        %1984 = vmatpush1.bf16.msra.mxu0 0
        %1985 = vmatprep.subr.bf16.mxu0 0
        %1986 = vmatpush1.bf16.msra.mxu0 0
        %1987 = vmatprep.subr.bf16.mxu0 0
        %1988 = vmatpush1.bf16.msra.mxu0 0
        %1989 = vmatprep.mubr.bf16.mxu0 0
        %1990 = vmatmul.mubr.bf16.gmra.mrb[0].mxu0 %v1901
        %v1991 = vpop.f32.mrb[0].mxu0
        %v1992 = vadd.f32 0.0, %v1991
        %v1993 = vpop.f32.mrb[0].mxu0
        %v1994 = vpop.f32.mrb[0].mxu0
        %v1995 = vadd.f32 0.0, %v1994
        %v1996 = vpop.f32.mrb[0].mxu0
        %1997 = vmatprep.mubr.bf16.mxu0 0
        %1998 = vmatmul.mubr.bf16.gmra.mrb[0].mxu0 %v1902
        %v1999 = vpop.f32.mrb[0].mxu0
        %v2000 = vadd.f32 0.0, %v1999
        %v2001 = vpop.f32.mrb[0].mxu0
        %v2002 = vpop.f32.mrb[0].mxu0
        %v2003 = vadd.f32 0.0, %v2002
        %v2004 = vpop.f32.mrb[0].mxu0
        %2005 = vmatprep.mubr.bf16.mxu0 0
        %2006 = vmatmul.mubr.bf16.gmra.mrb[0].mxu0 %v1903
        %v2007 = vpop.f32.mrb[0].mxu0
        %v2008 = vadd.f32 0.0, %v2007
        %v2009 = vpop.f32.mrb[0].mxu0
        %v2010 = vpop.f32.mrb[0].mxu0
        %v2011 = vadd.f32 0.0, %v2010
        %v2012 = vpop.f32.mrb[0].mxu0
        %2013 = vmatprep.mubr.bf16.mxu0 0
        %2014 = vmatmul.mubr.bf16.gmra.mrb[0].mxu0 %v1904
        %v2015 = vpop.f32.mrb[0].mxu0
        %v2016 = vadd.f32 0.0, %v2015
        %v2017 = vpop.f32.mrb[0].mxu0
        %v2018 = vpop.f32.mrb[0].mxu0
        %v2019 = vadd.f32 0.0, %v2018
        %v2020 = vpop.f32.mrb[0].mxu0
        %2021 = vdwg.mxu0
        %v2022 = vld [vmem:[#allocation3] sm:$0xff]
        %v2023 = vld [vmem:[#allocation3 + $0x8] sm:$0xff]
        %v2024 = vld [vmem:[#allocation3 + $0x10] sm:$0xff]
        %v2025 = vld [vmem:[#allocation3 + $0x18] sm:$0xff]
        %v2026 = vld [vmem:[#allocation3 + $0x20] sm:$0xff]
        %v2027 = vld [vmem:[#allocation3 + $0x28] sm:$0xff]
        %v2028 = vld [vmem:[#allocation3 + $0x30] sm:$0xff]
        %v2029 = vld [vmem:[#allocation3 + $0x38] sm:$0xff]
        %v2030 = vadd.f32 %v2022, %v1992
        %v2031 = vadd.f32 %v2023, %v1995
        %v2032 = vadd.f32 %v2024, %v2000
        %v2033 = vadd.f32 %v2025, %v2003
        %v2034 = vadd.f32 %v2026, %v2008
        %v2035 = vadd.f32 %v2027, %v2011
        %v2036 = vadd.f32 %v2028, %v2016
        %v2037 = vadd.f32 %v2029, %v2019
        %2038 = vst [vmem:[#allocation3] sm:$0xff] %v2030
        %2039 = vst [vmem:[#allocation3 + $0x8] sm:$0xff] %v2031
        %2040 = vst [vmem:[#allocation3 + $0x10] sm:$0xff] %v2032
        %2041 = vst [vmem:[#allocation3 + $0x18] sm:$0xff] %v2033
        %2042 = vst [vmem:[#allocation3 + $0x20] sm:$0xff] %v2034
        %2043 = vst [vmem:[#allocation3 + $0x28] sm:$0xff] %v2035
        %2044 = vst [vmem:[#allocation3 + $0x30] sm:$0xff] %v2036
        %2045 = vst [vmem:[#allocation3 + $0x38] sm:$0xff] %v2037
        %v2046 = vld [vmem:[%s1672] sm:$0xf]
        %v2047 = vld [vmem:[%s1672 + $0x4] sm:$0x1]
        %v2048 = vld [vmem:[%s1672 + $0x8] sm:$0xf]
        %v2049 = vld [vmem:[%s1672 + $0xc] sm:$0x1]
        %v2050 = vld [vmem:[%s1672 + $0x10] sm:$0xf]
        %v2051 = vld [vmem:[%s1672 + $0x14] sm:$0x1]
        %v2052 = vld [vmem:[%s1672 + $0x18] sm:$0xf]
        %v2053 = vld [vmem:[%s1672 + $0x1c] sm:$0x1]
        %v2054 = vld [vmem:[%s1672 + $0x20] sm:$0xf]
        %v2055 = vld [vmem:[%s1672 + $0x24] sm:$0x1]
        %v2056 = vld [vmem:[%s1672 + $0x28] sm:$0xf]
        %v2057 = vld [vmem:[%s1672 + $0x2c] sm:$0x1]
        %v2058 = vld [vmem:[%s1672 + $0x30] sm:$0xf]
        %v2059 = vld [vmem:[%s1672 + $0x34] sm:$0x1]
        %v2060 = vld [vmem:[%s1672 + $0x38] sm:$0xf]
        %v2061 = vld [vmem:[%s1672 + $0x3c] sm:$0x1]
        %v2063 = vshrl.u32 %v2046, 16
        %v2065 = vrot.slane %v2063, 4
        %v2066 = vshll.u32 %v2046, 16
        %v2068 = vrot.slane %v2066, 5
        %v2069 = vor.u32 %v2065, %v2068
        %v2070 = vrot.slane %v2069, 4
        %v2072 = vshll.u32 %v2047, 16
        %v2074 = vrot.slane %v2072, 5
        %v2075 = vsel %vm717, %v2070, %v2074
        %v2077 = vshrl.u32 %v2048, 16
        %v2079 = vrot.slane %v2077, 4
        %v2080 = vshll.u32 %v2048, 16
        %v2082 = vrot.slane %v2080, 5
        %v2083 = vor.u32 %v2079, %v2082
        %v2084 = vrot.slane %v2083, 4
        %v2086 = vshll.u32 %v2049, 16
        %v2088 = vrot.slane %v2086, 5
        %v2089 = vsel %vm717, %v2084, %v2088
        %v2091 = vshrl.u32 %v2050, 16
        %v2093 = vrot.slane %v2091, 4
        %v2094 = vshll.u32 %v2050, 16
        %v2096 = vrot.slane %v2094, 5
        %v2097 = vor.u32 %v2093, %v2096
        %v2098 = vrot.slane %v2097, 4
        %v2100 = vshll.u32 %v2051, 16
        %v2102 = vrot.slane %v2100, 5
        %v2103 = vsel %vm717, %v2098, %v2102
        %v2105 = vshrl.u32 %v2052, 16
        %v2107 = vrot.slane %v2105, 4
        %v2108 = vshll.u32 %v2052, 16
        %v2110 = vrot.slane %v2108, 5
        %v2111 = vor.u32 %v2107, %v2110
        %v2112 = vrot.slane %v2111, 4
        %v2114 = vshll.u32 %v2053, 16
        %v2116 = vrot.slane %v2114, 5
        %v2117 = vsel %vm717, %v2112, %v2116
        %v2119 = vshrl.u32 %v2054, 16
        %v2121 = vrot.slane %v2119, 4
        %v2122 = vshll.u32 %v2054, 16
        %v2124 = vrot.slane %v2122, 5
        %v2125 = vor.u32 %v2121, %v2124
        %v2126 = vrot.slane %v2125, 4
        %v2128 = vshll.u32 %v2055, 16
        %v2130 = vrot.slane %v2128, 5
        %v2131 = vsel %vm717, %v2126, %v2130
        %v2133 = vshrl.u32 %v2056, 16
        %v2135 = vrot.slane %v2133, 4
        %v2136 = vshll.u32 %v2056, 16
        %v2138 = vrot.slane %v2136, 5
        %v2139 = vor.u32 %v2135, %v2138
        %v2140 = vrot.slane %v2139, 4
        %v2142 = vshll.u32 %v2057, 16
        %v2144 = vrot.slane %v2142, 5
        %v2145 = vsel %vm717, %v2140, %v2144
        %v2147 = vshrl.u32 %v2058, 16
        %v2149 = vrot.slane %v2147, 4
        %v2150 = vshll.u32 %v2058, 16
        %v2152 = vrot.slane %v2150, 5
        %v2153 = vor.u32 %v2149, %v2152
        %v2154 = vrot.slane %v2153, 4
        %v2156 = vshll.u32 %v2059, 16
        %v2158 = vrot.slane %v2156, 5
        %v2159 = vsel %vm717, %v2154, %v2158
        %v2161 = vshrl.u32 %v2060, 16
        %v2163 = vrot.slane %v2161, 4
        %v2164 = vshll.u32 %v2060, 16
        %v2166 = vrot.slane %v2164, 5
        %v2167 = vor.u32 %v2163, %v2166
        %v2168 = vrot.slane %v2167, 4
        %v2170 = vshll.u32 %v2061, 16
        %v2172 = vrot.slane %v2170, 5
        %v2173 = vsel %vm717, %v2168, %v2172
        %s2174 = scalar_lea.vmem [#allocation7], 512
        %v2175 = vld [vmem:[%s2174] sm:$0xf]
        %v2176 = vld [vmem:[%s2174 + $0x4] sm:$0xf]
        %v2177 = vld [vmem:[%s2174 + $0x8] sm:$0xf]
        %v2178 = vld [vmem:[%s2174 + $0xc] sm:$0xf]
        %v2179 = vld [vmem:[%s2174 + $0x10] sm:$0xf]
        %v2180 = vld [vmem:[%s2174 + $0x14] sm:$0xf]
        %v2181 = vld [vmem:[%s2174 + $0x18] sm:$0xf]
        %v2182 = vld [vmem:[%s2174 + $0x1c] sm:$0xf]
        %v2183 = vld [vmem:[%s2174 + $0x20] sm:$0xf]
        %v2184 = vld [vmem:[%s2174 + $0x24] sm:$0xf]
        %v2185 = vld [vmem:[%s2174 + $0x28] sm:$0xf]
        %v2186 = vld [vmem:[%s2174 + $0x2c] sm:$0xf]
        %v2187 = vld [vmem:[%s2174 + $0x30] sm:$0xf]
        %v2188 = vld [vmem:[%s2174 + $0x34] sm:$0xf]
        %v2189 = vld [vmem:[%s2174 + $0x38] sm:$0xf]
        %v2190 = vld [vmem:[%s2174 + $0x3c] sm:$0xf]
        %v2191 = vunpack.c.l.b16 %v2075
        %v2192 = vunpack.c.l.b16 %v2089
        %v2193 = vunpack.c.l.b16 %v2103
        %v2194 = vunpack.c.l.b16 %v2117
        %v2195 = vunpack.c.l.b16 %v2131
        %v2196 = vunpack.c.l.b16 %v2145
        %v2197 = vunpack.c.l.b16 %v2159
        %v2198 = vunpack.c.l.b16 %v2173
        %v2199 = vpack.c.b16 %v2192, %v2191
        %v2200 = vpack.c.b16 %v2194, %v2193
        %v2201 = vpack.c.b16 %v2196, %v2195
        %v2202 = vpack.c.b16 %v2198, %v2197
        %v2223 = vunpack.c.l.b16 %v2175
        %v2224 = vunpack.c.l.b16 %v2176
        %v2225 = vunpack.c.l.b16 %v2177
        %v2226 = vunpack.c.l.b16 %v2178
        %v2227 = vunpack.c.l.b16 %v2179
        %v2228 = vunpack.c.l.b16 %v2180
        %v2229 = vunpack.c.l.b16 %v2181
        %v2230 = vunpack.c.l.b16 %v2182
        %v2231 = vunpack.c.l.b16 %v2183
        %v2232 = vunpack.c.l.b16 %v2184
        %v2233 = vunpack.c.l.b16 %v2185
        %v2234 = vunpack.c.l.b16 %v2186
        %v2235 = vunpack.c.l.b16 %v2187
        %v2236 = vunpack.c.l.b16 %v2188
        %v2237 = vunpack.c.l.b16 %v2189
        %v2238 = vunpack.c.l.b16 %v2190
        %v2239 = vpack.c.b16 %v2224, %v2223
        %v2240 = vpack.c.b16 %v2226, %v2225
        %v2241 = vpack.c.b16 %v2228, %v2227
        %v2242 = vpack.c.b16 %v2230, %v2229
        %v2243 = vpack.c.b16 %v2232, %v2231
        %v2244 = vpack.c.b16 %v2234, %v2233
        %v2245 = vpack.c.b16 %v2236, %v2235
        %v2246 = vpack.c.b16 %v2238, %v2237
        %2255 = vmatprep.subr.bf16.mxu0 0
        %2256 = vmatpush1.bf16.msra.mxu0 %v2239
        %2257 = vmatprep.subr.bf16.mxu0 0
        %2258 = vmatpush1.bf16.msra.mxu0 %v2240
        %2259 = vmatprep.subr.bf16.mxu0 0
        %2260 = vmatpush1.bf16.msra.mxu0 %v2241
        %2261 = vmatprep.subr.bf16.mxu0 0
        %2262 = vmatpush1.bf16.msra.mxu0 %v2242
        %2263 = vmatprep.subr.bf16.mxu0 0
        %2264 = vmatpush1.bf16.msra.mxu0 %v2243
        %2265 = vmatprep.subr.bf16.mxu0 0
        %2266 = vmatpush1.bf16.msra.mxu0 %v2244
        %2267 = vmatprep.subr.bf16.mxu0 0
        %2268 = vmatpush1.bf16.msra.mxu0 %v2245
        %2269 = vmatprep.subr.bf16.mxu0 0
        %2270 = vmatpush1.bf16.msra.mxu0 %v2246
        %2271 = vmatprep.subr.bf16.mxu0 0
        %2272 = vmatpush1.bf16.msra.mxu0 0
        %2273 = vmatprep.subr.bf16.mxu0 0
        %2274 = vmatpush1.bf16.msra.mxu0 0
        %2275 = vmatprep.subr.bf16.mxu0 0
        %2276 = vmatpush1.bf16.msra.mxu0 0
        %2277 = vmatprep.subr.bf16.mxu0 0
        %2278 = vmatpush1.bf16.msra.mxu0 0
        %2279 = vmatprep.subr.bf16.mxu0 0
        %2280 = vmatpush1.bf16.msra.mxu0 0
        %2281 = vmatprep.subr.bf16.mxu0 0
        %2282 = vmatpush1.bf16.msra.mxu0 0
        %2283 = vmatprep.subr.bf16.mxu0 0
        %2284 = vmatpush1.bf16.msra.mxu0 0
        %2285 = vmatprep.subr.bf16.mxu0 0
        %2286 = vmatpush1.bf16.msra.mxu0 0
        %2287 = vmatprep.mubr.bf16.mxu0 0
        %2288 = vmatmul.mubr.bf16.gmra.mrb[0].mxu0 %v2199
        %v2289 = vpop.f32.mrb[0].mxu0
        %v2290 = vadd.f32 0.0, %v2289
        %v2291 = vpop.f32.mrb[0].mxu0
        %v2292 = vpop.f32.mrb[0].mxu0
        %v2293 = vadd.f32 0.0, %v2292
        %v2294 = vpop.f32.mrb[0].mxu0
        %2295 = vmatprep.mubr.bf16.mxu0 0
        %2296 = vmatmul.mubr.bf16.gmra.mrb[0].mxu0 %v2200
        %v2297 = vpop.f32.mrb[0].mxu0
        %v2298 = vadd.f32 0.0, %v2297
        %v2299 = vpop.f32.mrb[0].mxu0
        %v2300 = vpop.f32.mrb[0].mxu0
        %v2301 = vadd.f32 0.0, %v2300
        %v2302 = vpop.f32.mrb[0].mxu0
        %2303 = vmatprep.mubr.bf16.mxu0 0
        %2304 = vmatmul.mubr.bf16.gmra.mrb[0].mxu0 %v2201
        %v2305 = vpop.f32.mrb[0].mxu0
        %v2306 = vadd.f32 0.0, %v2305
        %v2307 = vpop.f32.mrb[0].mxu0
        %v2308 = vpop.f32.mrb[0].mxu0
        %v2309 = vadd.f32 0.0, %v2308
        %v2310 = vpop.f32.mrb[0].mxu0
        %2311 = vmatprep.mubr.bf16.mxu0 0
        %2312 = vmatmul.mubr.bf16.gmra.mrb[0].mxu0 %v2202
        %v2313 = vpop.f32.mrb[0].mxu0
        %v2314 = vadd.f32 0.0, %v2313
        %v2315 = vpop.f32.mrb[0].mxu0
        %v2316 = vpop.f32.mrb[0].mxu0
        %v2317 = vadd.f32 0.0, %v2316
        %v2318 = vpop.f32.mrb[0].mxu0
        %2319 = vdwg.mxu0
        %v2320 = vld [vmem:[#allocation3] sm:$0xff]
        %v2321 = vld [vmem:[#allocation3 + $0x8] sm:$0xff]
        %v2322 = vld [vmem:[#allocation3 + $0x10] sm:$0xff]
        %v2323 = vld [vmem:[#allocation3 + $0x18] sm:$0xff]
        %v2324 = vld [vmem:[#allocation3 + $0x20] sm:$0xff]
        %v2325 = vld [vmem:[#allocation3 + $0x28] sm:$0xff]
        %v2326 = vld [vmem:[#allocation3 + $0x30] sm:$0xff]
        %v2327 = vld [vmem:[#allocation3 + $0x38] sm:$0xff]
        %v2328 = vadd.f32 %v2320, %v2290
        %v2329 = vadd.f32 %v2321, %v2293
        %v2330 = vadd.f32 %v2322, %v2298
        %v2331 = vadd.f32 %v2323, %v2301
        %v2332 = vadd.f32 %v2324, %v2306
        %v2333 = vadd.f32 %v2325, %v2309
        %v2334 = vadd.f32 %v2326, %v2314
        %v2335 = vadd.f32 %v2327, %v2317
        %2336 = vst [vmem:[#allocation3] sm:$0xff] %v2328
        %2337 = vst [vmem:[#allocation3 + $0x8] sm:$0xff] %v2329
        %2338 = vst [vmem:[#allocation3 + $0x10] sm:$0xff] %v2330
        %2339 = vst [vmem:[#allocation3 + $0x18] sm:$0xff] %v2331
        %2340 = vst [vmem:[#allocation3 + $0x20] sm:$0xff] %v2332
        %2341 = vst [vmem:[#allocation3 + $0x28] sm:$0xff] %v2333
        %2342 = vst [vmem:[#allocation3 + $0x30] sm:$0xff] %v2334
        %2343 = vst [vmem:[#allocation3 + $0x38] sm:$0xff] %v2335
        %v2344 = vld [vmem:[#allocation3] sm:$0xff]
        %v2345 = vld [vmem:[#allocation3 + $0x8] sm:$0xff]
        %v2346 = vld [vmem:[#allocation3 + $0x10] sm:$0xff]
        %v2347 = vld [vmem:[#allocation3 + $0x18] sm:$0xff]
        %v2348 = vld [vmem:[#allocation3 + $0x20] sm:$0xff]
        %v2349 = vld [vmem:[#allocation3 + $0x28] sm:$0xff]
        %v2350 = vld [vmem:[#allocation3 + $0x30] sm:$0xff]
        %v2351 = vld [vmem:[#allocation3 + $0x38] sm:$0xff]
        %v2352 = vld [vmem:[%s2] sm:$0x1]
        %v2354 = vlaneseq
        %v2355 = vshrl.u32 %v2354, 7
        %v2356 = vsub.s32 0, %v2355
        %v2357 = vrot.slane %v2352, %v2356
        %v2359 = vadd.f32 %v2344, %v2357
        %v2360 = vadd.f32 %v2345, %v2357
        %v2361 = vadd.f32 %v2346, %v2357
        %v2362 = vadd.f32 %v2347, %v2357
        %v2363 = vadd.f32 %v2348, %v2357
        %v2364 = vadd.f32 %v2349, %v2357
        %v2365 = vadd.f32 %v2350, %v2357
        %v2366 = vadd.f32 %v2351, %v2357
        %v2367 = vmax.f32 %v2359, 0.0
        %v2368 = vmax.f32 %v2360, 0.0
        %v2369 = vmax.f32 %v2361, 0.0
        %v2370 = vmax.f32 %v2362, 0.0
        %v2371 = vmax.f32 %v2363, 0.0
        %v2372 = vmax.f32 %v2364, 0.0
        %v2373 = vmax.f32 %v2365, 0.0
        %v2374 = vmax.f32 %v2366, 0.0
        %v2375 = vpack.c.bf16 %v2368, %v2367
        %v2376 = vpack.c.bf16 %v2370, %v2369
        %v2377 = vpack.c.bf16 %v2372, %v2371
        %v2378 = vpack.c.bf16 %v2374, %v2373
        %2379 = vst [vmem:[#allocation2] sm:$0xff] 0
        %s2380 = scalar_lea.vmem [#allocation2], 72
        %2381 = vst [vmem:[%s2380] sm:$0xff] 0
        %vm2382 = vcmask 1040384
        %vm2383 = vsmask.f32 256
        %vm2384 = vmand %vm2382, %vm2383
        %v2385 = vld [vmem:[#allocation2] sm:$0x1]
        %v2386 = vsel %vm2384, 0, %v2385
        %2387 = vst [vmem:[#allocation2] sm:$0x1] %v2386
        %v2388 = vld [vmem:[#allocation2 + $0x8] sm:$0x1]
        %v2389 = vsel %vm2384, 0, %v2388
        %2390 = vst [vmem:[#allocation2 + $0x8] sm:$0x1] %v2389
        %v2391 = vld [vmem:[#allocation2 + $0x10] sm:$0x1]
        %v2392 = vsel %vm2384, 0, %v2391
        %2393 = vst [vmem:[#allocation2 + $0x10] sm:$0x1] %v2392
        %v2394 = vld [vmem:[#allocation2 + $0x18] sm:$0x1]
        %v2395 = vsel %vm2384, 0, %v2394
        %2396 = vst [vmem:[#allocation2 + $0x18] sm:$0x1] %v2395
        %v2397 = vld [vmem:[#allocation2 + $0x20] sm:$0x1]
        %v2398 = vsel %vm2384, 0, %v2397
        %2399 = vst [vmem:[#allocation2 + $0x20] sm:$0x1] %v2398
        %v2400 = vld [vmem:[#allocation2 + $0x28] sm:$0x1]
        %v2401 = vsel %vm2384, 0, %v2400
        %2402 = vst [vmem:[#allocation2 + $0x28] sm:$0x1] %v2401
        %v2403 = vld [vmem:[#allocation2 + $0x30] sm:$0x1]
        %v2404 = vsel %vm2384, 0, %v2403
        %2405 = vst [vmem:[#allocation2 + $0x30] sm:$0x1] %v2404
        %v2406 = vld [vmem:[#allocation2 + $0x38] sm:$0x1]
        %v2407 = vsel %vm2384, 0, %v2406
        %2408 = vst [vmem:[#allocation2 + $0x38] sm:$0x1] %v2407
        %v2409 = vld [vmem:[#allocation2 + $0x40] sm:$0x1]
        %v2410 = vsel %vm2384, 0, %v2409
        %2411 = vst [vmem:[#allocation2 + $0x40] sm:$0x1] %v2410
        %v2412 = vld [vmem:[#allocation2 + $0x48] sm:$0x1]
        %v2413 = vsel %vm2384, 0, %v2412
        %2414 = vst [vmem:[#allocation2 + $0x48] sm:$0x1] %v2413
        %vm2415 = vcmask 1044484
        %vm2416 = vsmask.f32 7954
        %vm2417 = vmand %vm2415, %vm2416
        %v2418 = vld [vmem:[#allocation2] sm:$0x10]
        %v2419 = vsel %vm2417, 0, %v2418
        %2420 = vst [vmem:[#allocation2] sm:$0x10] %v2419
        %v2421 = vld [vmem:[#allocation2 + $0x8] sm:$0x10]
        %v2422 = vsel %vm2417, 0, %v2421
        %2423 = vst [vmem:[#allocation2 + $0x8] sm:$0x10] %v2422
        %v2424 = vld [vmem:[#allocation2 + $0x10] sm:$0x10]
        %v2425 = vsel %vm2417, 0, %v2424
        %2426 = vst [vmem:[#allocation2 + $0x10] sm:$0x10] %v2425
        %v2427 = vld [vmem:[#allocation2 + $0x18] sm:$0x10]
        %v2428 = vsel %vm2417, 0, %v2427
        %2429 = vst [vmem:[#allocation2 + $0x18] sm:$0x10] %v2428
        %v2430 = vld [vmem:[#allocation2 + $0x20] sm:$0x10]
        %v2431 = vsel %vm2417, 0, %v2430
        %2432 = vst [vmem:[#allocation2 + $0x20] sm:$0x10] %v2431
        %v2433 = vld [vmem:[#allocation2 + $0x28] sm:$0x10]
        %v2434 = vsel %vm2417, 0, %v2433
        %2435 = vst [vmem:[#allocation2 + $0x28] sm:$0x10] %v2434
        %v2436 = vld [vmem:[#allocation2 + $0x30] sm:$0x10]
        %v2437 = vsel %vm2417, 0, %v2436
        %2438 = vst [vmem:[#allocation2 + $0x30] sm:$0x10] %v2437
        %v2439 = vld [vmem:[#allocation2 + $0x38] sm:$0x10]
        %v2440 = vsel %vm2417, 0, %v2439
        %2441 = vst [vmem:[#allocation2 + $0x38] sm:$0x10] %v2440
        %v2442 = vld [vmem:[#allocation2 + $0x40] sm:$0x10]
        %v2443 = vsel %vm2417, 0, %v2442
        %2444 = vst [vmem:[#allocation2 + $0x40] sm:$0x10] %v2443
        %v2445 = vld [vmem:[#allocation2 + $0x48] sm:$0x10]
        %v2446 = vsel %vm2417, 0, %v2445
        %2447 = vst [vmem:[#allocation2 + $0x48] sm:$0x10] %v2446
        %v2452 = vunpack.c.l.b16 %v2375
        %v2453 = vunpack.c.h.b16 %v2375
        %v2454 = vunpack.c.l.b16 %v2376
        %v2455 = vunpack.c.h.b16 %v2376
        %v2456 = vunpack.c.l.b16 %v2377
        %v2457 = vunpack.c.h.b16 %v2377
        %v2458 = vunpack.c.l.b16 %v2378
        %v2459 = vunpack.c.h.b16 %v2378
        %v2460 = vpack.c.b16 %v2452, %v2452
        %v2461 = vpack.c.b16 %v2453, %v2453
        %v2462 = vpack.c.b16 %v2454, %v2454
        %v2463 = vpack.c.b16 %v2455, %v2455
        %v2464 = vpack.c.b16 %v2456, %v2456
        %v2465 = vpack.c.b16 %v2457, %v2457
        %v2466 = vpack.c.b16 %v2458, %v2458
        %v2467 = vpack.c.b16 %v2459, %v2459
        %v2469 = vshrl.u32 %v2460, 16
        %v2471 = vrot.slane %v2469, 7
        %v2472 = vshll.u32 %v2460, 16
        %v2474 = vor.u32 %v2471, %v2472
        %v2476 = vshrl.u32 %v2461, 16
        %v2478 = vrot.slane %v2476, 7
        %v2479 = vshll.u32 %v2461, 16
        %v2481 = vor.u32 %v2478, %v2479
        %v2483 = vshrl.u32 %v2462, 16
        %v2485 = vrot.slane %v2483, 7
        %v2486 = vshll.u32 %v2462, 16
        %v2488 = vor.u32 %v2485, %v2486
        %v2490 = vshrl.u32 %v2463, 16
        %v2492 = vrot.slane %v2490, 7
        %v2493 = vshll.u32 %v2463, 16
        %v2495 = vor.u32 %v2492, %v2493
        %v2497 = vshrl.u32 %v2464, 16
        %v2499 = vrot.slane %v2497, 7
        %v2500 = vshll.u32 %v2464, 16
        %v2502 = vor.u32 %v2499, %v2500
        %v2504 = vshrl.u32 %v2465, 16
        %v2506 = vrot.slane %v2504, 7
        %v2507 = vshll.u32 %v2465, 16
        %v2509 = vor.u32 %v2506, %v2507
        %v2511 = vshrl.u32 %v2466, 16
        %v2513 = vrot.slane %v2511, 7
        %v2514 = vshll.u32 %v2466, 16
        %v2516 = vor.u32 %v2513, %v2514
        %v2518 = vshrl.u32 %v2467, 16
        %v2520 = vrot.slane %v2518, 7
        %v2521 = vshll.u32 %v2467, 16
        %v2523 = vor.u32 %v2520, %v2521
        %s2532 = scalar_lea.vmem [#allocation2], 8
        %vm2533 = vcmask 1044480
        %vm2534 = vsmask.f32 4354
        %vm2535 = vmand %vm2533, %vm2534
        %v2536 = vld [vmem:[%s2532] sm:$0x1f]
        %v2537 = vsel %vm2535, %v2474, %v2536
        %2538 = vst [vmem:[%s2532] sm:$0x1f] %v2537
        %v2539 = vld [vmem:[%s2532 + $0x8] sm:$0x1f]
        %v2540 = vsel %vm2535, %v2481, %v2539
        %2541 = vst [vmem:[%s2532 + $0x8] sm:$0x1f] %v2540
        %v2542 = vld [vmem:[%s2532 + $0x10] sm:$0x1f]
        %v2543 = vsel %vm2535, %v2488, %v2542
        %2544 = vst [vmem:[%s2532 + $0x10] sm:$0x1f] %v2543
        %v2545 = vld [vmem:[%s2532 + $0x18] sm:$0x1f]
        %v2546 = vsel %vm2535, %v2495, %v2545
        %2547 = vst [vmem:[%s2532 + $0x18] sm:$0x1f] %v2546
        %v2548 = vld [vmem:[%s2532 + $0x20] sm:$0x1f]
        %v2549 = vsel %vm2535, %v2502, %v2548
        %2550 = vst [vmem:[%s2532 + $0x20] sm:$0x1f] %v2549
        %v2551 = vld [vmem:[%s2532 + $0x28] sm:$0x1f]
        %v2552 = vsel %vm2535, %v2509, %v2551
        %2553 = vst [vmem:[%s2532 + $0x28] sm:$0x1f] %v2552
        %v2554 = vld [vmem:[%s2532 + $0x30] sm:$0x1f]
        %v2555 = vsel %vm2535, %v2516, %v2554
        %2556 = vst [vmem:[%s2532 + $0x30] sm:$0x1f] %v2555
        %v2557 = vld [vmem:[%s2532 + $0x38] sm:$0x1f]
        %v2558 = vsel %vm2535, %v2523, %v2557
        %2559 = vst [vmem:[%s2532 + $0x38] sm:$0x1f] %v2558
        %v2560 = vld [vmem:[%s1187] sm:$0xf]
        %v2561 = vld [vmem:[%s1187 + $0x8] sm:$0xf]
        %v2562 = vld [vmem:[%s1187 + $0x10] sm:$0xf]
        %v2563 = vld [vmem:[%s1187 + $0x18] sm:$0xf]
        %v2564 = vld [vmem:[%s1187 + $0x20] sm:$0xf]
        %v2565 = vld [vmem:[%s1187 + $0x28] sm:$0xf]
        %v2566 = vld [vmem:[%s1187 + $0x30] sm:$0xf]
        %v2567 = vld [vmem:[%s1187 + $0x38] sm:$0xf]
        %v2568 = vld [vmem:[#allocation10] sm:$0xf]
        %v2569 = vld [vmem:[#allocation10 + $0x4] sm:$0xf]
        %v2570 = vld [vmem:[#allocation10 + $0x8] sm:$0xf]
        %v2571 = vld [vmem:[#allocation10 + $0xc] sm:$0xf]
        %v2572 = vld [vmem:[#allocation10 + $0x10] sm:$0xf]
        %v2573 = vld [vmem:[#allocation10 + $0x14] sm:$0xf]
        %v2574 = vld [vmem:[#allocation10 + $0x18] sm:$0xf]
        %v2575 = vld [vmem:[#allocation10 + $0x1c] sm:$0xf]
        %v2576 = vld [vmem:[#allocation10 + $0x20] sm:$0xf]
        %v2577 = vld [vmem:[#allocation10 + $0x24] sm:$0xf]
        %v2578 = vld [vmem:[#allocation10 + $0x28] sm:$0xf]
        %v2579 = vld [vmem:[#allocation10 + $0x2c] sm:$0xf]
        %v2580 = vld [vmem:[#allocation10 + $0x30] sm:$0xf]
        %v2581 = vld [vmem:[#allocation10 + $0x34] sm:$0xf]
        %v2582 = vld [vmem:[#allocation10 + $0x38] sm:$0xf]
        %v2583 = vld [vmem:[#allocation10 + $0x3c] sm:$0xf]
        %v2584 = vld [vmem:[%s6] sm:$0x1]
        %v2586 = vlaneseq
        %v2587 = vshrl.u32 %v2586, 7
        %v2588 = vsub.s32 0, %v2587
        %v2589 = vrot.slane %v2584, %v2588
        %v2599 = vunpack.c.l.b16 %v2560
        %v2600 = vunpack.c.l.b16 %v2561
        %v2601 = vunpack.c.l.b16 %v2562
        %v2602 = vunpack.c.l.b16 %v2563
        %v2603 = vunpack.c.l.b16 %v2564
        %v2604 = vunpack.c.l.b16 %v2565
        %v2605 = vunpack.c.l.b16 %v2566
        %v2606 = vunpack.c.l.b16 %v2567
        %v2607 = vpack.c.b16 %v2600, %v2599
        %v2608 = vpack.c.b16 %v2602, %v2601
        %v2609 = vpack.c.b16 %v2604, %v2603
        %v2610 = vpack.c.b16 %v2606, %v2605
        %v2631 = vunpack.c.l.b16 %v2568
        %v2632 = vunpack.c.l.b16 %v2569
        %v2633 = vunpack.c.l.b16 %v2570
        %v2634 = vunpack.c.l.b16 %v2571
        %v2635 = vunpack.c.l.b16 %v2572
        %v2636 = vunpack.c.l.b16 %v2573
        %v2637 = vunpack.c.l.b16 %v2574
        %v2638 = vunpack.c.l.b16 %v2575
        %v2639 = vunpack.c.l.b16 %v2576
        %v2640 = vunpack.c.l.b16 %v2577
        %v2641 = vunpack.c.l.b16 %v2578
        %v2642 = vunpack.c.l.b16 %v2579
        %v2643 = vunpack.c.l.b16 %v2580
        %v2644 = vunpack.c.l.b16 %v2581
        %v2645 = vunpack.c.l.b16 %v2582
        %v2646 = vunpack.c.l.b16 %v2583
        %v2647 = vpack.c.b16 %v2632, %v2631
        %v2648 = vpack.c.b16 %v2634, %v2633
        %v2649 = vpack.c.b16 %v2636, %v2635
        %v2650 = vpack.c.b16 %v2638, %v2637
        %v2651 = vpack.c.b16 %v2640, %v2639
        %v2652 = vpack.c.b16 %v2642, %v2641
        %v2653 = vpack.c.b16 %v2644, %v2643
        %v2654 = vpack.c.b16 %v2646, %v2645
        %2663 = vmatprep.subr.bf16.mxu0 0
        %2664 = vmatpush1.bf16.msra.mxu0 %v2647
        %2665 = vmatprep.subr.bf16.mxu0 0
        %2666 = vmatpush1.bf16.msra.mxu0 %v2648
        %2667 = vmatprep.subr.bf16.mxu0 0
        %2668 = vmatpush1.bf16.msra.mxu0 %v2649
        %2669 = vmatprep.subr.bf16.mxu0 0
        %2670 = vmatpush1.bf16.msra.mxu0 %v2650
        %2671 = vmatprep.subr.bf16.mxu0 0
        %2672 = vmatpush1.bf16.msra.mxu0 %v2651
        %2673 = vmatprep.subr.bf16.mxu0 0
        %2674 = vmatpush1.bf16.msra.mxu0 %v2652
        %2675 = vmatprep.subr.bf16.mxu0 0
        %2676 = vmatpush1.bf16.msra.mxu0 %v2653
        %2677 = vmatprep.subr.bf16.mxu0 0
        %2678 = vmatpush1.bf16.msra.mxu0 %v2654
        %2679 = vmatprep.subr.bf16.mxu0 0
        %2680 = vmatpush1.bf16.msra.mxu0 0
        %2681 = vmatprep.subr.bf16.mxu0 0
        %2682 = vmatpush1.bf16.msra.mxu0 0
        %2683 = vmatprep.subr.bf16.mxu0 0
        %2684 = vmatpush1.bf16.msra.mxu0 0
        %2685 = vmatprep.subr.bf16.mxu0 0
        %2686 = vmatpush1.bf16.msra.mxu0 0
        %2687 = vmatprep.subr.bf16.mxu0 0
        %2688 = vmatpush1.bf16.msra.mxu0 0
        %2689 = vmatprep.subr.bf16.mxu0 0
        %2690 = vmatpush1.bf16.msra.mxu0 0
        %2691 = vmatprep.subr.bf16.mxu0 0
        %2692 = vmatpush1.bf16.msra.mxu0 0
        %2693 = vmatprep.subr.bf16.mxu0 0
        %2694 = vmatpush1.bf16.msra.mxu0 0
        %2695 = vmatprep.mubr.bf16.mxu0 0
        %2696 = vmatmul.mubr.bf16.gmra.mrb[0].mxu0 %v2607
        %v2697 = vpop.f32.mrb[0].mxu0
        %v2698 = vadd.f32 %v2589, %v2697
        %v2699 = vpop.f32.mrb[0].mxu0
        %v2700 = vpop.f32.mrb[0].mxu0
        %v2701 = vadd.f32 %v2589, %v2700
        %v2702 = vpop.f32.mrb[0].mxu0
        %2703 = vmatprep.mubr.bf16.mxu0 0
        %2704 = vmatmul.mubr.bf16.gmra.mrb[0].mxu0 %v2608
        %v2705 = vpop.f32.mrb[0].mxu0
        %v2706 = vadd.f32 %v2589, %v2705
        %v2707 = vpop.f32.mrb[0].mxu0
        %v2708 = vpop.f32.mrb[0].mxu0
        %v2709 = vadd.f32 %v2589, %v2708
        %v2710 = vpop.f32.mrb[0].mxu0
        %2711 = vmatprep.mubr.bf16.mxu0 0
        %2712 = vmatmul.mubr.bf16.gmra.mrb[0].mxu0 %v2609
        %v2713 = vpop.f32.mrb[0].mxu0
        %v2714 = vadd.f32 %v2589, %v2713
        %v2715 = vpop.f32.mrb[0].mxu0
        %v2716 = vpop.f32.mrb[0].mxu0
        %v2717 = vadd.f32 %v2589, %v2716
        %v2718 = vpop.f32.mrb[0].mxu0
        %2719 = vmatprep.mubr.bf16.mxu0 0
        %2720 = vmatmul.mubr.bf16.gmra.mrb[0].mxu0 %v2610
        %v2721 = vpop.f32.mrb[0].mxu0
        %v2722 = vadd.f32 %v2589, %v2721
        %v2723 = vpop.f32.mrb[0].mxu0
        %v2724 = vpop.f32.mrb[0].mxu0
        %v2725 = vadd.f32 %v2589, %v2724
        %v2726 = vpop.f32.mrb[0].mxu0
        %2727 = vdwg.mxu0
        %2728 = vst [vmem:[#allocation3] sm:$0xff] %v2698
        %2729 = vst [vmem:[#allocation3 + $0x8] sm:$0xff] %v2701
        %2730 = vst [vmem:[#allocation3 + $0x10] sm:$0xff] %v2706
        %2731 = vst [vmem:[#allocation3 + $0x18] sm:$0xff] %v2709
        %2732 = vst [vmem:[#allocation3 + $0x20] sm:$0xff] %v2714
        %2733 = vst [vmem:[#allocation3 + $0x28] sm:$0xff] %v2717
        %2734 = vst [vmem:[#allocation3 + $0x30] sm:$0xff] %v2722
        %2735 = vst [vmem:[#allocation3 + $0x38] sm:$0xff] %v2725
        %v2736 = vld [vmem:[#allocation2] sm:$0xf]
        %v2737 = vld [vmem:[#allocation2 + $0x8] sm:$0xf]
        %v2738 = vld [vmem:[#allocation2 + $0x10] sm:$0xf]
        %v2739 = vld [vmem:[#allocation2 + $0x18] sm:$0xf]
        %v2740 = vld [vmem:[#allocation2 + $0x20] sm:$0xf]
        %v2741 = vld [vmem:[#allocation2 + $0x28] sm:$0xf]
        %v2742 = vld [vmem:[#allocation2 + $0x30] sm:$0xf]
        %v2743 = vld [vmem:[#allocation2 + $0x38] sm:$0xf]
        %v2744 = vld [vmem:[#allocation3] sm:$0xff]
        %v2745 = vld [vmem:[#allocation3 + $0x8] sm:$0xff]
        %v2746 = vld [vmem:[#allocation3 + $0x10] sm:$0xff]
        %v2747 = vld [vmem:[#allocation3 + $0x18] sm:$0xff]
        %v2748 = vld [vmem:[#allocation3 + $0x20] sm:$0xff]
        %v2749 = vld [vmem:[#allocation3 + $0x28] sm:$0xff]
        %v2750 = vld [vmem:[#allocation3 + $0x30] sm:$0xff]
        %v2751 = vld [vmem:[#allocation3 + $0x38] sm:$0xff]
        %v2752 = vld [vmem:[#allocation9] sm:$0xf]
        %v2753 = vld [vmem:[#allocation9 + $0x4] sm:$0xf]
        %v2754 = vld [vmem:[#allocation9 + $0x8] sm:$0xf]
        %v2755 = vld [vmem:[#allocation9 + $0xc] sm:$0xf]
        %v2756 = vld [vmem:[#allocation9 + $0x10] sm:$0xf]
        %v2757 = vld [vmem:[#allocation9 + $0x14] sm:$0xf]
        %v2758 = vld [vmem:[#allocation9 + $0x18] sm:$0xf]
        %v2759 = vld [vmem:[#allocation9 + $0x1c] sm:$0xf]
        %v2760 = vld [vmem:[#allocation9 + $0x20] sm:$0xf]
        %v2761 = vld [vmem:[#allocation9 + $0x24] sm:$0xf]
        %v2762 = vld [vmem:[#allocation9 + $0x28] sm:$0xf]
        %v2763 = vld [vmem:[#allocation9 + $0x2c] sm:$0xf]
        %v2764 = vld [vmem:[#allocation9 + $0x30] sm:$0xf]
        %v2765 = vld [vmem:[#allocation9 + $0x34] sm:$0xf]
        %v2766 = vld [vmem:[#allocation9 + $0x38] sm:$0xf]
        %v2767 = vld [vmem:[#allocation9 + $0x3c] sm:$0xf]
        %v2776 = vunpack.c.l.b16 %v2736
        %v2777 = vunpack.c.l.b16 %v2737
        %v2778 = vunpack.c.l.b16 %v2738
        %v2779 = vunpack.c.l.b16 %v2739
        %v2780 = vunpack.c.l.b16 %v2740
        %v2781 = vunpack.c.l.b16 %v2741
        %v2782 = vunpack.c.l.b16 %v2742
        %v2783 = vunpack.c.l.b16 %v2743
        %v2784 = vpack.c.b16 %v2777, %v2776
        %v2785 = vpack.c.b16 %v2779, %v2778
        %v2786 = vpack.c.b16 %v2781, %v2780
        %v2787 = vpack.c.b16 %v2783, %v2782
        %v2808 = vunpack.c.l.b16 %v2752
        %v2809 = vunpack.c.l.b16 %v2753
        %v2810 = vunpack.c.l.b16 %v2754
        %v2811 = vunpack.c.l.b16 %v2755
        %v2812 = vunpack.c.l.b16 %v2756
        %v2813 = vunpack.c.l.b16 %v2757
        %v2814 = vunpack.c.l.b16 %v2758
        %v2815 = vunpack.c.l.b16 %v2759
        %v2816 = vunpack.c.l.b16 %v2760
        %v2817 = vunpack.c.l.b16 %v2761
        %v2818 = vunpack.c.l.b16 %v2762
        %v2819 = vunpack.c.l.b16 %v2763
        %v2820 = vunpack.c.l.b16 %v2764
        %v2821 = vunpack.c.l.b16 %v2765
        %v2822 = vunpack.c.l.b16 %v2766
        %v2823 = vunpack.c.l.b16 %v2767
        %v2824 = vpack.c.b16 %v2809, %v2808
        %v2825 = vpack.c.b16 %v2811, %v2810
        %v2826 = vpack.c.b16 %v2813, %v2812
        %v2827 = vpack.c.b16 %v2815, %v2814
        %v2828 = vpack.c.b16 %v2817, %v2816
        %v2829 = vpack.c.b16 %v2819, %v2818
        %v2830 = vpack.c.b16 %v2821, %v2820
        %v2831 = vpack.c.b16 %v2823, %v2822
        %2840 = vmatprep.subr.bf16.mxu0 0
        %2841 = vmatpush1.bf16.msra.mxu0 %v2824
        %2842 = vmatprep.subr.bf16.mxu0 0
        %2843 = vmatpush1.bf16.msra.mxu0 %v2825
        %2844 = vmatprep.subr.bf16.mxu0 0
        %2845 = vmatpush1.bf16.msra.mxu0 %v2826
        %2846 = vmatprep.subr.bf16.mxu0 0
        %2847 = vmatpush1.bf16.msra.mxu0 %v2827
        %2848 = vmatprep.subr.bf16.mxu0 0
        %2849 = vmatpush1.bf16.msra.mxu0 %v2828
        %2850 = vmatprep.subr.bf16.mxu0 0
        %2851 = vmatpush1.bf16.msra.mxu0 %v2829
        %2852 = vmatprep.subr.bf16.mxu0 0
        %2853 = vmatpush1.bf16.msra.mxu0 %v2830
        %2854 = vmatprep.subr.bf16.mxu0 0
        %2855 = vmatpush1.bf16.msra.mxu0 %v2831
        %2856 = vmatprep.subr.bf16.mxu0 0
        %2857 = vmatpush1.bf16.msra.mxu0 0
        %2858 = vmatprep.subr.bf16.mxu0 0
        %2859 = vmatpush1.bf16.msra.mxu0 0
        %2860 = vmatprep.subr.bf16.mxu0 0
        %2861 = vmatpush1.bf16.msra.mxu0 0
        %2862 = vmatprep.subr.bf16.mxu0 0
        %2863 = vmatpush1.bf16.msra.mxu0 0
        %2864 = vmatprep.subr.bf16.mxu0 0
        %2865 = vmatpush1.bf16.msra.mxu0 0
        %2866 = vmatprep.subr.bf16.mxu0 0
        %2867 = vmatpush1.bf16.msra.mxu0 0
        %2868 = vmatprep.subr.bf16.mxu0 0
        %2869 = vmatpush1.bf16.msra.mxu0 0
        %2870 = vmatprep.subr.bf16.mxu0 0
        %2871 = vmatpush1.bf16.msra.mxu0 0
        %2872 = vmatprep.mubr.bf16.mxu0 0
        %2873 = vmatmul.mubr.bf16.gmra.mrb[0].mxu0 %v2784
        %v2874 = vpop.f32.mrb[0].mxu0
        %v2875 = vadd.f32 0.0, %v2874
        %v2876 = vpop.f32.mrb[0].mxu0
        %v2877 = vpop.f32.mrb[0].mxu0
        %v2878 = vadd.f32 0.0, %v2877
        %v2879 = vpop.f32.mrb[0].mxu0
        %2880 = vmatprep.mubr.bf16.mxu0 0
        %2881 = vmatmul.mubr.bf16.gmra.mrb[0].mxu0 %v2785
        %v2882 = vpop.f32.mrb[0].mxu0
        %v2883 = vadd.f32 0.0, %v2882
        %v2884 = vpop.f32.mrb[0].mxu0
        %v2885 = vpop.f32.mrb[0].mxu0
        %v2886 = vadd.f32 0.0, %v2885
        %v2887 = vpop.f32.mrb[0].mxu0
        %2888 = vmatprep.mubr.bf16.mxu0 0
        %2889 = vmatmul.mubr.bf16.gmra.mrb[0].mxu0 %v2786
        %v2890 = vpop.f32.mrb[0].mxu0
        %v2891 = vadd.f32 0.0, %v2890
        %v2892 = vpop.f32.mrb[0].mxu0
        %v2893 = vpop.f32.mrb[0].mxu0
        %v2894 = vadd.f32 0.0, %v2893
        %v2895 = vpop.f32.mrb[0].mxu0
        %2896 = vmatprep.mubr.bf16.mxu0 0
        %2897 = vmatmul.mubr.bf16.gmra.mrb[0].mxu0 %v2787
        %v2898 = vpop.f32.mrb[0].mxu0
        %v2899 = vadd.f32 0.0, %v2898
        %v2900 = vpop.f32.mrb[0].mxu0
        %v2901 = vpop.f32.mrb[0].mxu0
        %v2902 = vadd.f32 0.0, %v2901
        %v2903 = vpop.f32.mrb[0].mxu0
        %2904 = vdwg.mxu0
        %v2905 = vadd.f32 %v2744, %v2875
        %v2906 = vadd.f32 %v2745, %v2878
        %v2907 = vadd.f32 %v2746, %v2883
        %v2908 = vadd.f32 %v2747, %v2886
        %v2909 = vadd.f32 %v2748, %v2891
        %v2910 = vadd.f32 %v2749, %v2894
        %v2911 = vadd.f32 %v2750, %v2899
        %v2912 = vadd.f32 %v2751, %v2902
        %2913 = vst [vmem:[#allocation3] sm:$0xff] %v2905
        %2914 = vst [vmem:[#allocation3 + $0x8] sm:$0xff] %v2906
        %2915 = vst [vmem:[#allocation3 + $0x10] sm:$0xff] %v2907
        %2916 = vst [vmem:[#allocation3 + $0x18] sm:$0xff] %v2908
        %2917 = vst [vmem:[#allocation3 + $0x20] sm:$0xff] %v2909
        %2918 = vst [vmem:[#allocation3 + $0x28] sm:$0xff] %v2910
        %2919 = vst [vmem:[#allocation3 + $0x30] sm:$0xff] %v2911
        %2920 = vst [vmem:[#allocation3 + $0x38] sm:$0xff] %v2912
        %v2921 = vld [vmem:[#allocation2] sm:$0x1f]
        %v2922 = vld [vmem:[#allocation2 + $0x8] sm:$0x1f]
        %v2923 = vld [vmem:[#allocation2 + $0x10] sm:$0x1f]
        %v2924 = vld [vmem:[#allocation2 + $0x18] sm:$0x1f]
        %v2925 = vld [vmem:[#allocation2 + $0x20] sm:$0x1f]
        %v2926 = vld [vmem:[#allocation2 + $0x28] sm:$0x1f]
        %v2927 = vld [vmem:[#allocation2 + $0x30] sm:$0x1f]
        %v2928 = vld [vmem:[#allocation2 + $0x38] sm:$0x1f]
        %v2929 = vld [vmem:[#allocation3] sm:$0xff]
        %v2930 = vld [vmem:[#allocation3 + $0x8] sm:$0xff]
        %v2931 = vld [vmem:[#allocation3 + $0x10] sm:$0xff]
        %v2932 = vld [vmem:[#allocation3 + $0x18] sm:$0xff]
        %v2933 = vld [vmem:[#allocation3 + $0x20] sm:$0xff]
        %v2934 = vld [vmem:[#allocation3 + $0x28] sm:$0xff]
        %v2935 = vld [vmem:[#allocation3 + $0x30] sm:$0xff]
        %v2936 = vld [vmem:[#allocation3 + $0x38] sm:$0xff]
        %v2945 = vunpack.c.l.b16 %v2921
        %v2946 = vunpack.c.h.b16 %v2921
        %v2947 = vunpack.c.l.b16 %v2922
        %v2948 = vunpack.c.h.b16 %v2922
        %v2949 = vunpack.c.l.b16 %v2923
        %v2950 = vunpack.c.h.b16 %v2923
        %v2951 = vunpack.c.l.b16 %v2924
        %v2952 = vunpack.c.h.b16 %v2924
        %v2953 = vunpack.c.l.b16 %v2925
        %v2954 = vunpack.c.h.b16 %v2925
        %v2955 = vunpack.c.l.b16 %v2926
        %v2956 = vunpack.c.h.b16 %v2926
        %v2957 = vunpack.c.l.b16 %v2927
        %v2958 = vunpack.c.h.b16 %v2927
        %v2959 = vunpack.c.l.b16 %v2928
        %v2960 = vunpack.c.h.b16 %v2928
        %v2961 = vpack.c.b16 %v2945, %v2945
        %v2962 = vpack.c.b16 %v2946, %v2946
        %v2963 = vpack.c.b16 %v2947, %v2947
        %v2964 = vpack.c.b16 %v2948, %v2948
        %v2965 = vpack.c.b16 %v2949, %v2949
        %v2966 = vpack.c.b16 %v2950, %v2950
        %v2967 = vpack.c.b16 %v2951, %v2951
        %v2968 = vpack.c.b16 %v2952, %v2952
        %v2969 = vpack.c.b16 %v2953, %v2953
        %v2970 = vpack.c.b16 %v2954, %v2954
        %v2971 = vpack.c.b16 %v2955, %v2955
        %v2972 = vpack.c.b16 %v2956, %v2956
        %v2973 = vpack.c.b16 %v2957, %v2957
        %v2974 = vpack.c.b16 %v2958, %v2958
        %v2975 = vpack.c.b16 %v2959, %v2959
        %v2976 = vpack.c.b16 %v2960, %v2960
        %v2978 = vshrl.u32 %v2961, 16
        %v2980 = vrot.slane %v2978, 4
        %v2981 = vshll.u32 %v2961, 16
        %v2983 = vrot.slane %v2981, 5
        %v2984 = vor.u32 %v2980, %v2983
        %v2985 = vrot.slane %v2984, 4
        %v2987 = vshll.u32 %v2962, 16
        %v2989 = vrot.slane %v2987, 5
        %v2990 = vsel %vm717, %v2985, %v2989
        %v2992 = vshrl.u32 %v2963, 16
        %v2994 = vrot.slane %v2992, 4
        %v2995 = vshll.u32 %v2963, 16
        %v2997 = vrot.slane %v2995, 5
        %v2998 = vor.u32 %v2994, %v2997
        %v2999 = vrot.slane %v2998, 4
        %v3001 = vshll.u32 %v2964, 16
        %v3003 = vrot.slane %v3001, 5
        %v3004 = vsel %vm717, %v2999, %v3003
        %v3006 = vshrl.u32 %v2965, 16
        %v3008 = vrot.slane %v3006, 4
        %v3009 = vshll.u32 %v2965, 16
        %v3011 = vrot.slane %v3009, 5
        %v3012 = vor.u32 %v3008, %v3011
        %v3013 = vrot.slane %v3012, 4
        %v3015 = vshll.u32 %v2966, 16
        %v3017 = vrot.slane %v3015, 5
        %v3018 = vsel %vm717, %v3013, %v3017
        %v3020 = vshrl.u32 %v2967, 16
        %v3022 = vrot.slane %v3020, 4
        %v3023 = vshll.u32 %v2967, 16
        %v3025 = vrot.slane %v3023, 5
        %v3026 = vor.u32 %v3022, %v3025
        %v3027 = vrot.slane %v3026, 4
        %v3029 = vshll.u32 %v2968, 16
        %v3031 = vrot.slane %v3029, 5
        %v3032 = vsel %vm717, %v3027, %v3031
        %v3034 = vshrl.u32 %v2969, 16
        %v3036 = vrot.slane %v3034, 4
        %v3037 = vshll.u32 %v2969, 16
        %v3039 = vrot.slane %v3037, 5
        %v3040 = vor.u32 %v3036, %v3039
        %v3041 = vrot.slane %v3040, 4
        %v3043 = vshll.u32 %v2970, 16
        %v3045 = vrot.slane %v3043, 5
        %v3046 = vsel %vm717, %v3041, %v3045
        %v3048 = vshrl.u32 %v2971, 16
        %v3050 = vrot.slane %v3048, 4
        %v3051 = vshll.u32 %v2971, 16
        %v3053 = vrot.slane %v3051, 5
        %v3054 = vor.u32 %v3050, %v3053
        %v3055 = vrot.slane %v3054, 4
        %v3057 = vshll.u32 %v2972, 16
        %v3059 = vrot.slane %v3057, 5
        %v3060 = vsel %vm717, %v3055, %v3059
        %v3062 = vshrl.u32 %v2973, 16
        %v3064 = vrot.slane %v3062, 4
        %v3065 = vshll.u32 %v2973, 16
        %v3067 = vrot.slane %v3065, 5
        %v3068 = vor.u32 %v3064, %v3067
        %v3069 = vrot.slane %v3068, 4
        %v3071 = vshll.u32 %v2974, 16
        %v3073 = vrot.slane %v3071, 5
        %v3074 = vsel %vm717, %v3069, %v3073
        %v3076 = vshrl.u32 %v2975, 16
        %v3078 = vrot.slane %v3076, 4
        %v3079 = vshll.u32 %v2975, 16
        %v3081 = vrot.slane %v3079, 5
        %v3082 = vor.u32 %v3078, %v3081
        %v3083 = vrot.slane %v3082, 4
        %v3085 = vshll.u32 %v2976, 16
        %v3087 = vrot.slane %v3085, 5
        %v3088 = vsel %vm717, %v3083, %v3087
        %s3089 = scalar_lea.vmem [#allocation9], 64
        %v3090 = vld [vmem:[%s3089] sm:$0xf]
        %v3091 = vld [vmem:[%s3089 + $0x4] sm:$0xf]
        %v3092 = vld [vmem:[%s3089 + $0x8] sm:$0xf]
        %v3093 = vld [vmem:[%s3089 + $0xc] sm:$0xf]
        %v3094 = vld [vmem:[%s3089 + $0x10] sm:$0xf]
        %v3095 = vld [vmem:[%s3089 + $0x14] sm:$0xf]
        %v3096 = vld [vmem:[%s3089 + $0x18] sm:$0xf]
        %v3097 = vld [vmem:[%s3089 + $0x1c] sm:$0xf]
        %v3098 = vld [vmem:[%s3089 + $0x20] sm:$0xf]
        %v3099 = vld [vmem:[%s3089 + $0x24] sm:$0xf]
        %v3100 = vld [vmem:[%s3089 + $0x28] sm:$0xf]
        %v3101 = vld [vmem:[%s3089 + $0x2c] sm:$0xf]
        %v3102 = vld [vmem:[%s3089 + $0x30] sm:$0xf]
        %v3103 = vld [vmem:[%s3089 + $0x34] sm:$0xf]
        %v3104 = vld [vmem:[%s3089 + $0x38] sm:$0xf]
        %v3105 = vld [vmem:[%s3089 + $0x3c] sm:$0xf]
        %v3106 = vunpack.c.l.b16 %v2990
        %v3107 = vunpack.c.l.b16 %v3004
        %v3108 = vunpack.c.l.b16 %v3018
        %v3109 = vunpack.c.l.b16 %v3032
        %v3110 = vunpack.c.l.b16 %v3046
        %v3111 = vunpack.c.l.b16 %v3060
        %v3112 = vunpack.c.l.b16 %v3074
        %v3113 = vunpack.c.l.b16 %v3088
        %v3114 = vpack.c.b16 %v3107, %v3106
        %v3115 = vpack.c.b16 %v3109, %v3108
        %v3116 = vpack.c.b16 %v3111, %v3110
        %v3117 = vpack.c.b16 %v3113, %v3112
        %v3138 = vunpack.c.l.b16 %v3090
        %v3139 = vunpack.c.l.b16 %v3091
        %v3140 = vunpack.c.l.b16 %v3092
        %v3141 = vunpack.c.l.b16 %v3093
        %v3142 = vunpack.c.l.b16 %v3094
        %v3143 = vunpack.c.l.b16 %v3095
        %v3144 = vunpack.c.l.b16 %v3096
        %v3145 = vunpack.c.l.b16 %v3097
        %v3146 = vunpack.c.l.b16 %v3098
        %v3147 = vunpack.c.l.b16 %v3099
        %v3148 = vunpack.c.l.b16 %v3100
        %v3149 = vunpack.c.l.b16 %v3101
        %v3150 = vunpack.c.l.b16 %v3102
        %v3151 = vunpack.c.l.b16 %v3103
        %v3152 = vunpack.c.l.b16 %v3104
        %v3153 = vunpack.c.l.b16 %v3105
        %v3154 = vpack.c.b16 %v3139, %v3138
        %v3155 = vpack.c.b16 %v3141, %v3140
        %v3156 = vpack.c.b16 %v3143, %v3142
        %v3157 = vpack.c.b16 %v3145, %v3144
        %v3158 = vpack.c.b16 %v3147, %v3146
        %v3159 = vpack.c.b16 %v3149, %v3148
        %v3160 = vpack.c.b16 %v3151, %v3150
        %v3161 = vpack.c.b16 %v3153, %v3152
        %3170 = vmatprep.subr.bf16.mxu0 0
        %3171 = vmatpush1.bf16.msra.mxu0 %v3154
        %3172 = vmatprep.subr.bf16.mxu0 0
        %3173 = vmatpush1.bf16.msra.mxu0 %v3155
        %3174 = vmatprep.subr.bf16.mxu0 0
        %3175 = vmatpush1.bf16.msra.mxu0 %v3156
        %3176 = vmatprep.subr.bf16.mxu0 0
        %3177 = vmatpush1.bf16.msra.mxu0 %v3157
        %3178 = vmatprep.subr.bf16.mxu0 0
        %3179 = vmatpush1.bf16.msra.mxu0 %v3158
        %3180 = vmatprep.subr.bf16.mxu0 0
        %3181 = vmatpush1.bf16.msra.mxu0 %v3159
        %3182 = vmatprep.subr.bf16.mxu0 0
        %3183 = vmatpush1.bf16.msra.mxu0 %v3160
        %3184 = vmatprep.subr.bf16.mxu0 0
        %3185 = vmatpush1.bf16.msra.mxu0 %v3161
        %3186 = vmatprep.subr.bf16.mxu0 0
        %3187 = vmatpush1.bf16.msra.mxu0 0
        %3188 = vmatprep.subr.bf16.mxu0 0
        %3189 = vmatpush1.bf16.msra.mxu0 0
        %3190 = vmatprep.subr.bf16.mxu0 0
        %3191 = vmatpush1.bf16.msra.mxu0 0
        %3192 = vmatprep.subr.bf16.mxu0 0
        %3193 = vmatpush1.bf16.msra.mxu0 0
        %3194 = vmatprep.subr.bf16.mxu0 0
        %3195 = vmatpush1.bf16.msra.mxu0 0
        %3196 = vmatprep.subr.bf16.mxu0 0
        %3197 = vmatpush1.bf16.msra.mxu0 0
        %3198 = vmatprep.subr.bf16.mxu0 0
        %3199 = vmatpush1.bf16.msra.mxu0 0
        %3200 = vmatprep.subr.bf16.mxu0 0
        %3201 = vmatpush1.bf16.msra.mxu0 0
        %3202 = vmatprep.mubr.bf16.mxu0 0
        %3203 = vmatmul.mubr.bf16.gmra.mrb[0].mxu0 %v3114
        %v3204 = vpop.f32.mrb[0].mxu0
        %v3205 = vadd.f32 0.0, %v3204
        %v3206 = vpop.f32.mrb[0].mxu0
        %v3207 = vpop.f32.mrb[0].mxu0
        %v3208 = vadd.f32 0.0, %v3207
        %v3209 = vpop.f32.mrb[0].mxu0
        %3210 = vmatprep.mubr.bf16.mxu0 0
        %3211 = vmatmul.mubr.bf16.gmra.mrb[0].mxu0 %v3115
        %v3212 = vpop.f32.mrb[0].mxu0
        %v3213 = vadd.f32 0.0, %v3212
        %v3214 = vpop.f32.mrb[0].mxu0
        %v3215 = vpop.f32.mrb[0].mxu0
        %v3216 = vadd.f32 0.0, %v3215
        %v3217 = vpop.f32.mrb[0].mxu0
        %3218 = vmatprep.mubr.bf16.mxu0 0
        %3219 = vmatmul.mubr.bf16.gmra.mrb[0].mxu0 %v3116
        %v3220 = vpop.f32.mrb[0].mxu0
        %v3221 = vadd.f32 0.0, %v3220
        %v3222 = vpop.f32.mrb[0].mxu0
        %v3223 = vpop.f32.mrb[0].mxu0
        %v3224 = vadd.f32 0.0, %v3223
        %v3225 = vpop.f32.mrb[0].mxu0
        %3226 = vmatprep.mubr.bf16.mxu0 0
        %3227 = vmatmul.mubr.bf16.gmra.mrb[0].mxu0 %v3117
        %v3228 = vpop.f32.mrb[0].mxu0
        %v3229 = vadd.f32 0.0, %v3228
        %v3230 = vpop.f32.mrb[0].mxu0
        %v3231 = vpop.f32.mrb[0].mxu0
        %v3232 = vadd.f32 0.0, %v3231
        %v3233 = vpop.f32.mrb[0].mxu0
        %3234 = vdwg.mxu0
        %v3235 = vadd.f32 %v2929, %v3205
        %v3236 = vadd.f32 %v2930, %v3208
        %v3237 = vadd.f32 %v2931, %v3213
        %v3238 = vadd.f32 %v2932, %v3216
        %v3239 = vadd.f32 %v2933, %v3221
        %v3240 = vadd.f32 %v2934, %v3224
        %v3241 = vadd.f32 %v2935, %v3229
        %v3242 = vadd.f32 %v2936, %v3232
        %3243 = vst [vmem:[#allocation3] sm:$0xff] %v3235
        %3244 = vst [vmem:[#allocation3 + $0x8] sm:$0xff] %v3236
        %3245 = vst [vmem:[#allocation3 + $0x10] sm:$0xff] %v3237
        %3246 = vst [vmem:[#allocation3 + $0x18] sm:$0xff] %v3238
        %3247 = vst [vmem:[#allocation3 + $0x20] sm:$0xff] %v3239
        %3248 = vst [vmem:[#allocation3 + $0x28] sm:$0xff] %v3240
        %3249 = vst [vmem:[#allocation3 + $0x30] sm:$0xff] %v3241
        %3250 = vst [vmem:[#allocation3 + $0x38] sm:$0xff] %v3242
        %v3251 = vld [vmem:[#allocation2] sm:$0x1e]
        %v3252 = vld [vmem:[#allocation2 + $0x8] sm:$0x1e]
        %v3253 = vld [vmem:[#allocation2 + $0x10] sm:$0x1e]
        %v3254 = vld [vmem:[#allocation2 + $0x18] sm:$0x1e]
        %v3255 = vld [vmem:[#allocation2 + $0x20] sm:$0x1e]
        %v3256 = vld [vmem:[#allocation2 + $0x28] sm:$0x1e]
        %v3257 = vld [vmem:[#allocation2 + $0x30] sm:$0x1e]
        %v3258 = vld [vmem:[#allocation2 + $0x38] sm:$0x1e]
        %v3259 = vld [vmem:[#allocation3] sm:$0xff]
        %v3260 = vld [vmem:[#allocation3 + $0x8] sm:$0xff]
        %v3261 = vld [vmem:[#allocation3 + $0x10] sm:$0xff]
        %v3262 = vld [vmem:[#allocation3 + $0x18] sm:$0xff]
        %v3263 = vld [vmem:[#allocation3 + $0x20] sm:$0xff]
        %v3264 = vld [vmem:[#allocation3 + $0x28] sm:$0xff]
        %v3265 = vld [vmem:[#allocation3 + $0x30] sm:$0xff]
        %v3266 = vld [vmem:[#allocation3 + $0x38] sm:$0xff]
        %v3275 = vunpack.c.l.b16 %v3251
        %v3276 = vunpack.c.h.b16 %v3251
        %v3277 = vunpack.c.l.b16 %v3252
        %v3278 = vunpack.c.h.b16 %v3252
        %v3279 = vunpack.c.l.b16 %v3253
        %v3280 = vunpack.c.h.b16 %v3253
        %v3281 = vunpack.c.l.b16 %v3254
        %v3282 = vunpack.c.h.b16 %v3254
        %v3283 = vunpack.c.l.b16 %v3255
        %v3284 = vunpack.c.h.b16 %v3255
        %v3285 = vunpack.c.l.b16 %v3256
        %v3286 = vunpack.c.h.b16 %v3256
        %v3287 = vunpack.c.l.b16 %v3257
        %v3288 = vunpack.c.h.b16 %v3257
        %v3289 = vunpack.c.l.b16 %v3258
        %v3290 = vunpack.c.h.b16 %v3258
        %v3291 = vpack.c.b16 %v3275, %v3275
        %v3292 = vpack.c.b16 %v3276, %v3276
        %v3293 = vpack.c.b16 %v3277, %v3277
        %v3294 = vpack.c.b16 %v3278, %v3278
        %v3295 = vpack.c.b16 %v3279, %v3279
        %v3296 = vpack.c.b16 %v3280, %v3280
        %v3297 = vpack.c.b16 %v3281, %v3281
        %v3298 = vpack.c.b16 %v3282, %v3282
        %v3299 = vpack.c.b16 %v3283, %v3283
        %v3300 = vpack.c.b16 %v3284, %v3284
        %v3301 = vpack.c.b16 %v3285, %v3285
        %v3302 = vpack.c.b16 %v3286, %v3286
        %v3303 = vpack.c.b16 %v3287, %v3287
        %v3304 = vpack.c.b16 %v3288, %v3288
        %v3305 = vpack.c.b16 %v3289, %v3289
        %v3306 = vpack.c.b16 %v3290, %v3290
        %vm3307 = vcmask 1042432
        %vm3308 = vcmask 1046532
        %vm3309 = vmor %vm3307, %vm3308
        %v3310 = vrot.slane %v3291, 5
        %v3311 = vrot.slane %v3310, 4
        %v3312 = vrot.slane %v3292, 5
        %v3313 = vsel %vm3309, %v3311, %v3312
        %v3314 = vrot.slane %v3293, 5
        %v3315 = vrot.slane %v3314, 4
        %v3316 = vrot.slane %v3294, 5
        %v3317 = vsel %vm3309, %v3315, %v3316
        %v3318 = vrot.slane %v3295, 5
        %v3319 = vrot.slane %v3318, 4
        %v3320 = vrot.slane %v3296, 5
        %v3321 = vsel %vm3309, %v3319, %v3320
        %v3322 = vrot.slane %v3297, 5
        %v3323 = vrot.slane %v3322, 4
        %v3324 = vrot.slane %v3298, 5
        %v3325 = vsel %vm3309, %v3323, %v3324
        %v3326 = vrot.slane %v3299, 5
        %v3327 = vrot.slane %v3326, 4
        %v3328 = vrot.slane %v3300, 5
        %v3329 = vsel %vm3309, %v3327, %v3328
        %v3330 = vrot.slane %v3301, 5
        %v3331 = vrot.slane %v3330, 4
        %v3332 = vrot.slane %v3302, 5
        %v3333 = vsel %vm3309, %v3331, %v3332
        %v3334 = vrot.slane %v3303, 5
        %v3335 = vrot.slane %v3334, 4
        %v3336 = vrot.slane %v3304, 5
        %v3337 = vsel %vm3309, %v3335, %v3336
        %v3338 = vrot.slane %v3305, 5
        %v3339 = vrot.slane %v3338, 4
        %v3340 = vrot.slane %v3306, 5
        %v3341 = vsel %vm3309, %v3339, %v3340
        %s3342 = scalar_lea.vmem [#allocation9], 128
        %v3343 = vld [vmem:[%s3342] sm:$0xf]
        %v3344 = vld [vmem:[%s3342 + $0x4] sm:$0xf]
        %v3345 = vld [vmem:[%s3342 + $0x8] sm:$0xf]
        %v3346 = vld [vmem:[%s3342 + $0xc] sm:$0xf]
        %v3347 = vld [vmem:[%s3342 + $0x10] sm:$0xf]
        %v3348 = vld [vmem:[%s3342 + $0x14] sm:$0xf]
        %v3349 = vld [vmem:[%s3342 + $0x18] sm:$0xf]
        %v3350 = vld [vmem:[%s3342 + $0x1c] sm:$0xf]
        %v3351 = vld [vmem:[%s3342 + $0x20] sm:$0xf]
        %v3352 = vld [vmem:[%s3342 + $0x24] sm:$0xf]
        %v3353 = vld [vmem:[%s3342 + $0x28] sm:$0xf]
        %v3354 = vld [vmem:[%s3342 + $0x2c] sm:$0xf]
        %v3355 = vld [vmem:[%s3342 + $0x30] sm:$0xf]
        %v3356 = vld [vmem:[%s3342 + $0x34] sm:$0xf]
        %v3357 = vld [vmem:[%s3342 + $0x38] sm:$0xf]
        %v3358 = vld [vmem:[%s3342 + $0x3c] sm:$0xf]
        %v3359 = vunpack.c.l.b16 %v3313
        %v3360 = vunpack.c.l.b16 %v3317
        %v3361 = vunpack.c.l.b16 %v3321
        %v3362 = vunpack.c.l.b16 %v3325
        %v3363 = vunpack.c.l.b16 %v3329
        %v3364 = vunpack.c.l.b16 %v3333
        %v3365 = vunpack.c.l.b16 %v3337
        %v3366 = vunpack.c.l.b16 %v3341
        %v3367 = vpack.c.b16 %v3360, %v3359
        %v3368 = vpack.c.b16 %v3362, %v3361
        %v3369 = vpack.c.b16 %v3364, %v3363
        %v3370 = vpack.c.b16 %v3366, %v3365
        %v3391 = vunpack.c.l.b16 %v3343
        %v3392 = vunpack.c.l.b16 %v3344
        %v3393 = vunpack.c.l.b16 %v3345
        %v3394 = vunpack.c.l.b16 %v3346
        %v3395 = vunpack.c.l.b16 %v3347
        %v3396 = vunpack.c.l.b16 %v3348
        %v3397 = vunpack.c.l.b16 %v3349
        %v3398 = vunpack.c.l.b16 %v3350
        %v3399 = vunpack.c.l.b16 %v3351
        %v3400 = vunpack.c.l.b16 %v3352
        %v3401 = vunpack.c.l.b16 %v3353
        %v3402 = vunpack.c.l.b16 %v3354
        %v3403 = vunpack.c.l.b16 %v3355
        %v3404 = vunpack.c.l.b16 %v3356
        %v3405 = vunpack.c.l.b16 %v3357
        %v3406 = vunpack.c.l.b16 %v3358
        %v3407 = vpack.c.b16 %v3392, %v3391
        %v3408 = vpack.c.b16 %v3394, %v3393
        %v3409 = vpack.c.b16 %v3396, %v3395
        %v3410 = vpack.c.b16 %v3398, %v3397
        %v3411 = vpack.c.b16 %v3400, %v3399
        %v3412 = vpack.c.b16 %v3402, %v3401
        %v3413 = vpack.c.b16 %v3404, %v3403
        %v3414 = vpack.c.b16 %v3406, %v3405
        %3423 = vmatprep.subr.bf16.mxu0 0
        %3424 = vmatpush1.bf16.msra.mxu0 %v3407
        %3425 = vmatprep.subr.bf16.mxu0 0
        %3426 = vmatpush1.bf16.msra.mxu0 %v3408
        %3427 = vmatprep.subr.bf16.mxu0 0
        %3428 = vmatpush1.bf16.msra.mxu0 %v3409
        %3429 = vmatprep.subr.bf16.mxu0 0
        %3430 = vmatpush1.bf16.msra.mxu0 %v3410
        %3431 = vmatprep.subr.bf16.mxu0 0
        %3432 = vmatpush1.bf16.msra.mxu0 %v3411
        %3433 = vmatprep.subr.bf16.mxu0 0
        %3434 = vmatpush1.bf16.msra.mxu0 %v3412
        %3435 = vmatprep.subr.bf16.mxu0 0
        %3436 = vmatpush1.bf16.msra.mxu0 %v3413
        %3437 = vmatprep.subr.bf16.mxu0 0
        %3438 = vmatpush1.bf16.msra.mxu0 %v3414
        %3439 = vmatprep.subr.bf16.mxu0 0
        %3440 = vmatpush1.bf16.msra.mxu0 0
        %3441 = vmatprep.subr.bf16.mxu0 0
        %3442 = vmatpush1.bf16.msra.mxu0 0
        %3443 = vmatprep.subr.bf16.mxu0 0
        %3444 = vmatpush1.bf16.msra.mxu0 0
        %3445 = vmatprep.subr.bf16.mxu0 0
        %3446 = vmatpush1.bf16.msra.mxu0 0
        %3447 = vmatprep.subr.bf16.mxu0 0
        %3448 = vmatpush1.bf16.msra.mxu0 0
        %3449 = vmatprep.subr.bf16.mxu0 0
        %3450 = vmatpush1.bf16.msra.mxu0 0
        %3451 = vmatprep.subr.bf16.mxu0 0
        %3452 = vmatpush1.bf16.msra.mxu0 0
        %3453 = vmatprep.subr.bf16.mxu0 0
        %3454 = vmatpush1.bf16.msra.mxu0 0
        %3455 = vmatprep.mubr.bf16.mxu0 0
        %3456 = vmatmul.mubr.bf16.gmra.mrb[0].mxu0 %v3367
        %v3457 = vpop.f32.mrb[0].mxu0
        %v3458 = vadd.f32 0.0, %v3457
        %v3459 = vpop.f32.mrb[0].mxu0
        %v3460 = vpop.f32.mrb[0].mxu0
        %v3461 = vadd.f32 0.0, %v3460
        %v3462 = vpop.f32.mrb[0].mxu0
        %3463 = vmatprep.mubr.bf16.mxu0 0
        %3464 = vmatmul.mubr.bf16.gmra.mrb[0].mxu0 %v3368
        %v3465 = vpop.f32.mrb[0].mxu0
        %v3466 = vadd.f32 0.0, %v3465
        %v3467 = vpop.f32.mrb[0].mxu0
        %v3468 = vpop.f32.mrb[0].mxu0
        %v3469 = vadd.f32 0.0, %v3468
        %v3470 = vpop.f32.mrb[0].mxu0
        %3471 = vmatprep.mubr.bf16.mxu0 0
        %3472 = vmatmul.mubr.bf16.gmra.mrb[0].mxu0 %v3369
        %v3473 = vpop.f32.mrb[0].mxu0
        %v3474 = vadd.f32 0.0, %v3473
        %v3475 = vpop.f32.mrb[0].mxu0
        %v3476 = vpop.f32.mrb[0].mxu0
        %v3477 = vadd.f32 0.0, %v3476
        %v3478 = vpop.f32.mrb[0].mxu0
        %3479 = vmatprep.mubr.bf16.mxu0 0
        %3480 = vmatmul.mubr.bf16.gmra.mrb[0].mxu0 %v3370
        %v3481 = vpop.f32.mrb[0].mxu0
        %v3482 = vadd.f32 0.0, %v3481
        %v3483 = vpop.f32.mrb[0].mxu0
        %v3484 = vpop.f32.mrb[0].mxu0
        %v3485 = vadd.f32 0.0, %v3484
        %v3486 = vpop.f32.mrb[0].mxu0
        %3487 = vdwg.mxu0
        %v3488 = vadd.f32 %v3259, %v3458
        %v3489 = vadd.f32 %v3260, %v3461
        %v3490 = vadd.f32 %v3261, %v3466
        %v3491 = vadd.f32 %v3262, %v3469
        %v3492 = vadd.f32 %v3263, %v3474
        %v3493 = vadd.f32 %v3264, %v3477
        %v3494 = vadd.f32 %v3265, %v3482
        %v3495 = vadd.f32 %v3266, %v3485
        %3496 = vst [vmem:[#allocation3] sm:$0xff] %v3488
        %3497 = vst [vmem:[#allocation3 + $0x8] sm:$0xff] %v3489
        %3498 = vst [vmem:[#allocation3 + $0x10] sm:$0xff] %v3490
        %3499 = vst [vmem:[#allocation3 + $0x18] sm:$0xff] %v3491
        %3500 = vst [vmem:[#allocation3 + $0x20] sm:$0xff] %v3492
        %3501 = vst [vmem:[#allocation3 + $0x28] sm:$0xff] %v3493
        %3502 = vst [vmem:[#allocation3 + $0x30] sm:$0xff] %v3494
        %3503 = vst [vmem:[#allocation3 + $0x38] sm:$0xff] %v3495
        %v3504 = vld [vmem:[%s2532] sm:$0xf]
        %v3505 = vld [vmem:[%s2532 + $0x8] sm:$0xf]
        %v3506 = vld [vmem:[%s2532 + $0x10] sm:$0xf]
        %v3507 = vld [vmem:[%s2532 + $0x18] sm:$0xf]
        %v3508 = vld [vmem:[%s2532 + $0x20] sm:$0xf]
        %v3509 = vld [vmem:[%s2532 + $0x28] sm:$0xf]
        %v3510 = vld [vmem:[%s2532 + $0x30] sm:$0xf]
        %v3511 = vld [vmem:[%s2532 + $0x38] sm:$0xf]
        %v3512 = vld [vmem:[#allocation3] sm:$0xff]
        %v3513 = vld [vmem:[#allocation3 + $0x8] sm:$0xff]
        %v3514 = vld [vmem:[#allocation3 + $0x10] sm:$0xff]
        %v3515 = vld [vmem:[#allocation3 + $0x18] sm:$0xff]
        %v3516 = vld [vmem:[#allocation3 + $0x20] sm:$0xff]
        %v3517 = vld [vmem:[#allocation3 + $0x28] sm:$0xff]
        %v3518 = vld [vmem:[#allocation3 + $0x30] sm:$0xff]
        %v3519 = vld [vmem:[#allocation3 + $0x38] sm:$0xff]
        %s3520 = scalar_lea.vmem [#allocation9], 192
        %v3521 = vld [vmem:[%s3520] sm:$0xf]
        %v3522 = vld [vmem:[%s3520 + $0x4] sm:$0xf]
        %v3523 = vld [vmem:[%s3520 + $0x8] sm:$0xf]
        %v3524 = vld [vmem:[%s3520 + $0xc] sm:$0xf]
        %v3525 = vld [vmem:[%s3520 + $0x10] sm:$0xf]
        %v3526 = vld [vmem:[%s3520 + $0x14] sm:$0xf]
        %v3527 = vld [vmem:[%s3520 + $0x18] sm:$0xf]
        %v3528 = vld [vmem:[%s3520 + $0x1c] sm:$0xf]
        %v3529 = vld [vmem:[%s3520 + $0x20] sm:$0xf]
        %v3530 = vld [vmem:[%s3520 + $0x24] sm:$0xf]
        %v3531 = vld [vmem:[%s3520 + $0x28] sm:$0xf]
        %v3532 = vld [vmem:[%s3520 + $0x2c] sm:$0xf]
        %v3533 = vld [vmem:[%s3520 + $0x30] sm:$0xf]
        %v3534 = vld [vmem:[%s3520 + $0x34] sm:$0xf]
        %v3535 = vld [vmem:[%s3520 + $0x38] sm:$0xf]
        %v3536 = vld [vmem:[%s3520 + $0x3c] sm:$0xf]
        %v3545 = vunpack.c.l.b16 %v3504
        %v3546 = vunpack.c.l.b16 %v3505
        %v3547 = vunpack.c.l.b16 %v3506
        %v3548 = vunpack.c.l.b16 %v3507
        %v3549 = vunpack.c.l.b16 %v3508
        %v3550 = vunpack.c.l.b16 %v3509
        %v3551 = vunpack.c.l.b16 %v3510
        %v3552 = vunpack.c.l.b16 %v3511
        %v3553 = vpack.c.b16 %v3546, %v3545
        %v3554 = vpack.c.b16 %v3548, %v3547
        %v3555 = vpack.c.b16 %v3550, %v3549
        %v3556 = vpack.c.b16 %v3552, %v3551
        %v3577 = vunpack.c.l.b16 %v3521
        %v3578 = vunpack.c.l.b16 %v3522
        %v3579 = vunpack.c.l.b16 %v3523
        %v3580 = vunpack.c.l.b16 %v3524
        %v3581 = vunpack.c.l.b16 %v3525
        %v3582 = vunpack.c.l.b16 %v3526
        %v3583 = vunpack.c.l.b16 %v3527
        %v3584 = vunpack.c.l.b16 %v3528
        %v3585 = vunpack.c.l.b16 %v3529
        %v3586 = vunpack.c.l.b16 %v3530
        %v3587 = vunpack.c.l.b16 %v3531
        %v3588 = vunpack.c.l.b16 %v3532
        %v3589 = vunpack.c.l.b16 %v3533
        %v3590 = vunpack.c.l.b16 %v3534
        %v3591 = vunpack.c.l.b16 %v3535
        %v3592 = vunpack.c.l.b16 %v3536
        %v3593 = vpack.c.b16 %v3578, %v3577
        %v3594 = vpack.c.b16 %v3580, %v3579
        %v3595 = vpack.c.b16 %v3582, %v3581
        %v3596 = vpack.c.b16 %v3584, %v3583
        %v3597 = vpack.c.b16 %v3586, %v3585
        %v3598 = vpack.c.b16 %v3588, %v3587
        %v3599 = vpack.c.b16 %v3590, %v3589
        %v3600 = vpack.c.b16 %v3592, %v3591
        %3609 = vmatprep.subr.bf16.mxu0 0
        %3610 = vmatpush1.bf16.msra.mxu0 %v3593
        %3611 = vmatprep.subr.bf16.mxu0 0
        %3612 = vmatpush1.bf16.msra.mxu0 %v3594
        %3613 = vmatprep.subr.bf16.mxu0 0
        %3614 = vmatpush1.bf16.msra.mxu0 %v3595
        %3615 = vmatprep.subr.bf16.mxu0 0
        %3616 = vmatpush1.bf16.msra.mxu0 %v3596
        %3617 = vmatprep.subr.bf16.mxu0 0
        %3618 = vmatpush1.bf16.msra.mxu0 %v3597
        %3619 = vmatprep.subr.bf16.mxu0 0
        %3620 = vmatpush1.bf16.msra.mxu0 %v3598
        %3621 = vmatprep.subr.bf16.mxu0 0
        %3622 = vmatpush1.bf16.msra.mxu0 %v3599
        %3623 = vmatprep.subr.bf16.mxu0 0
        %3624 = vmatpush1.bf16.msra.mxu0 %v3600
        %3625 = vmatprep.subr.bf16.mxu0 0
        %3626 = vmatpush1.bf16.msra.mxu0 0
        %3627 = vmatprep.subr.bf16.mxu0 0
        %3628 = vmatpush1.bf16.msra.mxu0 0
        %3629 = vmatprep.subr.bf16.mxu0 0
        %3630 = vmatpush1.bf16.msra.mxu0 0
        %3631 = vmatprep.subr.bf16.mxu0 0
        %3632 = vmatpush1.bf16.msra.mxu0 0
        %3633 = vmatprep.subr.bf16.mxu0 0
        %3634 = vmatpush1.bf16.msra.mxu0 0
        %3635 = vmatprep.subr.bf16.mxu0 0
        %3636 = vmatpush1.bf16.msra.mxu0 0
        %3637 = vmatprep.subr.bf16.mxu0 0
        %3638 = vmatpush1.bf16.msra.mxu0 0
        %3639 = vmatprep.subr.bf16.mxu0 0
        %3640 = vmatpush1.bf16.msra.mxu0 0
        %3641 = vmatprep.mubr.bf16.mxu0 0
        %3642 = vmatmul.mubr.bf16.gmra.mrb[0].mxu0 %v3553
        %v3643 = vpop.f32.mrb[0].mxu0
        %v3644 = vadd.f32 0.0, %v3643
        %v3645 = vpop.f32.mrb[0].mxu0
        %v3646 = vpop.f32.mrb[0].mxu0
        %v3647 = vadd.f32 0.0, %v3646
        %v3648 = vpop.f32.mrb[0].mxu0
        %3649 = vmatprep.mubr.bf16.mxu0 0
        %3650 = vmatmul.mubr.bf16.gmra.mrb[0].mxu0 %v3554
        %v3651 = vpop.f32.mrb[0].mxu0
        %v3652 = vadd.f32 0.0, %v3651
        %v3653 = vpop.f32.mrb[0].mxu0
        %v3654 = vpop.f32.mrb[0].mxu0
        %v3655 = vadd.f32 0.0, %v3654
        %v3656 = vpop.f32.mrb[0].mxu0
        %3657 = vmatprep.mubr.bf16.mxu0 0
        %3658 = vmatmul.mubr.bf16.gmra.mrb[0].mxu0 %v3555
        %v3659 = vpop.f32.mrb[0].mxu0
        %v3660 = vadd.f32 0.0, %v3659
        %v3661 = vpop.f32.mrb[0].mxu0
        %v3662 = vpop.f32.mrb[0].mxu0
        %v3663 = vadd.f32 0.0, %v3662
        %v3664 = vpop.f32.mrb[0].mxu0
        %3665 = vmatprep.mubr.bf16.mxu0 0
        %3666 = vmatmul.mubr.bf16.gmra.mrb[0].mxu0 %v3556
        %v3667 = vpop.f32.mrb[0].mxu0
        %v3668 = vadd.f32 0.0, %v3667
        %v3669 = vpop.f32.mrb[0].mxu0
        %v3670 = vpop.f32.mrb[0].mxu0
        %v3671 = vadd.f32 0.0, %v3670
        %v3672 = vpop.f32.mrb[0].mxu0
        %3673 = vdwg.mxu0
        %v3674 = vadd.f32 %v3512, %v3644
        %v3675 = vadd.f32 %v3513, %v3647
        %v3676 = vadd.f32 %v3514, %v3652
        %v3677 = vadd.f32 %v3515, %v3655
        %v3678 = vadd.f32 %v3516, %v3660
        %v3679 = vadd.f32 %v3517, %v3663
        %v3680 = vadd.f32 %v3518, %v3668
        %v3681 = vadd.f32 %v3519, %v3671
        %3682 = vst [vmem:[#allocation3] sm:$0xff] %v3674
        %3683 = vst [vmem:[#allocation3 + $0x8] sm:$0xff] %v3675
        %3684 = vst [vmem:[#allocation3 + $0x10] sm:$0xff] %v3676
        %3685 = vst [vmem:[#allocation3 + $0x18] sm:$0xff] %v3677
        %3686 = vst [vmem:[#allocation3 + $0x20] sm:$0xff] %v3678
        %3687 = vst [vmem:[#allocation3 + $0x28] sm:$0xff] %v3679
        %3688 = vst [vmem:[#allocation3 + $0x30] sm:$0xff] %v3680
        %3689 = vst [vmem:[#allocation3 + $0x38] sm:$0xff] %v3681
        %v3690 = vld [vmem:[%s2532] sm:$0x1f]
        %v3691 = vld [vmem:[%s2532 + $0x8] sm:$0x1f]
        %v3692 = vld [vmem:[%s2532 + $0x10] sm:$0x1f]
        %v3693 = vld [vmem:[%s2532 + $0x18] sm:$0x1f]
        %v3694 = vld [vmem:[%s2532 + $0x20] sm:$0x1f]
        %v3695 = vld [vmem:[%s2532 + $0x28] sm:$0x1f]
        %v3696 = vld [vmem:[%s2532 + $0x30] sm:$0x1f]
        %v3697 = vld [vmem:[%s2532 + $0x38] sm:$0x1f]
        %v3698 = vld [vmem:[#allocation3] sm:$0xff]
        %v3699 = vld [vmem:[#allocation3 + $0x8] sm:$0xff]
        %v3700 = vld [vmem:[#allocation3 + $0x10] sm:$0xff]
        %v3701 = vld [vmem:[#allocation3 + $0x18] sm:$0xff]
        %v3702 = vld [vmem:[#allocation3 + $0x20] sm:$0xff]
        %v3703 = vld [vmem:[#allocation3 + $0x28] sm:$0xff]
        %v3704 = vld [vmem:[#allocation3 + $0x30] sm:$0xff]
        %v3705 = vld [vmem:[#allocation3 + $0x38] sm:$0xff]
        %v3714 = vunpack.c.l.b16 %v3690
        %v3715 = vunpack.c.h.b16 %v3690
        %v3716 = vunpack.c.l.b16 %v3691
        %v3717 = vunpack.c.h.b16 %v3691
        %v3718 = vunpack.c.l.b16 %v3692
        %v3719 = vunpack.c.h.b16 %v3692
        %v3720 = vunpack.c.l.b16 %v3693
        %v3721 = vunpack.c.h.b16 %v3693
        %v3722 = vunpack.c.l.b16 %v3694
        %v3723 = vunpack.c.h.b16 %v3694
        %v3724 = vunpack.c.l.b16 %v3695
        %v3725 = vunpack.c.h.b16 %v3695
        %v3726 = vunpack.c.l.b16 %v3696
        %v3727 = vunpack.c.h.b16 %v3696
        %v3728 = vunpack.c.l.b16 %v3697
        %v3729 = vunpack.c.h.b16 %v3697
        %v3730 = vpack.c.b16 %v3714, %v3714
        %v3731 = vpack.c.b16 %v3715, %v3715
        %v3732 = vpack.c.b16 %v3716, %v3716
        %v3733 = vpack.c.b16 %v3717, %v3717
        %v3734 = vpack.c.b16 %v3718, %v3718
        %v3735 = vpack.c.b16 %v3719, %v3719
        %v3736 = vpack.c.b16 %v3720, %v3720
        %v3737 = vpack.c.b16 %v3721, %v3721
        %v3738 = vpack.c.b16 %v3722, %v3722
        %v3739 = vpack.c.b16 %v3723, %v3723
        %v3740 = vpack.c.b16 %v3724, %v3724
        %v3741 = vpack.c.b16 %v3725, %v3725
        %v3742 = vpack.c.b16 %v3726, %v3726
        %v3743 = vpack.c.b16 %v3727, %v3727
        %v3744 = vpack.c.b16 %v3728, %v3728
        %v3745 = vpack.c.b16 %v3729, %v3729
        %v3747 = vshrl.u32 %v3730, 16
        %v3749 = vrot.slane %v3747, 4
        %v3750 = vshll.u32 %v3730, 16
        %v3752 = vrot.slane %v3750, 5
        %v3753 = vor.u32 %v3749, %v3752
        %v3754 = vrot.slane %v3753, 4
        %v3756 = vshll.u32 %v3731, 16
        %v3758 = vrot.slane %v3756, 5
        %v3759 = vsel %vm717, %v3754, %v3758
        %v3761 = vshrl.u32 %v3732, 16
        %v3763 = vrot.slane %v3761, 4
        %v3764 = vshll.u32 %v3732, 16
        %v3766 = vrot.slane %v3764, 5
        %v3767 = vor.u32 %v3763, %v3766
        %v3768 = vrot.slane %v3767, 4
        %v3770 = vshll.u32 %v3733, 16
        %v3772 = vrot.slane %v3770, 5
        %v3773 = vsel %vm717, %v3768, %v3772
        %v3775 = vshrl.u32 %v3734, 16
        %v3777 = vrot.slane %v3775, 4
        %v3778 = vshll.u32 %v3734, 16
        %v3780 = vrot.slane %v3778, 5
        %v3781 = vor.u32 %v3777, %v3780
        %v3782 = vrot.slane %v3781, 4
        %v3784 = vshll.u32 %v3735, 16
        %v3786 = vrot.slane %v3784, 5
        %v3787 = vsel %vm717, %v3782, %v3786
        %v3789 = vshrl.u32 %v3736, 16
        %v3791 = vrot.slane %v3789, 4
        %v3792 = vshll.u32 %v3736, 16
        %v3794 = vrot.slane %v3792, 5
        %v3795 = vor.u32 %v3791, %v3794
        %v3796 = vrot.slane %v3795, 4
        %v3798 = vshll.u32 %v3737, 16
        %v3800 = vrot.slane %v3798, 5
        %v3801 = vsel %vm717, %v3796, %v3800
        %v3803 = vshrl.u32 %v3738, 16
        %v3805 = vrot.slane %v3803, 4
        %v3806 = vshll.u32 %v3738, 16
        %v3808 = vrot.slane %v3806, 5
        %v3809 = vor.u32 %v3805, %v3808
        %v3810 = vrot.slane %v3809, 4
        %v3812 = vshll.u32 %v3739, 16
        %v3814 = vrot.slane %v3812, 5
        %v3815 = vsel %vm717, %v3810, %v3814
        %v3817 = vshrl.u32 %v3740, 16
        %v3819 = vrot.slane %v3817, 4
        %v3820 = vshll.u32 %v3740, 16
        %v3822 = vrot.slane %v3820, 5
        %v3823 = vor.u32 %v3819, %v3822
        %v3824 = vrot.slane %v3823, 4
        %v3826 = vshll.u32 %v3741, 16
        %v3828 = vrot.slane %v3826, 5
        %v3829 = vsel %vm717, %v3824, %v3828
        %v3831 = vshrl.u32 %v3742, 16
        %v3833 = vrot.slane %v3831, 4
        %v3834 = vshll.u32 %v3742, 16
        %v3836 = vrot.slane %v3834, 5
        %v3837 = vor.u32 %v3833, %v3836
        %v3838 = vrot.slane %v3837, 4
        %v3840 = vshll.u32 %v3743, 16
        %v3842 = vrot.slane %v3840, 5
        %v3843 = vsel %vm717, %v3838, %v3842
        %v3845 = vshrl.u32 %v3744, 16
        %v3847 = vrot.slane %v3845, 4
        %v3848 = vshll.u32 %v3744, 16
        %v3850 = vrot.slane %v3848, 5
        %v3851 = vor.u32 %v3847, %v3850
        %v3852 = vrot.slane %v3851, 4
        %v3854 = vshll.u32 %v3745, 16
        %v3856 = vrot.slane %v3854, 5
        %v3857 = vsel %vm717, %v3852, %v3856
        %s3858 = scalar_lea.vmem [#allocation9], 256
        %v3859 = vld [vmem:[%s3858] sm:$0xf]
        %v3860 = vld [vmem:[%s3858 + $0x4] sm:$0xf]
        %v3861 = vld [vmem:[%s3858 + $0x8] sm:$0xf]
        %v3862 = vld [vmem:[%s3858 + $0xc] sm:$0xf]
        %v3863 = vld [vmem:[%s3858 + $0x10] sm:$0xf]
        %v3864 = vld [vmem:[%s3858 + $0x14] sm:$0xf]
        %v3865 = vld [vmem:[%s3858 + $0x18] sm:$0xf]
        %v3866 = vld [vmem:[%s3858 + $0x1c] sm:$0xf]
        %v3867 = vld [vmem:[%s3858 + $0x20] sm:$0xf]
        %v3868 = vld [vmem:[%s3858 + $0x24] sm:$0xf]
        %v3869 = vld [vmem:[%s3858 + $0x28] sm:$0xf]
        %v3870 = vld [vmem:[%s3858 + $0x2c] sm:$0xf]
        %v3871 = vld [vmem:[%s3858 + $0x30] sm:$0xf]
        %v3872 = vld [vmem:[%s3858 + $0x34] sm:$0xf]
        %v3873 = vld [vmem:[%s3858 + $0x38] sm:$0xf]
        %v3874 = vld [vmem:[%s3858 + $0x3c] sm:$0xf]
        %v3875 = vunpack.c.l.b16 %v3759
        %v3876 = vunpack.c.l.b16 %v3773
        %v3877 = vunpack.c.l.b16 %v3787
        %v3878 = vunpack.c.l.b16 %v3801
        %v3879 = vunpack.c.l.b16 %v3815
        %v3880 = vunpack.c.l.b16 %v3829
        %v3881 = vunpack.c.l.b16 %v3843
        %v3882 = vunpack.c.l.b16 %v3857
        %v3883 = vpack.c.b16 %v3876, %v3875
        %v3884 = vpack.c.b16 %v3878, %v3877
        %v3885 = vpack.c.b16 %v3880, %v3879
        %v3886 = vpack.c.b16 %v3882, %v3881
        %v3907 = vunpack.c.l.b16 %v3859
        %v3908 = vunpack.c.l.b16 %v3860
        %v3909 = vunpack.c.l.b16 %v3861
        %v3910 = vunpack.c.l.b16 %v3862
        %v3911 = vunpack.c.l.b16 %v3863
        %v3912 = vunpack.c.l.b16 %v3864
        %v3913 = vunpack.c.l.b16 %v3865
        %v3914 = vunpack.c.l.b16 %v3866
        %v3915 = vunpack.c.l.b16 %v3867
        %v3916 = vunpack.c.l.b16 %v3868
        %v3917 = vunpack.c.l.b16 %v3869
        %v3918 = vunpack.c.l.b16 %v3870
        %v3919 = vunpack.c.l.b16 %v3871
        %v3920 = vunpack.c.l.b16 %v3872
        %v3921 = vunpack.c.l.b16 %v3873
        %v3922 = vunpack.c.l.b16 %v3874
        %v3923 = vpack.c.b16 %v3908, %v3907
        %v3924 = vpack.c.b16 %v3910, %v3909
        %v3925 = vpack.c.b16 %v3912, %v3911
        %v3926 = vpack.c.b16 %v3914, %v3913
        %v3927 = vpack.c.b16 %v3916, %v3915
        %v3928 = vpack.c.b16 %v3918, %v3917
        %v3929 = vpack.c.b16 %v3920, %v3919
        %v3930 = vpack.c.b16 %v3922, %v3921
        %3939 = vmatprep.subr.bf16.mxu0 0
        %3940 = vmatpush1.bf16.msra.mxu0 %v3923
        %3941 = vmatprep.subr.bf16.mxu0 0
        %3942 = vmatpush1.bf16.msra.mxu0 %v3924
        %3943 = vmatprep.subr.bf16.mxu0 0
        %3944 = vmatpush1.bf16.msra.mxu0 %v3925
        %3945 = vmatprep.subr.bf16.mxu0 0
        %3946 = vmatpush1.bf16.msra.mxu0 %v3926
        %3947 = vmatprep.subr.bf16.mxu0 0
        %3948 = vmatpush1.bf16.msra.mxu0 %v3927
        %3949 = vmatprep.subr.bf16.mxu0 0
        %3950 = vmatpush1.bf16.msra.mxu0 %v3928
        %3951 = vmatprep.subr.bf16.mxu0 0
        %3952 = vmatpush1.bf16.msra.mxu0 %v3929
        %3953 = vmatprep.subr.bf16.mxu0 0
        %3954 = vmatpush1.bf16.msra.mxu0 %v3930
        %3955 = vmatprep.subr.bf16.mxu0 0
        %3956 = vmatpush1.bf16.msra.mxu0 0
        %3957 = vmatprep.subr.bf16.mxu0 0
        %3958 = vmatpush1.bf16.msra.mxu0 0
        %3959 = vmatprep.subr.bf16.mxu0 0
        %3960 = vmatpush1.bf16.msra.mxu0 0
        %3961 = vmatprep.subr.bf16.mxu0 0
        %3962 = vmatpush1.bf16.msra.mxu0 0
        %3963 = vmatprep.subr.bf16.mxu0 0
        %3964 = vmatpush1.bf16.msra.mxu0 0
        %3965 = vmatprep.subr.bf16.mxu0 0
        %3966 = vmatpush1.bf16.msra.mxu0 0
        %3967 = vmatprep.subr.bf16.mxu0 0
        %3968 = vmatpush1.bf16.msra.mxu0 0
        %3969 = vmatprep.subr.bf16.mxu0 0
        %3970 = vmatpush1.bf16.msra.mxu0 0
        %3971 = vmatprep.mubr.bf16.mxu0 0
        %3972 = vmatmul.mubr.bf16.gmra.mrb[0].mxu0 %v3883
        %v3973 = vpop.f32.mrb[0].mxu0
        %v3974 = vadd.f32 0.0, %v3973
        %v3975 = vpop.f32.mrb[0].mxu0
        %v3976 = vpop.f32.mrb[0].mxu0
        %v3977 = vadd.f32 0.0, %v3976
        %v3978 = vpop.f32.mrb[0].mxu0
        %3979 = vmatprep.mubr.bf16.mxu0 0
        %3980 = vmatmul.mubr.bf16.gmra.mrb[0].mxu0 %v3884
        %v3981 = vpop.f32.mrb[0].mxu0
        %v3982 = vadd.f32 0.0, %v3981
        %v3983 = vpop.f32.mrb[0].mxu0
        %v3984 = vpop.f32.mrb[0].mxu0
        %v3985 = vadd.f32 0.0, %v3984
        %v3986 = vpop.f32.mrb[0].mxu0
        %3987 = vmatprep.mubr.bf16.mxu0 0
        %3988 = vmatmul.mubr.bf16.gmra.mrb[0].mxu0 %v3885
        %v3989 = vpop.f32.mrb[0].mxu0
        %v3990 = vadd.f32 0.0, %v3989
        %v3991 = vpop.f32.mrb[0].mxu0
        %v3992 = vpop.f32.mrb[0].mxu0
        %v3993 = vadd.f32 0.0, %v3992
        %v3994 = vpop.f32.mrb[0].mxu0
        %3995 = vmatprep.mubr.bf16.mxu0 0
        %3996 = vmatmul.mubr.bf16.gmra.mrb[0].mxu0 %v3886
        %v3997 = vpop.f32.mrb[0].mxu0
        %v3998 = vadd.f32 0.0, %v3997
        %v3999 = vpop.f32.mrb[0].mxu0
        %v4000 = vpop.f32.mrb[0].mxu0
        %v4001 = vadd.f32 0.0, %v4000
        %v4002 = vpop.f32.mrb[0].mxu0
        %4003 = vdwg.mxu0
        %v4004 = vadd.f32 %v3698, %v3974
        %v4005 = vadd.f32 %v3699, %v3977
        %v4006 = vadd.f32 %v3700, %v3982
        %v4007 = vadd.f32 %v3701, %v3985
        %v4008 = vadd.f32 %v3702, %v3990
        %v4009 = vadd.f32 %v3703, %v3993
        %v4010 = vadd.f32 %v3704, %v3998
        %v4011 = vadd.f32 %v3705, %v4001
        %4012 = vst [vmem:[#allocation3] sm:$0xff] %v4004
        %4013 = vst [vmem:[#allocation3 + $0x8] sm:$0xff] %v4005
        %4014 = vst [vmem:[#allocation3 + $0x10] sm:$0xff] %v4006
        %4015 = vst [vmem:[#allocation3 + $0x18] sm:$0xff] %v4007
        %4016 = vst [vmem:[#allocation3 + $0x20] sm:$0xff] %v4008
        %4017 = vst [vmem:[#allocation3 + $0x28] sm:$0xff] %v4009
        %4018 = vst [vmem:[#allocation3 + $0x30] sm:$0xff] %v4010
        %4019 = vst [vmem:[#allocation3 + $0x38] sm:$0xff] %v4011
        %v4020 = vld [vmem:[%s2532] sm:$0x1e]
        %v4021 = vld [vmem:[%s2532 + $0x8] sm:$0x1e]
        %v4022 = vld [vmem:[%s2532 + $0x10] sm:$0x1e]
        %v4023 = vld [vmem:[%s2532 + $0x18] sm:$0x1e]
        %v4024 = vld [vmem:[%s2532 + $0x20] sm:$0x1e]
        %v4025 = vld [vmem:[%s2532 + $0x28] sm:$0x1e]
        %v4026 = vld [vmem:[%s2532 + $0x30] sm:$0x1e]
        %v4027 = vld [vmem:[%s2532 + $0x38] sm:$0x1e]
        %v4028 = vld [vmem:[#allocation3] sm:$0xff]
        %v4029 = vld [vmem:[#allocation3 + $0x8] sm:$0xff]
        %v4030 = vld [vmem:[#allocation3 + $0x10] sm:$0xff]
        %v4031 = vld [vmem:[#allocation3 + $0x18] sm:$0xff]
        %v4032 = vld [vmem:[#allocation3 + $0x20] sm:$0xff]
        %v4033 = vld [vmem:[#allocation3 + $0x28] sm:$0xff]
        %v4034 = vld [vmem:[#allocation3 + $0x30] sm:$0xff]
        %v4035 = vld [vmem:[#allocation3 + $0x38] sm:$0xff]
        %v4044 = vunpack.c.l.b16 %v4020
        %v4045 = vunpack.c.h.b16 %v4020
        %v4046 = vunpack.c.l.b16 %v4021
        %v4047 = vunpack.c.h.b16 %v4021
        %v4048 = vunpack.c.l.b16 %v4022
        %v4049 = vunpack.c.h.b16 %v4022
        %v4050 = vunpack.c.l.b16 %v4023
        %v4051 = vunpack.c.h.b16 %v4023
        %v4052 = vunpack.c.l.b16 %v4024
        %v4053 = vunpack.c.h.b16 %v4024
        %v4054 = vunpack.c.l.b16 %v4025
        %v4055 = vunpack.c.h.b16 %v4025
        %v4056 = vunpack.c.l.b16 %v4026
        %v4057 = vunpack.c.h.b16 %v4026
        %v4058 = vunpack.c.l.b16 %v4027
        %v4059 = vunpack.c.h.b16 %v4027
        %v4060 = vpack.c.b16 %v4044, %v4044
        %v4061 = vpack.c.b16 %v4045, %v4045
        %v4062 = vpack.c.b16 %v4046, %v4046
        %v4063 = vpack.c.b16 %v4047, %v4047
        %v4064 = vpack.c.b16 %v4048, %v4048
        %v4065 = vpack.c.b16 %v4049, %v4049
        %v4066 = vpack.c.b16 %v4050, %v4050
        %v4067 = vpack.c.b16 %v4051, %v4051
        %v4068 = vpack.c.b16 %v4052, %v4052
        %v4069 = vpack.c.b16 %v4053, %v4053
        %v4070 = vpack.c.b16 %v4054, %v4054
        %v4071 = vpack.c.b16 %v4055, %v4055
        %v4072 = vpack.c.b16 %v4056, %v4056
        %v4073 = vpack.c.b16 %v4057, %v4057
        %v4074 = vpack.c.b16 %v4058, %v4058
        %v4075 = vpack.c.b16 %v4059, %v4059
        %v4076 = vrot.slane %v4060, 5
        %v4077 = vrot.slane %v4076, 4
        %v4078 = vrot.slane %v4061, 5
        %v4079 = vsel %vm3309, %v4077, %v4078
        %v4080 = vrot.slane %v4062, 5
        %v4081 = vrot.slane %v4080, 4
        %v4082 = vrot.slane %v4063, 5
        %v4083 = vsel %vm3309, %v4081, %v4082
        %v4084 = vrot.slane %v4064, 5
        %v4085 = vrot.slane %v4084, 4
        %v4086 = vrot.slane %v4065, 5
        %v4087 = vsel %vm3309, %v4085, %v4086
        %v4088 = vrot.slane %v4066, 5
        %v4089 = vrot.slane %v4088, 4
        %v4090 = vrot.slane %v4067, 5
        %v4091 = vsel %vm3309, %v4089, %v4090
        %v4092 = vrot.slane %v4068, 5
        %v4093 = vrot.slane %v4092, 4
        %v4094 = vrot.slane %v4069, 5
        %v4095 = vsel %vm3309, %v4093, %v4094
        %v4096 = vrot.slane %v4070, 5
        %v4097 = vrot.slane %v4096, 4
        %v4098 = vrot.slane %v4071, 5
        %v4099 = vsel %vm3309, %v4097, %v4098
        %v4100 = vrot.slane %v4072, 5
        %v4101 = vrot.slane %v4100, 4
        %v4102 = vrot.slane %v4073, 5
        %v4103 = vsel %vm3309, %v4101, %v4102
        %v4104 = vrot.slane %v4074, 5
        %v4105 = vrot.slane %v4104, 4
        %v4106 = vrot.slane %v4075, 5
        %v4107 = vsel %vm3309, %v4105, %v4106
        %s4108 = scalar_lea.vmem [#allocation9], 320
        %v4109 = vld [vmem:[%s4108] sm:$0xf]
        %v4110 = vld [vmem:[%s4108 + $0x4] sm:$0xf]
        %v4111 = vld [vmem:[%s4108 + $0x8] sm:$0xf]
        %v4112 = vld [vmem:[%s4108 + $0xc] sm:$0xf]
        %v4113 = vld [vmem:[%s4108 + $0x10] sm:$0xf]
        %v4114 = vld [vmem:[%s4108 + $0x14] sm:$0xf]
        %v4115 = vld [vmem:[%s4108 + $0x18] sm:$0xf]
        %v4116 = vld [vmem:[%s4108 + $0x1c] sm:$0xf]
        %v4117 = vld [vmem:[%s4108 + $0x20] sm:$0xf]
        %v4118 = vld [vmem:[%s4108 + $0x24] sm:$0xf]
        %v4119 = vld [vmem:[%s4108 + $0x28] sm:$0xf]
        %v4120 = vld [vmem:[%s4108 + $0x2c] sm:$0xf]
        %v4121 = vld [vmem:[%s4108 + $0x30] sm:$0xf]
        %v4122 = vld [vmem:[%s4108 + $0x34] sm:$0xf]
        %v4123 = vld [vmem:[%s4108 + $0x38] sm:$0xf]
        %v4124 = vld [vmem:[%s4108 + $0x3c] sm:$0xf]
        %v4125 = vunpack.c.l.b16 %v4079
        %v4126 = vunpack.c.l.b16 %v4083
        %v4127 = vunpack.c.l.b16 %v4087
        %v4128 = vunpack.c.l.b16 %v4091
        %v4129 = vunpack.c.l.b16 %v4095
        %v4130 = vunpack.c.l.b16 %v4099
        %v4131 = vunpack.c.l.b16 %v4103
        %v4132 = vunpack.c.l.b16 %v4107
        %v4133 = vpack.c.b16 %v4126, %v4125
        %v4134 = vpack.c.b16 %v4128, %v4127
        %v4135 = vpack.c.b16 %v4130, %v4129
        %v4136 = vpack.c.b16 %v4132, %v4131
        %v4157 = vunpack.c.l.b16 %v4109
        %v4158 = vunpack.c.l.b16 %v4110
        %v4159 = vunpack.c.l.b16 %v4111
        %v4160 = vunpack.c.l.b16 %v4112
        %v4161 = vunpack.c.l.b16 %v4113
        %v4162 = vunpack.c.l.b16 %v4114
        %v4163 = vunpack.c.l.b16 %v4115
        %v4164 = vunpack.c.l.b16 %v4116
        %v4165 = vunpack.c.l.b16 %v4117
        %v4166 = vunpack.c.l.b16 %v4118
        %v4167 = vunpack.c.l.b16 %v4119
        %v4168 = vunpack.c.l.b16 %v4120
        %v4169 = vunpack.c.l.b16 %v4121
        %v4170 = vunpack.c.l.b16 %v4122
        %v4171 = vunpack.c.l.b16 %v4123
        %v4172 = vunpack.c.l.b16 %v4124
        %v4173 = vpack.c.b16 %v4158, %v4157
        %v4174 = vpack.c.b16 %v4160, %v4159
        %v4175 = vpack.c.b16 %v4162, %v4161
        %v4176 = vpack.c.b16 %v4164, %v4163
        %v4177 = vpack.c.b16 %v4166, %v4165
        %v4178 = vpack.c.b16 %v4168, %v4167
        %v4179 = vpack.c.b16 %v4170, %v4169
        %v4180 = vpack.c.b16 %v4172, %v4171
        %4189 = vmatprep.subr.bf16.mxu0 0
        %4190 = vmatpush1.bf16.msra.mxu0 %v4173
        %4191 = vmatprep.subr.bf16.mxu0 0
        %4192 = vmatpush1.bf16.msra.mxu0 %v4174
        %4193 = vmatprep.subr.bf16.mxu0 0
        %4194 = vmatpush1.bf16.msra.mxu0 %v4175
        %4195 = vmatprep.subr.bf16.mxu0 0
        %4196 = vmatpush1.bf16.msra.mxu0 %v4176
        %4197 = vmatprep.subr.bf16.mxu0 0
        %4198 = vmatpush1.bf16.msra.mxu0 %v4177
        %4199 = vmatprep.subr.bf16.mxu0 0
        %4200 = vmatpush1.bf16.msra.mxu0 %v4178
        %4201 = vmatprep.subr.bf16.mxu0 0
        %4202 = vmatpush1.bf16.msra.mxu0 %v4179
        %4203 = vmatprep.subr.bf16.mxu0 0
        %4204 = vmatpush1.bf16.msra.mxu0 %v4180
        %4205 = vmatprep.subr.bf16.mxu0 0
        %4206 = vmatpush1.bf16.msra.mxu0 0
        %4207 = vmatprep.subr.bf16.mxu0 0
        %4208 = vmatpush1.bf16.msra.mxu0 0
        %4209 = vmatprep.subr.bf16.mxu0 0
        %4210 = vmatpush1.bf16.msra.mxu0 0
        %4211 = vmatprep.subr.bf16.mxu0 0
        %4212 = vmatpush1.bf16.msra.mxu0 0
        %4213 = vmatprep.subr.bf16.mxu0 0
        %4214 = vmatpush1.bf16.msra.mxu0 0
        %4215 = vmatprep.subr.bf16.mxu0 0
        %4216 = vmatpush1.bf16.msra.mxu0 0
        %4217 = vmatprep.subr.bf16.mxu0 0
        %4218 = vmatpush1.bf16.msra.mxu0 0
        %4219 = vmatprep.subr.bf16.mxu0 0
        %4220 = vmatpush1.bf16.msra.mxu0 0
        %4221 = vmatprep.mubr.bf16.mxu0 0
        %4222 = vmatmul.mubr.bf16.gmra.mrb[0].mxu0 %v4133
        %v4223 = vpop.f32.mrb[0].mxu0
        %v4224 = vadd.f32 0.0, %v4223
        %v4225 = vpop.f32.mrb[0].mxu0
        %v4226 = vpop.f32.mrb[0].mxu0
        %v4227 = vadd.f32 0.0, %v4226
        %v4228 = vpop.f32.mrb[0].mxu0
        %4229 = vmatprep.mubr.bf16.mxu0 0
        %4230 = vmatmul.mubr.bf16.gmra.mrb[0].mxu0 %v4134
        %v4231 = vpop.f32.mrb[0].mxu0
        %v4232 = vadd.f32 0.0, %v4231
        %v4233 = vpop.f32.mrb[0].mxu0
        %v4234 = vpop.f32.mrb[0].mxu0
        %v4235 = vadd.f32 0.0, %v4234
        %v4236 = vpop.f32.mrb[0].mxu0
        %4237 = vmatprep.mubr.bf16.mxu0 0
        %4238 = vmatmul.mubr.bf16.gmra.mrb[0].mxu0 %v4135
        %v4239 = vpop.f32.mrb[0].mxu0
        %v4240 = vadd.f32 0.0, %v4239
        %v4241 = vpop.f32.mrb[0].mxu0
        %v4242 = vpop.f32.mrb[0].mxu0
        %v4243 = vadd.f32 0.0, %v4242
        %v4244 = vpop.f32.mrb[0].mxu0
        %4245 = vmatprep.mubr.bf16.mxu0 0
        %4246 = vmatmul.mubr.bf16.gmra.mrb[0].mxu0 %v4136
        %v4247 = vpop.f32.mrb[0].mxu0
        %v4248 = vadd.f32 0.0, %v4247
        %v4249 = vpop.f32.mrb[0].mxu0
        %v4250 = vpop.f32.mrb[0].mxu0
        %v4251 = vadd.f32 0.0, %v4250
        %v4252 = vpop.f32.mrb[0].mxu0
        %4253 = vdwg.mxu0
        %v4254 = vadd.f32 %v4028, %v4224
        %v4255 = vadd.f32 %v4029, %v4227
        %v4256 = vadd.f32 %v4030, %v4232
        %v4257 = vadd.f32 %v4031, %v4235
        %v4258 = vadd.f32 %v4032, %v4240
        %v4259 = vadd.f32 %v4033, %v4243
        %v4260 = vadd.f32 %v4034, %v4248
        %v4261 = vadd.f32 %v4035, %v4251
        %4262 = vst [vmem:[#allocation3] sm:$0xff] %v4254
        %4263 = vst [vmem:[#allocation3 + $0x8] sm:$0xff] %v4255
        %4264 = vst [vmem:[#allocation3 + $0x10] sm:$0xff] %v4256
        %4265 = vst [vmem:[#allocation3 + $0x18] sm:$0xff] %v4257
        %4266 = vst [vmem:[#allocation3 + $0x20] sm:$0xff] %v4258
        %4267 = vst [vmem:[#allocation3 + $0x28] sm:$0xff] %v4259
        %4268 = vst [vmem:[#allocation3 + $0x30] sm:$0xff] %v4260
        %4269 = vst [vmem:[#allocation3 + $0x38] sm:$0xff] %v4261
        %s4270 = scalar_lea.vmem [#allocation2], 16
        %v4271 = vld [vmem:[%s4270] sm:$0xf]
        %v4272 = vld [vmem:[%s4270 + $0x8] sm:$0xf]
        %v4273 = vld [vmem:[%s4270 + $0x10] sm:$0xf]
        %v4274 = vld [vmem:[%s4270 + $0x18] sm:$0xf]
        %v4275 = vld [vmem:[%s4270 + $0x20] sm:$0xf]
        %v4276 = vld [vmem:[%s4270 + $0x28] sm:$0xf]
        %v4277 = vld [vmem:[%s4270 + $0x30] sm:$0xf]
        %v4278 = vld [vmem:[%s4270 + $0x38] sm:$0xf]
        %v4279 = vld [vmem:[#allocation3] sm:$0xff]
        %v4280 = vld [vmem:[#allocation3 + $0x8] sm:$0xff]
        %v4281 = vld [vmem:[#allocation3 + $0x10] sm:$0xff]
        %v4282 = vld [vmem:[#allocation3 + $0x18] sm:$0xff]
        %v4283 = vld [vmem:[#allocation3 + $0x20] sm:$0xff]
        %v4284 = vld [vmem:[#allocation3 + $0x28] sm:$0xff]
        %v4285 = vld [vmem:[#allocation3 + $0x30] sm:$0xff]
        %v4286 = vld [vmem:[#allocation3 + $0x38] sm:$0xff]
        %s4287 = scalar_lea.vmem [#allocation9], 384
        %v4288 = vld [vmem:[%s4287] sm:$0xf]
        %v4289 = vld [vmem:[%s4287 + $0x4] sm:$0xf]
        %v4290 = vld [vmem:[%s4287 + $0x8] sm:$0xf]
        %v4291 = vld [vmem:[%s4287 + $0xc] sm:$0xf]
        %v4292 = vld [vmem:[%s4287 + $0x10] sm:$0xf]
        %v4293 = vld [vmem:[%s4287 + $0x14] sm:$0xf]
        %v4294 = vld [vmem:[%s4287 + $0x18] sm:$0xf]
        %v4295 = vld [vmem:[%s4287 + $0x1c] sm:$0xf]
        %v4296 = vld [vmem:[%s4287 + $0x20] sm:$0xf]
        %v4297 = vld [vmem:[%s4287 + $0x24] sm:$0xf]
        %v4298 = vld [vmem:[%s4287 + $0x28] sm:$0xf]
        %v4299 = vld [vmem:[%s4287 + $0x2c] sm:$0xf]
        %v4300 = vld [vmem:[%s4287 + $0x30] sm:$0xf]
        %v4301 = vld [vmem:[%s4287 + $0x34] sm:$0xf]
        %v4302 = vld [vmem:[%s4287 + $0x38] sm:$0xf]
        %v4303 = vld [vmem:[%s4287 + $0x3c] sm:$0xf]
        %v4312 = vunpack.c.l.b16 %v4271
        %v4313 = vunpack.c.l.b16 %v4272
        %v4314 = vunpack.c.l.b16 %v4273
        %v4315 = vunpack.c.l.b16 %v4274
        %v4316 = vunpack.c.l.b16 %v4275
        %v4317 = vunpack.c.l.b16 %v4276
        %v4318 = vunpack.c.l.b16 %v4277
        %v4319 = vunpack.c.l.b16 %v4278
        %v4320 = vpack.c.b16 %v4313, %v4312
        %v4321 = vpack.c.b16 %v4315, %v4314
        %v4322 = vpack.c.b16 %v4317, %v4316
        %v4323 = vpack.c.b16 %v4319, %v4318
        %v4344 = vunpack.c.l.b16 %v4288
        %v4345 = vunpack.c.l.b16 %v4289
        %v4346 = vunpack.c.l.b16 %v4290
        %v4347 = vunpack.c.l.b16 %v4291
        %v4348 = vunpack.c.l.b16 %v4292
        %v4349 = vunpack.c.l.b16 %v4293
        %v4350 = vunpack.c.l.b16 %v4294
        %v4351 = vunpack.c.l.b16 %v4295
        %v4352 = vunpack.c.l.b16 %v4296
        %v4353 = vunpack.c.l.b16 %v4297
        %v4354 = vunpack.c.l.b16 %v4298
        %v4355 = vunpack.c.l.b16 %v4299
        %v4356 = vunpack.c.l.b16 %v4300
        %v4357 = vunpack.c.l.b16 %v4301
        %v4358 = vunpack.c.l.b16 %v4302
        %v4359 = vunpack.c.l.b16 %v4303
        %v4360 = vpack.c.b16 %v4345, %v4344
        %v4361 = vpack.c.b16 %v4347, %v4346
        %v4362 = vpack.c.b16 %v4349, %v4348
        %v4363 = vpack.c.b16 %v4351, %v4350
        %v4364 = vpack.c.b16 %v4353, %v4352
        %v4365 = vpack.c.b16 %v4355, %v4354
        %v4366 = vpack.c.b16 %v4357, %v4356
        %v4367 = vpack.c.b16 %v4359, %v4358
        %4376 = vmatprep.subr.bf16.mxu0 0
        %4377 = vmatpush1.bf16.msra.mxu0 %v4360
        %4378 = vmatprep.subr.bf16.mxu0 0
        %4379 = vmatpush1.bf16.msra.mxu0 %v4361
        %4380 = vmatprep.subr.bf16.mxu0 0
        %4381 = vmatpush1.bf16.msra.mxu0 %v4362
        %4382 = vmatprep.subr.bf16.mxu0 0
        %4383 = vmatpush1.bf16.msra.mxu0 %v4363
        %4384 = vmatprep.subr.bf16.mxu0 0
        %4385 = vmatpush1.bf16.msra.mxu0 %v4364
        %4386 = vmatprep.subr.bf16.mxu0 0
        %4387 = vmatpush1.bf16.msra.mxu0 %v4365
        %4388 = vmatprep.subr.bf16.mxu0 0
        %4389 = vmatpush1.bf16.msra.mxu0 %v4366
        %4390 = vmatprep.subr.bf16.mxu0 0
        %4391 = vmatpush1.bf16.msra.mxu0 %v4367
        %4392 = vmatprep.subr.bf16.mxu0 0
        %4393 = vmatpush1.bf16.msra.mxu0 0
        %4394 = vmatprep.subr.bf16.mxu0 0
        %4395 = vmatpush1.bf16.msra.mxu0 0
        %4396 = vmatprep.subr.bf16.mxu0 0
        %4397 = vmatpush1.bf16.msra.mxu0 0
        %4398 = vmatprep.subr.bf16.mxu0 0
        %4399 = vmatpush1.bf16.msra.mxu0 0
        %4400 = vmatprep.subr.bf16.mxu0 0
        %4401 = vmatpush1.bf16.msra.mxu0 0
        %4402 = vmatprep.subr.bf16.mxu0 0
        %4403 = vmatpush1.bf16.msra.mxu0 0
        %4404 = vmatprep.subr.bf16.mxu0 0
        %4405 = vmatpush1.bf16.msra.mxu0 0
        %4406 = vmatprep.subr.bf16.mxu0 0
        %4407 = vmatpush1.bf16.msra.mxu0 0
        %4408 = vmatprep.mubr.bf16.mxu0 0
        %4409 = vmatmul.mubr.bf16.gmra.mrb[0].mxu0 %v4320
        %v4410 = vpop.f32.mrb[0].mxu0
        %v4411 = vadd.f32 0.0, %v4410
        %v4412 = vpop.f32.mrb[0].mxu0
        %v4413 = vpop.f32.mrb[0].mxu0
        %v4414 = vadd.f32 0.0, %v4413
        %v4415 = vpop.f32.mrb[0].mxu0
        %4416 = vmatprep.mubr.bf16.mxu0 0
        %4417 = vmatmul.mubr.bf16.gmra.mrb[0].mxu0 %v4321
        %v4418 = vpop.f32.mrb[0].mxu0
        %v4419 = vadd.f32 0.0, %v4418
        %v4420 = vpop.f32.mrb[0].mxu0
        %v4421 = vpop.f32.mrb[0].mxu0
        %v4422 = vadd.f32 0.0, %v4421
        %v4423 = vpop.f32.mrb[0].mxu0
        %4424 = vmatprep.mubr.bf16.mxu0 0
        %4425 = vmatmul.mubr.bf16.gmra.mrb[0].mxu0 %v4322
        %v4426 = vpop.f32.mrb[0].mxu0
        %v4427 = vadd.f32 0.0, %v4426
        %v4428 = vpop.f32.mrb[0].mxu0
        %v4429 = vpop.f32.mrb[0].mxu0
        %v4430 = vadd.f32 0.0, %v4429
        %v4431 = vpop.f32.mrb[0].mxu0
        %4432 = vmatprep.mubr.bf16.mxu0 0
        %4433 = vmatmul.mubr.bf16.gmra.mrb[0].mxu0 %v4323
        %v4434 = vpop.f32.mrb[0].mxu0
        %v4435 = vadd.f32 0.0, %v4434
        %v4436 = vpop.f32.mrb[0].mxu0
        %v4437 = vpop.f32.mrb[0].mxu0
        %v4438 = vadd.f32 0.0, %v4437
        %v4439 = vpop.f32.mrb[0].mxu0
        %4440 = vdwg.mxu0
        %v4441 = vadd.f32 %v4279, %v4411
        %v4442 = vadd.f32 %v4280, %v4414
        %v4443 = vadd.f32 %v4281, %v4419
        %v4444 = vadd.f32 %v4282, %v4422
        %v4445 = vadd.f32 %v4283, %v4427
        %v4446 = vadd.f32 %v4284, %v4430
        %v4447 = vadd.f32 %v4285, %v4435
        %v4448 = vadd.f32 %v4286, %v4438
        %4449 = vst [vmem:[#allocation3] sm:$0xff] %v4441
        %4450 = vst [vmem:[#allocation3 + $0x8] sm:$0xff] %v4442
        %4451 = vst [vmem:[#allocation3 + $0x10] sm:$0xff] %v4443
        %4452 = vst [vmem:[#allocation3 + $0x18] sm:$0xff] %v4444
        %4453 = vst [vmem:[#allocation3 + $0x20] sm:$0xff] %v4445
        %4454 = vst [vmem:[#allocation3 + $0x28] sm:$0xff] %v4446
        %4455 = vst [vmem:[#allocation3 + $0x30] sm:$0xff] %v4447
        %4456 = vst [vmem:[#allocation3 + $0x38] sm:$0xff] %v4448
        %v4457 = vld [vmem:[%s4270] sm:$0x1f]
        %v4458 = vld [vmem:[%s4270 + $0x8] sm:$0x1f]
        %v4459 = vld [vmem:[%s4270 + $0x10] sm:$0x1f]
        %v4460 = vld [vmem:[%s4270 + $0x18] sm:$0x1f]
        %v4461 = vld [vmem:[%s4270 + $0x20] sm:$0x1f]
        %v4462 = vld [vmem:[%s4270 + $0x28] sm:$0x1f]
        %v4463 = vld [vmem:[%s4270 + $0x30] sm:$0x1f]
        %v4464 = vld [vmem:[%s4270 + $0x38] sm:$0x1f]
        %v4465 = vld [vmem:[#allocation3] sm:$0xff]
        %v4466 = vld [vmem:[#allocation3 + $0x8] sm:$0xff]
        %v4467 = vld [vmem:[#allocation3 + $0x10] sm:$0xff]
        %v4468 = vld [vmem:[#allocation3 + $0x18] sm:$0xff]
        %v4469 = vld [vmem:[#allocation3 + $0x20] sm:$0xff]
        %v4470 = vld [vmem:[#allocation3 + $0x28] sm:$0xff]
        %v4471 = vld [vmem:[#allocation3 + $0x30] sm:$0xff]
        %v4472 = vld [vmem:[#allocation3 + $0x38] sm:$0xff]
        %v4481 = vunpack.c.l.b16 %v4457
        %v4482 = vunpack.c.h.b16 %v4457
        %v4483 = vunpack.c.l.b16 %v4458
        %v4484 = vunpack.c.h.b16 %v4458
        %v4485 = vunpack.c.l.b16 %v4459
        %v4486 = vunpack.c.h.b16 %v4459
        %v4487 = vunpack.c.l.b16 %v4460
        %v4488 = vunpack.c.h.b16 %v4460
        %v4489 = vunpack.c.l.b16 %v4461
        %v4490 = vunpack.c.h.b16 %v4461
        %v4491 = vunpack.c.l.b16 %v4462
        %v4492 = vunpack.c.h.b16 %v4462
        %v4493 = vunpack.c.l.b16 %v4463
        %v4494 = vunpack.c.h.b16 %v4463
        %v4495 = vunpack.c.l.b16 %v4464
        %v4496 = vunpack.c.h.b16 %v4464
        %v4497 = vpack.c.b16 %v4481, %v4481
        %v4498 = vpack.c.b16 %v4482, %v4482
        %v4499 = vpack.c.b16 %v4483, %v4483
        %v4500 = vpack.c.b16 %v4484, %v4484
        %v4501 = vpack.c.b16 %v4485, %v4485
        %v4502 = vpack.c.b16 %v4486, %v4486
        %v4503 = vpack.c.b16 %v4487, %v4487
        %v4504 = vpack.c.b16 %v4488, %v4488
        %v4505 = vpack.c.b16 %v4489, %v4489
        %v4506 = vpack.c.b16 %v4490, %v4490
        %v4507 = vpack.c.b16 %v4491, %v4491
        %v4508 = vpack.c.b16 %v4492, %v4492
        %v4509 = vpack.c.b16 %v4493, %v4493
        %v4510 = vpack.c.b16 %v4494, %v4494
        %v4511 = vpack.c.b16 %v4495, %v4495
        %v4512 = vpack.c.b16 %v4496, %v4496
        %v4514 = vshrl.u32 %v4497, 16
        %v4516 = vrot.slane %v4514, 4
        %v4517 = vshll.u32 %v4497, 16
        %v4519 = vrot.slane %v4517, 5
        %v4520 = vor.u32 %v4516, %v4519
        %v4521 = vrot.slane %v4520, 4
        %v4523 = vshll.u32 %v4498, 16
        %v4525 = vrot.slane %v4523, 5
        %v4526 = vsel %vm717, %v4521, %v4525
        %v4528 = vshrl.u32 %v4499, 16
        %v4530 = vrot.slane %v4528, 4
        %v4531 = vshll.u32 %v4499, 16
        %v4533 = vrot.slane %v4531, 5
        %v4534 = vor.u32 %v4530, %v4533
        %v4535 = vrot.slane %v4534, 4
        %v4537 = vshll.u32 %v4500, 16
        %v4539 = vrot.slane %v4537, 5
        %v4540 = vsel %vm717, %v4535, %v4539
        %v4542 = vshrl.u32 %v4501, 16
        %v4544 = vrot.slane %v4542, 4
        %v4545 = vshll.u32 %v4501, 16
        %v4547 = vrot.slane %v4545, 5
        %v4548 = vor.u32 %v4544, %v4547
        %v4549 = vrot.slane %v4548, 4
        %v4551 = vshll.u32 %v4502, 16
        %v4553 = vrot.slane %v4551, 5
        %v4554 = vsel %vm717, %v4549, %v4553
        %v4556 = vshrl.u32 %v4503, 16
        %v4558 = vrot.slane %v4556, 4
        %v4559 = vshll.u32 %v4503, 16
        %v4561 = vrot.slane %v4559, 5
        %v4562 = vor.u32 %v4558, %v4561
        %v4563 = vrot.slane %v4562, 4
        %v4565 = vshll.u32 %v4504, 16
        %v4567 = vrot.slane %v4565, 5
        %v4568 = vsel %vm717, %v4563, %v4567
        %v4570 = vshrl.u32 %v4505, 16
        %v4572 = vrot.slane %v4570, 4
        %v4573 = vshll.u32 %v4505, 16
        %v4575 = vrot.slane %v4573, 5
        %v4576 = vor.u32 %v4572, %v4575
        %v4577 = vrot.slane %v4576, 4
        %v4579 = vshll.u32 %v4506, 16
        %v4581 = vrot.slane %v4579, 5
        %v4582 = vsel %vm717, %v4577, %v4581
        %v4584 = vshrl.u32 %v4507, 16
        %v4586 = vrot.slane %v4584, 4
        %v4587 = vshll.u32 %v4507, 16
        %v4589 = vrot.slane %v4587, 5
        %v4590 = vor.u32 %v4586, %v4589
        %v4591 = vrot.slane %v4590, 4
        %v4593 = vshll.u32 %v4508, 16
        %v4595 = vrot.slane %v4593, 5
        %v4596 = vsel %vm717, %v4591, %v4595
        %v4598 = vshrl.u32 %v4509, 16
        %v4600 = vrot.slane %v4598, 4
        %v4601 = vshll.u32 %v4509, 16
        %v4603 = vrot.slane %v4601, 5
        %v4604 = vor.u32 %v4600, %v4603
        %v4605 = vrot.slane %v4604, 4
        %v4607 = vshll.u32 %v4510, 16
        %v4609 = vrot.slane %v4607, 5
        %v4610 = vsel %vm717, %v4605, %v4609
        %v4612 = vshrl.u32 %v4511, 16
        %v4614 = vrot.slane %v4612, 4
        %v4615 = vshll.u32 %v4511, 16
        %v4617 = vrot.slane %v4615, 5
        %v4618 = vor.u32 %v4614, %v4617
        %v4619 = vrot.slane %v4618, 4
        %v4621 = vshll.u32 %v4512, 16
        %v4623 = vrot.slane %v4621, 5
        %v4624 = vsel %vm717, %v4619, %v4623
        %s4625 = scalar_lea.vmem [#allocation9], 448
        %v4626 = vld [vmem:[%s4625] sm:$0xf]
        %v4627 = vld [vmem:[%s4625 + $0x4] sm:$0xf]
        %v4628 = vld [vmem:[%s4625 + $0x8] sm:$0xf]
        %v4629 = vld [vmem:[%s4625 + $0xc] sm:$0xf]
        %v4630 = vld [vmem:[%s4625 + $0x10] sm:$0xf]
        %v4631 = vld [vmem:[%s4625 + $0x14] sm:$0xf]
        %v4632 = vld [vmem:[%s4625 + $0x18] sm:$0xf]
        %v4633 = vld [vmem:[%s4625 + $0x1c] sm:$0xf]
        %v4634 = vld [vmem:[%s4625 + $0x20] sm:$0xf]
        %v4635 = vld [vmem:[%s4625 + $0x24] sm:$0xf]
        %v4636 = vld [vmem:[%s4625 + $0x28] sm:$0xf]
        %v4637 = vld [vmem:[%s4625 + $0x2c] sm:$0xf]
        %v4638 = vld [vmem:[%s4625 + $0x30] sm:$0xf]
        %v4639 = vld [vmem:[%s4625 + $0x34] sm:$0xf]
        %v4640 = vld [vmem:[%s4625 + $0x38] sm:$0xf]
        %v4641 = vld [vmem:[%s4625 + $0x3c] sm:$0xf]
        %v4642 = vunpack.c.l.b16 %v4526
        %v4643 = vunpack.c.l.b16 %v4540
        %v4644 = vunpack.c.l.b16 %v4554
        %v4645 = vunpack.c.l.b16 %v4568
        %v4646 = vunpack.c.l.b16 %v4582
        %v4647 = vunpack.c.l.b16 %v4596
        %v4648 = vunpack.c.l.b16 %v4610
        %v4649 = vunpack.c.l.b16 %v4624
        %v4650 = vpack.c.b16 %v4643, %v4642
        %v4651 = vpack.c.b16 %v4645, %v4644
        %v4652 = vpack.c.b16 %v4647, %v4646
        %v4653 = vpack.c.b16 %v4649, %v4648
        %v4674 = vunpack.c.l.b16 %v4626
        %v4675 = vunpack.c.l.b16 %v4627
        %v4676 = vunpack.c.l.b16 %v4628
        %v4677 = vunpack.c.l.b16 %v4629
        %v4678 = vunpack.c.l.b16 %v4630
        %v4679 = vunpack.c.l.b16 %v4631
        %v4680 = vunpack.c.l.b16 %v4632
        %v4681 = vunpack.c.l.b16 %v4633
        %v4682 = vunpack.c.l.b16 %v4634
        %v4683 = vunpack.c.l.b16 %v4635
        %v4684 = vunpack.c.l.b16 %v4636
        %v4685 = vunpack.c.l.b16 %v4637
        %v4686 = vunpack.c.l.b16 %v4638
        %v4687 = vunpack.c.l.b16 %v4639
        %v4688 = vunpack.c.l.b16 %v4640
        %v4689 = vunpack.c.l.b16 %v4641
        %v4690 = vpack.c.b16 %v4675, %v4674
        %v4691 = vpack.c.b16 %v4677, %v4676
        %v4692 = vpack.c.b16 %v4679, %v4678
        %v4693 = vpack.c.b16 %v4681, %v4680
        %v4694 = vpack.c.b16 %v4683, %v4682
        %v4695 = vpack.c.b16 %v4685, %v4684
        %v4696 = vpack.c.b16 %v4687, %v4686
        %v4697 = vpack.c.b16 %v4689, %v4688
        %4706 = vmatprep.subr.bf16.mxu0 0
        %4707 = vmatpush1.bf16.msra.mxu0 %v4690
        %4708 = vmatprep.subr.bf16.mxu0 0
        %4709 = vmatpush1.bf16.msra.mxu0 %v4691
        %4710 = vmatprep.subr.bf16.mxu0 0
        %4711 = vmatpush1.bf16.msra.mxu0 %v4692
        %4712 = vmatprep.subr.bf16.mxu0 0
        %4713 = vmatpush1.bf16.msra.mxu0 %v4693
        %4714 = vmatprep.subr.bf16.mxu0 0
        %4715 = vmatpush1.bf16.msra.mxu0 %v4694
        %4716 = vmatprep.subr.bf16.mxu0 0
        %4717 = vmatpush1.bf16.msra.mxu0 %v4695
        %4718 = vmatprep.subr.bf16.mxu0 0
        %4719 = vmatpush1.bf16.msra.mxu0 %v4696
        %4720 = vmatprep.subr.bf16.mxu0 0
        %4721 = vmatpush1.bf16.msra.mxu0 %v4697
        %4722 = vmatprep.subr.bf16.mxu0 0
        %4723 = vmatpush1.bf16.msra.mxu0 0
        %4724 = vmatprep.subr.bf16.mxu0 0
        %4725 = vmatpush1.bf16.msra.mxu0 0
        %4726 = vmatprep.subr.bf16.mxu0 0
        %4727 = vmatpush1.bf16.msra.mxu0 0
        %4728 = vmatprep.subr.bf16.mxu0 0
        %4729 = vmatpush1.bf16.msra.mxu0 0
        %4730 = vmatprep.subr.bf16.mxu0 0
        %4731 = vmatpush1.bf16.msra.mxu0 0
        %4732 = vmatprep.subr.bf16.mxu0 0
        %4733 = vmatpush1.bf16.msra.mxu0 0
        %4734 = vmatprep.subr.bf16.mxu0 0
        %4735 = vmatpush1.bf16.msra.mxu0 0
        %4736 = vmatprep.subr.bf16.mxu0 0
        %4737 = vmatpush1.bf16.msra.mxu0 0
        %4738 = vmatprep.mubr.bf16.mxu0 0
        %4739 = vmatmul.mubr.bf16.gmra.mrb[0].mxu0 %v4650
        %v4740 = vpop.f32.mrb[0].mxu0
        %v4741 = vadd.f32 0.0, %v4740
        %v4742 = vpop.f32.mrb[0].mxu0
        %v4743 = vpop.f32.mrb[0].mxu0
        %v4744 = vadd.f32 0.0, %v4743
        %v4745 = vpop.f32.mrb[0].mxu0
        %4746 = vmatprep.mubr.bf16.mxu0 0
        %4747 = vmatmul.mubr.bf16.gmra.mrb[0].mxu0 %v4651
        %v4748 = vpop.f32.mrb[0].mxu0
        %v4749 = vadd.f32 0.0, %v4748
        %v4750 = vpop.f32.mrb[0].mxu0
        %v4751 = vpop.f32.mrb[0].mxu0
        %v4752 = vadd.f32 0.0, %v4751
        %v4753 = vpop.f32.mrb[0].mxu0
        %4754 = vmatprep.mubr.bf16.mxu0 0
        %4755 = vmatmul.mubr.bf16.gmra.mrb[0].mxu0 %v4652
        %v4756 = vpop.f32.mrb[0].mxu0
        %v4757 = vadd.f32 0.0, %v4756
        %v4758 = vpop.f32.mrb[0].mxu0
        %v4759 = vpop.f32.mrb[0].mxu0
        %v4760 = vadd.f32 0.0, %v4759
        %v4761 = vpop.f32.mrb[0].mxu0
        %4762 = vmatprep.mubr.bf16.mxu0 0
        %4763 = vmatmul.mubr.bf16.gmra.mrb[0].mxu0 %v4653
        %v4764 = vpop.f32.mrb[0].mxu0
        %v4765 = vadd.f32 0.0, %v4764
        %v4766 = vpop.f32.mrb[0].mxu0
        %v4767 = vpop.f32.mrb[0].mxu0
        %v4768 = vadd.f32 0.0, %v4767
        %v4769 = vpop.f32.mrb[0].mxu0
        %4770 = vdwg.mxu0
        %v4771 = vadd.f32 %v4465, %v4741
        %v4772 = vadd.f32 %v4466, %v4744
        %v4773 = vadd.f32 %v4467, %v4749
        %v4774 = vadd.f32 %v4468, %v4752
        %v4775 = vadd.f32 %v4469, %v4757
        %v4776 = vadd.f32 %v4470, %v4760
        %v4777 = vadd.f32 %v4471, %v4765
        %v4778 = vadd.f32 %v4472, %v4768
        %4779 = vst [vmem:[#allocation3] sm:$0xff] %v4771
        %4780 = vst [vmem:[#allocation3 + $0x8] sm:$0xff] %v4772
        %4781 = vst [vmem:[#allocation3 + $0x10] sm:$0xff] %v4773
        %4782 = vst [vmem:[#allocation3 + $0x18] sm:$0xff] %v4774
        %4783 = vst [vmem:[#allocation3 + $0x20] sm:$0xff] %v4775
        %4784 = vst [vmem:[#allocation3 + $0x28] sm:$0xff] %v4776
        %4785 = vst [vmem:[#allocation3 + $0x30] sm:$0xff] %v4777
        %4786 = vst [vmem:[#allocation3 + $0x38] sm:$0xff] %v4778
        %v4787 = vld [vmem:[%s4270] sm:$0x1e]
        %v4788 = vld [vmem:[%s4270 + $0x8] sm:$0x1e]
        %v4789 = vld [vmem:[%s4270 + $0x10] sm:$0x1e]
        %v4790 = vld [vmem:[%s4270 + $0x18] sm:$0x1e]
        %v4791 = vld [vmem:[%s4270 + $0x20] sm:$0x1e]
        %v4792 = vld [vmem:[%s4270 + $0x28] sm:$0x1e]
        %v4793 = vld [vmem:[%s4270 + $0x30] sm:$0x1e]
        %v4794 = vld [vmem:[%s4270 + $0x38] sm:$0x1e]
        %v4795 = vld [vmem:[#allocation3] sm:$0xff]
        %v4796 = vld [vmem:[#allocation3 + $0x8] sm:$0xff]
        %v4797 = vld [vmem:[#allocation3 + $0x10] sm:$0xff]
        %v4798 = vld [vmem:[#allocation3 + $0x18] sm:$0xff]
        %v4799 = vld [vmem:[#allocation3 + $0x20] sm:$0xff]
        %v4800 = vld [vmem:[#allocation3 + $0x28] sm:$0xff]
        %v4801 = vld [vmem:[#allocation3 + $0x30] sm:$0xff]
        %v4802 = vld [vmem:[#allocation3 + $0x38] sm:$0xff]
        %v4811 = vunpack.c.l.b16 %v4787
        %v4812 = vunpack.c.h.b16 %v4787
        %v4813 = vunpack.c.l.b16 %v4788
        %v4814 = vunpack.c.h.b16 %v4788
        %v4815 = vunpack.c.l.b16 %v4789
        %v4816 = vunpack.c.h.b16 %v4789
        %v4817 = vunpack.c.l.b16 %v4790
        %v4818 = vunpack.c.h.b16 %v4790
        %v4819 = vunpack.c.l.b16 %v4791
        %v4820 = vunpack.c.h.b16 %v4791
        %v4821 = vunpack.c.l.b16 %v4792
        %v4822 = vunpack.c.h.b16 %v4792
        %v4823 = vunpack.c.l.b16 %v4793
        %v4824 = vunpack.c.h.b16 %v4793
        %v4825 = vunpack.c.l.b16 %v4794
        %v4826 = vunpack.c.h.b16 %v4794
        %v4827 = vpack.c.b16 %v4811, %v4811
        %v4828 = vpack.c.b16 %v4812, %v4812
        %v4829 = vpack.c.b16 %v4813, %v4813
        %v4830 = vpack.c.b16 %v4814, %v4814
        %v4831 = vpack.c.b16 %v4815, %v4815
        %v4832 = vpack.c.b16 %v4816, %v4816
        %v4833 = vpack.c.b16 %v4817, %v4817
        %v4834 = vpack.c.b16 %v4818, %v4818
        %v4835 = vpack.c.b16 %v4819, %v4819
        %v4836 = vpack.c.b16 %v4820, %v4820
        %v4837 = vpack.c.b16 %v4821, %v4821
        %v4838 = vpack.c.b16 %v4822, %v4822
        %v4839 = vpack.c.b16 %v4823, %v4823
        %v4840 = vpack.c.b16 %v4824, %v4824
        %v4841 = vpack.c.b16 %v4825, %v4825
        %v4842 = vpack.c.b16 %v4826, %v4826
        %v4843 = vrot.slane %v4827, 5
        %v4844 = vrot.slane %v4843, 4
        %v4845 = vrot.slane %v4828, 5
        %v4846 = vsel %vm3309, %v4844, %v4845
        %v4847 = vrot.slane %v4829, 5
        %v4848 = vrot.slane %v4847, 4
        %v4849 = vrot.slane %v4830, 5
        %v4850 = vsel %vm3309, %v4848, %v4849
        %v4851 = vrot.slane %v4831, 5
        %v4852 = vrot.slane %v4851, 4
        %v4853 = vrot.slane %v4832, 5
        %v4854 = vsel %vm3309, %v4852, %v4853
        %v4855 = vrot.slane %v4833, 5
        %v4856 = vrot.slane %v4855, 4
        %v4857 = vrot.slane %v4834, 5
        %v4858 = vsel %vm3309, %v4856, %v4857
        %v4859 = vrot.slane %v4835, 5
        %v4860 = vrot.slane %v4859, 4
        %v4861 = vrot.slane %v4836, 5
        %v4862 = vsel %vm3309, %v4860, %v4861
        %v4863 = vrot.slane %v4837, 5
        %v4864 = vrot.slane %v4863, 4
        %v4865 = vrot.slane %v4838, 5
        %v4866 = vsel %vm3309, %v4864, %v4865
        %v4867 = vrot.slane %v4839, 5
        %v4868 = vrot.slane %v4867, 4
        %v4869 = vrot.slane %v4840, 5
        %v4870 = vsel %vm3309, %v4868, %v4869
        %v4871 = vrot.slane %v4841, 5
        %v4872 = vrot.slane %v4871, 4
        %v4873 = vrot.slane %v4842, 5
        %v4874 = vsel %vm3309, %v4872, %v4873
        %s4875 = scalar_lea.vmem [#allocation9], 512
        %v4876 = vld [vmem:[%s4875] sm:$0xf]
        %v4877 = vld [vmem:[%s4875 + $0x4] sm:$0xf]
        %v4878 = vld [vmem:[%s4875 + $0x8] sm:$0xf]
        %v4879 = vld [vmem:[%s4875 + $0xc] sm:$0xf]
        %v4880 = vld [vmem:[%s4875 + $0x10] sm:$0xf]
        %v4881 = vld [vmem:[%s4875 + $0x14] sm:$0xf]
        %v4882 = vld [vmem:[%s4875 + $0x18] sm:$0xf]
        %v4883 = vld [vmem:[%s4875 + $0x1c] sm:$0xf]
        %v4884 = vld [vmem:[%s4875 + $0x20] sm:$0xf]
        %v4885 = vld [vmem:[%s4875 + $0x24] sm:$0xf]
        %v4886 = vld [vmem:[%s4875 + $0x28] sm:$0xf]
        %v4887 = vld [vmem:[%s4875 + $0x2c] sm:$0xf]
        %v4888 = vld [vmem:[%s4875 + $0x30] sm:$0xf]
        %v4889 = vld [vmem:[%s4875 + $0x34] sm:$0xf]
        %v4890 = vld [vmem:[%s4875 + $0x38] sm:$0xf]
        %v4891 = vld [vmem:[%s4875 + $0x3c] sm:$0xf]
        %v4892 = vunpack.c.l.b16 %v4846
        %v4893 = vunpack.c.l.b16 %v4850
        %v4894 = vunpack.c.l.b16 %v4854
        %v4895 = vunpack.c.l.b16 %v4858
        %v4896 = vunpack.c.l.b16 %v4862
        %v4897 = vunpack.c.l.b16 %v4866
        %v4898 = vunpack.c.l.b16 %v4870
        %v4899 = vunpack.c.l.b16 %v4874
        %v4900 = vpack.c.b16 %v4893, %v4892
        %v4901 = vpack.c.b16 %v4895, %v4894
        %v4902 = vpack.c.b16 %v4897, %v4896
        %v4903 = vpack.c.b16 %v4899, %v4898
        %v4924 = vunpack.c.l.b16 %v4876
        %v4925 = vunpack.c.l.b16 %v4877
        %v4926 = vunpack.c.l.b16 %v4878
        %v4927 = vunpack.c.l.b16 %v4879
        %v4928 = vunpack.c.l.b16 %v4880
        %v4929 = vunpack.c.l.b16 %v4881
        %v4930 = vunpack.c.l.b16 %v4882
        %v4931 = vunpack.c.l.b16 %v4883
        %v4932 = vunpack.c.l.b16 %v4884
        %v4933 = vunpack.c.l.b16 %v4885
        %v4934 = vunpack.c.l.b16 %v4886
        %v4935 = vunpack.c.l.b16 %v4887
        %v4936 = vunpack.c.l.b16 %v4888
        %v4937 = vunpack.c.l.b16 %v4889
        %v4938 = vunpack.c.l.b16 %v4890
        %v4939 = vunpack.c.l.b16 %v4891
        %v4940 = vpack.c.b16 %v4925, %v4924
        %v4941 = vpack.c.b16 %v4927, %v4926
        %v4942 = vpack.c.b16 %v4929, %v4928
        %v4943 = vpack.c.b16 %v4931, %v4930
        %v4944 = vpack.c.b16 %v4933, %v4932
        %v4945 = vpack.c.b16 %v4935, %v4934
        %v4946 = vpack.c.b16 %v4937, %v4936
        %v4947 = vpack.c.b16 %v4939, %v4938
        %4956 = vmatprep.subr.bf16.mxu0 0
        %4957 = vmatpush1.bf16.msra.mxu0 %v4940
        %4958 = vmatprep.subr.bf16.mxu0 0
        %4959 = vmatpush1.bf16.msra.mxu0 %v4941
        %4960 = vmatprep.subr.bf16.mxu0 0
        %4961 = vmatpush1.bf16.msra.mxu0 %v4942
        %4962 = vmatprep.subr.bf16.mxu0 0
        %4963 = vmatpush1.bf16.msra.mxu0 %v4943
        %4964 = vmatprep.subr.bf16.mxu0 0
        %4965 = vmatpush1.bf16.msra.mxu0 %v4944
        %4966 = vmatprep.subr.bf16.mxu0 0
        %4967 = vmatpush1.bf16.msra.mxu0 %v4945
        %4968 = vmatprep.subr.bf16.mxu0 0
        %4969 = vmatpush1.bf16.msra.mxu0 %v4946
        %4970 = vmatprep.subr.bf16.mxu0 0
        %4971 = vmatpush1.bf16.msra.mxu0 %v4947
        %4972 = vmatprep.subr.bf16.mxu0 0
        %4973 = vmatpush1.bf16.msra.mxu0 0
        %4974 = vmatprep.subr.bf16.mxu0 0
        %4975 = vmatpush1.bf16.msra.mxu0 0
        %4976 = vmatprep.subr.bf16.mxu0 0
        %4977 = vmatpush1.bf16.msra.mxu0 0
        %4978 = vmatprep.subr.bf16.mxu0 0
        %4979 = vmatpush1.bf16.msra.mxu0 0
        %4980 = vmatprep.subr.bf16.mxu0 0
        %4981 = vmatpush1.bf16.msra.mxu0 0
        %4982 = vmatprep.subr.bf16.mxu0 0
        %4983 = vmatpush1.bf16.msra.mxu0 0
        %4984 = vmatprep.subr.bf16.mxu0 0
        %4985 = vmatpush1.bf16.msra.mxu0 0
        %4986 = vmatprep.subr.bf16.mxu0 0
        %4987 = vmatpush1.bf16.msra.mxu0 0
        %4988 = vmatprep.mubr.bf16.mxu0 0
        %4989 = vmatmul.mubr.bf16.gmra.mrb[0].mxu0 %v4900
        %v4990 = vpop.f32.mrb[0].mxu0
        %v4991 = vadd.f32 0.0, %v4990
        %v4992 = vpop.f32.mrb[0].mxu0
        %v4993 = vpop.f32.mrb[0].mxu0
        %v4994 = vadd.f32 0.0, %v4993
        %v4995 = vpop.f32.mrb[0].mxu0
        %4996 = vmatprep.mubr.bf16.mxu0 0
        %4997 = vmatmul.mubr.bf16.gmra.mrb[0].mxu0 %v4901
        %v4998 = vpop.f32.mrb[0].mxu0
        %v4999 = vadd.f32 0.0, %v4998
        %v5000 = vpop.f32.mrb[0].mxu0
        %v5001 = vpop.f32.mrb[0].mxu0
        %v5002 = vadd.f32 0.0, %v5001
        %v5003 = vpop.f32.mrb[0].mxu0
        %5004 = vmatprep.mubr.bf16.mxu0 0
        %5005 = vmatmul.mubr.bf16.gmra.mrb[0].mxu0 %v4902
        %v5006 = vpop.f32.mrb[0].mxu0
        %v5007 = vadd.f32 0.0, %v5006
        %v5008 = vpop.f32.mrb[0].mxu0
        %v5009 = vpop.f32.mrb[0].mxu0
        %v5010 = vadd.f32 0.0, %v5009
        %v5011 = vpop.f32.mrb[0].mxu0
        %5012 = vmatprep.mubr.bf16.mxu0 0
        %5013 = vmatmul.mubr.bf16.gmra.mrb[0].mxu0 %v4903
        %v5014 = vpop.f32.mrb[0].mxu0
        %v5015 = vadd.f32 0.0, %v5014
        %v5016 = vpop.f32.mrb[0].mxu0
        %v5017 = vpop.f32.mrb[0].mxu0
        %v5018 = vadd.f32 0.0, %v5017
        %v5019 = vpop.f32.mrb[0].mxu0
        %5020 = vdwg.mxu0
        %v5021 = vadd.f32 %v4795, %v4991
        %v5022 = vadd.f32 %v4796, %v4994
        %v5023 = vadd.f32 %v4797, %v4999
        %v5024 = vadd.f32 %v4798, %v5002
        %v5025 = vadd.f32 %v4799, %v5007
        %v5026 = vadd.f32 %v4800, %v5010
        %v5027 = vadd.f32 %v4801, %v5015
        %v5028 = vadd.f32 %v4802, %v5018
        %5029 = vst [vmem:[#allocation3] sm:$0xff] %v5021
        %5030 = vst [vmem:[#allocation3 + $0x8] sm:$0xff] %v5022
        %5031 = vst [vmem:[#allocation3 + $0x10] sm:$0xff] %v5023
        %5032 = vst [vmem:[#allocation3 + $0x18] sm:$0xff] %v5024
        %5033 = vst [vmem:[#allocation3 + $0x20] sm:$0xff] %v5025
        %5034 = vst [vmem:[#allocation3 + $0x28] sm:$0xff] %v5026
        %5035 = vst [vmem:[#allocation3 + $0x30] sm:$0xff] %v5027
        %5036 = vst [vmem:[#allocation3 + $0x38] sm:$0xff] %v5028
        %v5037 = vld [vmem:[#allocation3] sm:$0xff]
        %v5038 = vld [vmem:[#allocation3 + $0x8] sm:$0xff]
        %v5039 = vld [vmem:[#allocation3 + $0x10] sm:$0xff]
        %v5040 = vld [vmem:[#allocation3 + $0x18] sm:$0xff]
        %v5041 = vld [vmem:[#allocation3 + $0x20] sm:$0xff]
        %v5042 = vld [vmem:[#allocation3 + $0x28] sm:$0xff]
        %v5043 = vld [vmem:[#allocation3 + $0x30] sm:$0xff]
        %v5044 = vld [vmem:[#allocation3 + $0x38] sm:$0xff]
        %v5045 = vld [vmem:[%s4] sm:$0x1]
        %v5047 = vlaneseq
        %v5048 = vshrl.u32 %v5047, 7
        %v5049 = vsub.s32 0, %v5048
        %v5050 = vrot.slane %v5045, %v5049
        %v5052 = vadd.f32 %v5037, %v5050
        %v5053 = vadd.f32 %v5038, %v5050
        %v5054 = vadd.f32 %v5039, %v5050
        %v5055 = vadd.f32 %v5040, %v5050
        %v5056 = vadd.f32 %v5041, %v5050
        %v5057 = vadd.f32 %v5042, %v5050
        %v5058 = vadd.f32 %v5043, %v5050
        %v5059 = vadd.f32 %v5044, %v5050
        %v5060 = vmax.f32 %v5052, 0.0
        %v5061 = vmax.f32 %v5053, 0.0
        %v5062 = vmax.f32 %v5054, 0.0
        %v5063 = vmax.f32 %v5055, 0.0
        %v5064 = vmax.f32 %v5056, 0.0
        %v5065 = vmax.f32 %v5057, 0.0
        %v5066 = vmax.f32 %v5058, 0.0
        %v5067 = vmax.f32 %v5059, 0.0
        %v5068 = vpack.c.bf16 %v5061, %v5060
        %v5069 = vpack.c.bf16 %v5063, %v5062
        %v5070 = vpack.c.bf16 %v5065, %v5064
        %v5071 = vpack.c.bf16 %v5067, %v5066
        %v5076 = vunpack.c.l.b16 %v5068
        %v5077 = vunpack.c.h.b16 %v5068
        %v5078 = vunpack.c.l.b16 %v5069
        %v5079 = vunpack.c.h.b16 %v5069
        %v5080 = vunpack.c.l.b16 %v5070
        %v5081 = vunpack.c.h.b16 %v5070
        %v5082 = vunpack.c.l.b16 %v5071
        %v5083 = vunpack.c.h.b16 %v5071
        %v5084 = vpack.c.b16 %v5076, %v5076
        %v5085 = vpack.c.b16 %v5077, %v5077
        %v5086 = vpack.c.b16 %v5078, %v5078
        %v5087 = vpack.c.b16 %v5079, %v5079
        %v5088 = vpack.c.b16 %v5080, %v5080
        %v5089 = vpack.c.b16 %v5081, %v5081
        %v5090 = vpack.c.b16 %v5082, %v5082
        %v5091 = vpack.c.b16 %v5083, %v5083
        %5100 = vst [vmem:[%s340] sm:$0xf] %v5084
        %5101 = vst [vmem:[%s340 + $0x4] sm:$0xf] %v5085
        %5102 = vst [vmem:[%s340 + $0x8] sm:$0xf] %v5086
        %5103 = vst [vmem:[%s340 + $0xc] sm:$0xf] %v5087
        %5104 = vst [vmem:[%s340 + $0x10] sm:$0xf] %v5088
        %5105 = vst [vmem:[%s340 + $0x14] sm:$0xf] %v5089
        %5106 = vst [vmem:[%s340 + $0x18] sm:$0xf] %v5090
        %5107 = vst [vmem:[%s340 + $0x1c] sm:$0xf] %v5091
        %s5108 = sand.u32 %s186, 1
        %s5109 = scalar_lea.sflag [#allocation6], %s5108
        %s5110 = sand.u32 %s186, 1
        %s5111 = smul.addr %s5110, 32
        %s5112 = scalar_lea.vmem [#allocation12], %s5111
        // Predicated region
        $region65: #{tpu_custom_call.1} parent=47 // pred_check
          %p5113 = pneg %p196
        $region66: #{tpu_custom_call.1} parent=47 // pred_check_branch
          %5115 = sbr.rel (%p5113) target = $region68
        $region67: #{tpu_custom_call.1} parent=47 // pred_region
          %s5116 = smul.u32 8, %s26
          %s5118 = ssub.s32 512, 512
          %5119 = vsyncadd %s5109, %s5118
          %s5120 = smul.addr %s5116, 64
          %s5121 = scalar_lea.hbm %s7, %s5120
          %s5122 = sshll.u32 %s5112, 4
          %s5123 = int_to_ptr.vmem [resolvable:$true] %s5122
          %5128 = dma.vmem_to_hbm [thread:$0]  %s5123, 512, %s5121, %s5109, 64, 64, 4
        $region68: #{tpu_custom_call.1} parent=47 // pred_fallthru
          _
      $region48: #{tpu_custom_call.1} parent=5 // pred_fallthru
        _
      %p5129 = scmp.le.s32.totalorder 2, %s21
      // Predicated region
      $region69: #{tpu_custom_call.1} parent=5 // pred_check
        %p5130 = pneg %p5129
      $region70: #{tpu_custom_call.1} parent=5 // pred_check_branch
        %5132 = sbr.rel (%p5130) target = $region72
      $region71: #{tpu_custom_call.1} parent=5 // pred_region
        %s5133 = ssub.s32 %s21, 2
        // Predicated region
        $region73: #{tpu_custom_call.1} parent=71 // pred_check
          %p5134 = pneg %p202
        $region74: #{tpu_custom_call.1} parent=71 // pred_check_branch
          %5136 = sbr.rel (%p5134) target = $region76
        $region75: #{tpu_custom_call.1} parent=71 // pred_region
          %s5137 = sand.u32 %s187, 1
          %s5138 = scalar_lea.sflag [#allocation6], %s5137
          %s5139 = sand.u32 %s187, 1
          %s5140 = smul.addr %s5139, 32
          %s5141 = scalar_lea.vmem [#allocation12], %s5140
          %5142 = dma.done %s5138, 512
        $region76: #{tpu_custom_call.1} parent=71 // pred_fallthru
          _
      $region72: #{tpu_custom_call.1} parent=5 // pred_fallthru
        _
    $region6: #{tpu_custom_call.1} parent=1 // loop_footer
      %s25 = sadd.s32 1, %s21
    $region7: #{tpu_custom_call.1} parent=1 // loop_footer_branch
      %20 = sbr.rel target = $region3
    $region8: #{tpu_custom_call.1} parent=1 // loop_exit
      _
    %5143 = vsyncpa [#allocation5], 1
    %s5144 = scalar_lea.sflag [#allocation5], 1
    %5145 = vsyncpa %s5144, 1
    %5146 = vsyncpa [#allocation8], 1
    %5147 = vsyncpa [#allocation11], 1
    %5148 = vsyncpa [#allocation6], 1
    %s5149 = scalar_lea.sflag [#allocation6], 1
    %5150 = vsyncpa %s5149, 1

</llo_original>
